<compile_context>
chip_gen: v7x
topology: tpu7x:2x2x1
jax: 0.10.0
libtpu: 0.0.40
codegen_flags: <defaults>
</compile_context>

<pallas_src>
import functools

import jax
import jax.numpy as jnp
from jax.experimental import pallas as pl
from jax.experimental.pallas import tpu as pltpu

K = 4            # conv kernel size fixed by the module (kernel_size=4, stride=2, pad=1)
LANE = 128       # TPU lane width

# Polyphase tap tables for ConvTranspose2d(k=4, s=2, p=1):
# output parity r pulls kernel taps _KY[r] from the 1-padded input at row
# offsets _DH[r] (identical tables apply along the width axis).
_KY = ((3, 1), (2, 0))
_DH = ((0, 1), (1, 2))


# ------------------------------ Pallas kernels ------------------------------ #

def _down_up_kernel(x00_ref, x01_ref, x10_ref, x11_ref, wd_ref, wu_ref,
                    up00_ref, up01_ref, up10_ref, up11_ref, stats_ref,
                    yp_ref, *, oh, ow, cin, inner, outer_pad, mxu_dtype):
    """Per-image fused: LeakyReLU -> Conv(4,2,1) -> ReLU -> ConvT(4,2,1)
    (polyphase) + per-image BatchNorm partial sums.  Intermediate stays in VMEM."""
    m = oh * ow

    # ---------------- down path: LeakyReLU(0.2) -> Conv2d -> ReLU ------------
    x_ph = ((x00_ref, x01_ref), (x10_ref, x11_ref))
    acc = jnp.zeros((m, inner), jnp.float32)
    for rh in range(2):
        for rw in range(2):
            xv = x_ph[rh][rw][...]                     # (oh+1, ow+1, cin) f32
            xv = jnp.where(xv >= 0, xv, 0.2 * xv)      # LeakyReLU once per element
            for a in range(2):
                for b in range(2):
                    lhs = xv[a:a + oh, b:b + ow, :].reshape(m, cin)
                    w = wd_ref[(2 * a + rh) * K + (2 * b + rw)]   # (cin, inner)
                    acc += jnp.dot(lhs.astype(mxu_dtype), w,
                                   preferred_element_type=jnp.float32)
    y = jnp.maximum(acc, 0.0)                          # uprelu (ReLU)

    # Stage y with a 1-pixel zero border in VMEM (never written to HBM).
    yp_ref[...] = jnp.zeros_like(yp_ref)
    yp_ref[1:1 + oh, 1:1 + ow, :] = y.reshape(oh, ow, inner)

    # ------- up path: ConvTranspose2d as 4 polyphase 2x2 convs + BN stats ----
    up_refs = ((up00_ref, up01_ref), (up10_ref, up11_ref))
    s = jnp.zeros((1, outer_pad), jnp.float32)
    ss = jnp.zeros((1, outer_pad), jnp.float32)
    for rh in range(2):
        for rw in range(2):
            acc_u = jnp.zeros((m, outer_pad), jnp.float32)
            for a in range(2):
                for b in range(2):
                    dh, dw = _DH[rh][a], _DH[rw][b]
                    lhs = yp_ref[dh:dh + oh, dw:dw + ow, :].reshape(m, inner)
                    w = wu_ref[((rh * 2 + rw) * 2 + a) * 2 + b]   # (inner, outer_pad)
                    acc_u += jnp.dot(lhs.astype(mxu_dtype), w,
                                     preferred_element_type=jnp.float32)
            up_refs[rh][rw][...] = acc_u               # lane-dense (128-wide) store
            s = s + jnp.sum(acc_u, axis=0, keepdims=True)
            ss = ss + jnp.sum(acc_u * acc_u, axis=0, keepdims=True)

    stats_ref[...] = jnp.zeros_like(stats_ref)
    stats_ref[0:1, :] = s                              # per-image sum
    stats_ref[1:2, :] = ss                             # per-image sum of squares


def _bn_concat_kernel(x_ref, y_ref, scale_ref, shift_ref, o_ref, *, cin, outer):
    """Apply the finalized BatchNorm affine and fuse the skip concat:
       out[..., :cin] = x ;  out[..., cin:] = y*scale + shift   (NHWC)."""
    o_ref[:, :, 0:cin] = x_ref[...]
    o_ref[:, :, cin:cin + outer] = y_ref[...] * scale_ref[...] + shift_ref[...]


# -------------------------------- wrapper ----------------------------------- #

def _round_up(v, m):
    return (v + m - 1) // m * m


def unet_block_forward(x_nchw, w_down, w_up, gamma, beta,
                       mxu_dtype=jnp.bfloat16):
    """Innermost UnetSkipConnectionBlock forward (NCHW in / NCHW out)."""
    n, cin, h, w = x_nchw.shape
    assert h % 2 == 0 and w % 2 == 0
    inner = w_down.shape[0]
    outer = w_up.shape[1]
    oh, ow = h // 2, w // 2
    hh, wh = oh + 1, ow + 1
    outer_pad = _round_up(outer, LANE)
    m = oh * ow

    x_nhwc = jnp.transpose(x_nchw, (0, 2, 3, 1)).astype(jnp.float32)

    # Stride-2 phase views of the 1-padded input (1x bytes, no im2col in HBM).
    xp = jnp.pad(x_nhwc, ((0, 0), (1, 1), (1, 1), (0, 0)))
    xr = xp.reshape(n, hh, 2, wh, 2, cin)
    x_ph = [xr[:, :, rh, :, rw, :] for rh in range(2) for rw in range(2)]

    # Conv2d weight (Cout,Cin,kh,kw) -> per-tap (kh*4+kw, Cin, Cout), bf16.
    # Per-tap contraction is Cin (128-aligned at realistic bottleneck widths).
    wd = jnp.transpose(w_down, (2, 3, 1, 0)).reshape(K * K, cin, inner)
    wd = wd.astype(mxu_dtype)
    # ConvTranspose2d weight (Cin,Cout,kh,kw) -> polyphase taps
    # (rh,rw,a,b) -> W[:, :, KY[rh][a], KY[rw][b]]; Cout padded to 128 lanes.
    wu = jnp.stack([w_up[:, :, _KY[rh][a], _KY[rw][b]]
                    for rh in range(2) for rw in range(2)
                    for a in range(2) for b in range(2)], axis=0)
    wu = jnp.pad(wu, ((0, 0), (0, 0), (0, outer_pad - outer))).astype(mxu_dtype)

    cparams = pltpu.CompilerParams(
        dimension_semantics=("parallel",),        # batch axis shards across TCs (v7x)
        vmem_limit_bytes=32 * 1024 * 1024)        # explicit, safe on v5e/v6e/v7x

    kern_a = pl.pallas_call(
        functools.partial(_down_up_kernel, oh=oh, ow=ow, cin=cin, inner=inner,
                          outer_pad=outer_pad, mxu_dtype=mxu_dtype),
        grid=(n,),
        in_specs=(
            [pl.BlockSpec((None, hh, wh, cin), lambda i: (i, 0, 0, 0))] * 4 +
            [pl.BlockSpec((K * K, cin, inner), lambda i: (0, 0, 0)),
             pl.BlockSpec((K * K, inner, outer_pad), lambda i: (0, 0, 0))]),
        out_specs=(
            [pl.BlockSpec((None, m, outer_pad), lambda i: (i, 0, 0))] * 4 +
            [pl.BlockSpec((None, 8, outer_pad), lambda i: (i, 0, 0))]),
        out_shape=(
            [jax.ShapeDtypeStruct((n, m, outer_pad), jnp.float32)] * 4 +
            [jax.ShapeDtypeStruct((n, 8, outer_pad), jnp.float32)]),
        scratch_shapes=[pltpu.VMEM((oh + 2, ow + 2, inner), jnp.float32)],
        compiler_params=cparams,
    )
    up00, up01, up10, up11, stats = kern_a(*x_ph, wd, wu)

    # ------- BatchNorm finalize: batch statistics over (N, H, W), biased var --
    count = jnp.float32(n * h * w)
    ssum = jnp.sum(stats[:, 0, :outer], axis=0)
    ssq = jnp.sum(stats[:, 1, :outer], axis=0)
    mean = ssum / count
    var = jnp.maximum(ssq / count - mean * mean, 0.0)
    scale = gamma * jax.lax.rsqrt(var + 1e-5)
    shift = beta - mean * scale

    # ------- interleave the 4 transposed-conv output parities -> NHWC --------
    up = jnp.stack([up00, up01, up10, up11], axis=0)[..., :outer]
    up = up.reshape(2, 2, n, oh, ow, outer)
    up = jnp.transpose(up, (2, 3, 0, 4, 1, 5)).reshape(n, h, w, outer)

    # ------- kernel B: apply BN affine + fused skip concat (single pass) -----
    kern_b = pl.pallas_call(
        functools.partial(_bn_concat_kernel, cin=cin, outer=outer),
        grid=(n,),
        in_specs=[pl.BlockSpec((None, h, w, cin), lambda i: (i, 0, 0, 0)),
                  pl.BlockSpec((None, h, w, outer), lambda i: (i, 0, 0, 0)),
                  pl.BlockSpec((1, 1, outer), lambda i: (0, 0, 0)),
                  pl.BlockSpec((1, 1, outer), lambda i: (0, 0, 0))],
        out_specs=pl.BlockSpec((None, h, w, cin + outer), lambda i: (i, 0, 0, 0)),
        out_shape=jax.ShapeDtypeStruct((n, h, w, cin + outer), jnp.float32),
        compiler_params=cparams,
    )
    out_nhwc = kern_b(x_nhwc, up,
                      scale.reshape(1, 1, outer).astype(jnp.float32),
                      shift.reshape(1, 1, outer).astype(jnp.float32))

    # Module contract is NCHW: one boundary transpose (XLA).
    return jnp.transpose(out_nhwc, (0, 3, 1, 2))


# ---------------------------- pure-JAX reference ----------------------------- #

def _reference(x, w_down, w_up, gamma, beta, conv_dtype=jnp.float32):
    """Exact module math; conv_dtype mirrors the kernels' MXU operand dtype."""
    y = jnp.where(x >= 0, x, 0.2 * x)
    y = jax.lax.conv_general_dilated(
        y.astype(conv_dtype), w_down.astype(conv_dtype), (2, 2), [(1, 1), (1, 1)],
        dimension_numbers=("NCHW", "OIHW", "NCHW"),
        preferred_element_type=jnp.float32)
    y = jnp.maximum(y, 0.0)
    w_t = jnp.flip(w_up, (2, 3)).transpose(1, 0, 2, 3)   # (Cout, Cin, kh, kw)
    y = jax.lax.conv_general_dilated(
        y.astype(conv_dtype), w_t.astype(conv_dtype), (1, 1), [(2, 2), (2, 2)],
        lhs_dilation=(2, 2), dimension_numbers=("NCHW", "OIHW", "NCHW"),
        preferred_element_type=jnp.float32)
    mu = jnp.mean(y, axis=(0, 2, 3), keepdims=True)
    var = jnp.mean((y - mu) ** 2, axis=(0, 2, 3), keepdims=True)
    y = ((y - mu) * jax.lax.rsqrt(var + 1e-5) * gamma.reshape(1, -1, 1, 1)
         + beta.reshape(1, -1, 1, 1))
    return jnp.concatenate([x, y], axis=1)


# ----------------------------------- main ------------------------------------ #

if __name__ == "__main__":
    key = jax.random.PRNGKey(0)
    k1, k2, k3, k4, k5 = jax.random.split(key, 5)

    N, H, W = 2, 16, 16
    outer_nc, inner_nc = 4, 8
    input_nc = outer_nc                         # input_nc=None -> outer_nc

    x = jax.random.normal(k1, (N, input_nc, H, W), jnp.float32)
    # Conv2d(input_nc, inner_nc, 4, 2, 1, bias=False): (Cout, Cin, 4, 4)
    w_down = 0.1 * jax.random.normal(k2, (inner_nc, input_nc, K, K), jnp.float32)
    # ConvTranspose2d(inner_nc, outer_nc, 4, 2, 1, bias=False): (Cin, Cout, 4, 4)
    w_up = 0.1 * jax.random.normal(k3, (inner_nc, outer_nc, K, K), jnp.float32)
    # BatchNorm2d(outer_nc) affine params
    gamma = 1.0 + 0.1 * jax.random.normal(k4, (outer_nc,), jnp.float32)
    beta = 0.1 * jax.random.normal(k5, (outer_nc,), jnp.float32)

    fwd = jax.jit(unet_block_forward)
    out = jax.block_until_ready(fwd(x, w_down, w_up, gamma, beta))
    assert out.shape == (N, input_nc + outer_nc, H, W), out.shape

    # Reference with the same precision policy (bf16 MXU operands, f32 accum).
    ref = _reference(x, w_down, w_up, gamma, beta, conv_dtype=jnp.bfloat16)
    max_err = float(jnp.max(jnp.abs(out - ref)))
    assert jnp.allclose(out, ref, atol=3e-3, rtol=3e-3), max_err

    print("KERNEL_OK")
</pallas_src>

<mosaic_0001>
module attributes {stable_mosaic.version = 11 : i64} {
  func.func @_down_up_kernel(%arg0: i32, %arg1: memref<1x9x9x4xf32, #tpu.memory_space<vmem>>, %arg2: memref<1x9x9x4xf32, #tpu.memory_space<vmem>>, %arg3: memref<1x9x9x4xf32, #tpu.memory_space<vmem>>, %arg4: memref<1x9x9x4xf32, #tpu.memory_space<vmem>>, %arg5: memref<16x4x8xbf16, #tpu.memory_space<vmem>>, %arg6: memref<16x8x128xbf16, #tpu.memory_space<vmem>>, %arg7: memref<1x64x128xf32, #tpu.memory_space<vmem>>, %arg8: memref<1x64x128xf32, #tpu.memory_space<vmem>>, %arg9: memref<1x64x128xf32, #tpu.memory_space<vmem>>, %arg10: memref<1x64x128xf32, #tpu.memory_space<vmem>>, %arg11: memref<1x8x128xf32, #tpu.memory_space<vmem>>, %arg12: memref<10x10x8xf32, #tpu.memory_space<vmem>>) attributes {dimension_semantics = [#tpu.dimension_semantics<parallel>], iteration_bounds = array<i64: 2>, scalar_prefetch = 0 : i64, scratch_operands = 1 : i64, tpu.core_type = #tpu.core_type<tc>, window_params = [{transform_indices = @transform_0, window_bounds = array<i64: 1, 9, 9, 4>}, {transform_indices = @transform_1, window_bounds = array<i64: 1, 9, 9, 4>}, {transform_indices = @transform_2, window_bounds = array<i64: 1, 9, 9, 4>}, {transform_indices = @transform_3, window_bounds = array<i64: 1, 9, 9, 4>}, {pipeline_mode = #tpu.pipeline_mode<synchronous>, transform_indices = @transform_4, window_bounds = array<i64: 16, 4, 8>}, {pipeline_mode = #tpu.pipeline_mode<synchronous>, transform_indices = @transform_5, window_bounds = array<i64: 16, 8, 128>}, {transform_indices = @transform_6, window_bounds = array<i64: 1, 64, 128>}, {transform_indices = @transform_7, window_bounds = array<i64: 1, 64, 128>}, {transform_indices = @transform_8, window_bounds = array<i64: 1, 64, 128>}, {transform_indices = @transform_9, window_bounds = array<i64: 1, 64, 128>}, {transform_indices = @transform_10, window_bounds = array<i64: 1, 8, 128>}]} {
    %cst = arith.constant 0.000000e+00 : f32
    %0 = vector.broadcast %cst : f32 to vector<64x8xf32>
    %c0 = arith.constant 0 : index
    %c0_0 = arith.constant 0 : index
    %c0_1 = arith.constant 0 : index
    %c0_2 = arith.constant 0 : index
    %1 = vector.load %arg1[%c0, %c0_0, %c0_1, %c0_2] : memref<1x9x9x4xf32, #tpu.memory_space<vmem>>, vector<1x9x9x4xf32>
    %2 = vector.shape_cast %1 : vector<1x9x9x4xf32> to vector<9x9x4xf32>
    %cst_3 = arith.constant 0.000000e+00 : f32
    %3 = vector.broadcast %cst_3 : f32 to vector<9x9x4xf32>
    %4 = arith.cmpf oge, %2, %3 : vector<9x9x4xf32>
    %cst_4 = arith.constant 2.000000e-01 : f32
    %5 = vector.broadcast %cst_4 : f32 to vector<9x9x4xf32>
    %6 = arith.mulf %5, %2 : vector<9x9x4xf32>
    %7 = arith.select %4, %2, %6 : vector<9x9x4xi1>, vector<9x9x4xf32>
    %8 = vector.extract_strided_slice %7 {offsets = [0, 0, 0], sizes = [8, 8, 4], strides = [1, 1, 1]} : vector<9x9x4xf32> to vector<8x8x4xf32>
    %9 = vector.shape_cast %8 : vector<8x8x4xf32> to vector<64x4xf32>
    %c0_5 = arith.constant 0 : index
    %c0_6 = arith.constant 0 : index
    %c0_7 = arith.constant 0 : index
    %10 = vector.load %arg5[%c0_5, %c0_6, %c0_7] : memref<16x4x8xbf16, #tpu.memory_space<vmem>>, vector<1x4x8xbf16>
    %11 = vector.shape_cast %10 : vector<1x4x8xbf16> to vector<4x8xbf16>
    %12 = arith.truncf %9 : vector<64x4xf32> to vector<64x4xbf16>
    %cst_8 = arith.constant dense<0.000000e+00> : vector<64x8xf32>
    %13 = tpu.matmul %12, %11, %cst_8 {dimension_numbers = #tpu.dot_dimension_numbers<[1], [0], [0], [1], [0, 0, 1, 1], [], []>} : vector<64x4xbf16>, vector<4x8xbf16>, vector<64x8xf32> -> vector<64x8xf32>
    %14 = arith.addf %0, %13 : vector<64x8xf32>
    %15 = vector.extract_strided_slice %7 {offsets = [0, 1, 0], sizes = [8, 8, 4], strides = [1, 1, 1]} : vector<9x9x4xf32> to vector<8x8x4xf32>
    %16 = vector.shape_cast %15 : vector<8x8x4xf32> to vector<64x4xf32>
    %c2 = arith.constant 2 : index
    %c0_9 = arith.constant 0 : index
    %c0_10 = arith.constant 0 : index
    %17 = vector.load %arg5[%c2, %c0_9, %c0_10] : memref<16x4x8xbf16, #tpu.memory_space<vmem>>, vector<1x4x8xbf16>
    %18 = vector.shape_cast %17 : vector<1x4x8xbf16> to vector<4x8xbf16>
    %19 = arith.truncf %16 : vector<64x4xf32> to vector<64x4xbf16>
    %cst_11 = arith.constant dense<0.000000e+00> : vector<64x8xf32>
    %20 = tpu.matmul %19, %18, %cst_11 {dimension_numbers = #tpu.dot_dimension_numbers<[1], [0], [0], [1], [0, 0, 1, 1], [], []>} : vector<64x4xbf16>, vector<4x8xbf16>, vector<64x8xf32> -> vector<64x8xf32>
    %21 = arith.addf %14, %20 : vector<64x8xf32>
    %22 = vector.extract_strided_slice %7 {offsets = [1, 0, 0], sizes = [8, 8, 4], strides = [1, 1, 1]} : vector<9x9x4xf32> to vector<8x8x4xf32>
    %23 = vector.shape_cast %22 : vector<8x8x4xf32> to vector<64x4xf32>
    %c8 = arith.constant 8 : index
    %c0_12 = arith.constant 0 : index
    %c0_13 = arith.constant 0 : index
    %24 = vector.load %arg5[%c8, %c0_12, %c0_13] : memref<16x4x8xbf16, #tpu.memory_space<vmem>>, vector<1x4x8xbf16>
    %25 = vector.shape_cast %24 : vector<1x4x8xbf16> to vector<4x8xbf16>
    %26 = arith.truncf %23 : vector<64x4xf32> to vector<64x4xbf16>
    %cst_14 = arith.constant dense<0.000000e+00> : vector<64x8xf32>
    %27 = tpu.matmul %26, %25, %cst_14 {dimension_numbers = #tpu.dot_dimension_numbers<[1], [0], [0], [1], [0, 0, 1, 1], [], []>} : vector<64x4xbf16>, vector<4x8xbf16>, vector<64x8xf32> -> vector<64x8xf32>
    %28 = arith.addf %21, %27 : vector<64x8xf32>
    %29 = vector.extract_strided_slice %7 {offsets = [1, 1, 0], sizes = [8, 8, 4], strides = [1, 1, 1]} : vector<9x9x4xf32> to vector<8x8x4xf32>
    %30 = vector.shape_cast %29 : vector<8x8x4xf32> to vector<64x4xf32>
    %c10 = arith.constant 10 : index
    %c0_15 = arith.constant 0 : index
    %c0_16 = arith.constant 0 : index
    %31 = vector.load %arg5[%c10, %c0_15, %c0_16] : memref<16x4x8xbf16, #tpu.memory_space<vmem>>, vector<1x4x8xbf16>
    %32 = vector.shape_cast %31 : vector<1x4x8xbf16> to vector<4x8xbf16>
    %33 = arith.truncf %30 : vector<64x4xf32> to vector<64x4xbf16>
    %cst_17 = arith.constant dense<0.000000e+00> : vector<64x8xf32>
    %34 = tpu.matmul %33, %32, %cst_17 {dimension_numbers = #tpu.dot_dimension_numbers<[1], [0], [0], [1], [0, 0, 1, 1], [], []>} : vector<64x4xbf16>, vector<4x8xbf16>, vector<64x8xf32> -> vector<64x8xf32>
    %35 = arith.addf %28, %34 : vector<64x8xf32>
    %c0_18 = arith.constant 0 : index
    %c0_19 = arith.constant 0 : index
    %c0_20 = arith.constant 0 : index
    %c0_21 = arith.constant 0 : index
    %36 = vector.load %arg2[%c0_18, %c0_19, %c0_20, %c0_21] : memref<1x9x9x4xf32, #tpu.memory_space<vmem>>, vector<1x9x9x4xf32>
    %37 = vector.shape_cast %36 : vector<1x9x9x4xf32> to vector<9x9x4xf32>
    %cst_22 = arith.constant 0.000000e+00 : f32
    %38 = vector.broadcast %cst_22 : f32 to vector<9x9x4xf32>
    %39 = arith.cmpf oge, %37, %38 : vector<9x9x4xf32>
    %cst_23 = arith.constant 2.000000e-01 : f32
    %40 = vector.broadcast %cst_23 : f32 to vector<9x9x4xf32>
    %41 = arith.mulf %40, %37 : vector<9x9x4xf32>
    %42 = arith.select %39, %37, %41 : vector<9x9x4xi1>, vector<9x9x4xf32>
    %43 = vector.extract_strided_slice %42 {offsets = [0, 0, 0], sizes = [8, 8, 4], strides = [1, 1, 1]} : vector<9x9x4xf32> to vector<8x8x4xf32>
    %44 = vector.shape_cast %43 : vector<8x8x4xf32> to vector<64x4xf32>
    %c1 = arith.constant 1 : index
    %c0_24 = arith.constant 0 : index
    %c0_25 = arith.constant 0 : index
    %45 = vector.load %arg5[%c1, %c0_24, %c0_25] : memref<16x4x8xbf16, #tpu.memory_space<vmem>>, vector<1x4x8xbf16>
    %46 = vector.shape_cast %45 : vector<1x4x8xbf16> to vector<4x8xbf16>
    %47 = arith.truncf %44 : vector<64x4xf32> to vector<64x4xbf16>
    %cst_26 = arith.constant dense<0.000000e+00> : vector<64x8xf32>
    %48 = tpu.matmul %47, %46, %cst_26 {dimension_numbers = #tpu.dot_dimension_numbers<[1], [0], [0], [1], [0, 0, 1, 1], [], []>} : vector<64x4xbf16>, vector<4x8xbf16>, vector<64x8xf32> -> vector<64x8xf32>
    %49 = arith.addf %35, %48 : vector<64x8xf32>
    %50 = vector.extract_strided_slice %42 {offsets = [0, 1, 0], sizes = [8, 8, 4], strides = [1, 1, 1]} : vector<9x9x4xf32> to vector<8x8x4xf32>
    %51 = vector.shape_cast %50 : vector<8x8x4xf32> to vector<64x4xf32>
    %c3 = arith.constant 3 : index
    %c0_27 = arith.constant 0 : index
    %c0_28 = arith.constant 0 : index
    %52 = vector.load %arg5[%c3, %c0_27, %c0_28] : memref<16x4x8xbf16, #tpu.memory_space<vmem>>, vector<1x4x8xbf16>
    %53 = vector.shape_cast %52 : vector<1x4x8xbf16> to vector<4x8xbf16>
    %54 = arith.truncf %51 : vector<64x4xf32> to vector<64x4xbf16>
    %cst_29 = arith.constant dense<0.000000e+00> : vector<64x8xf32>
    %55 = tpu.matmul %54, %53, %cst_29 {dimension_numbers = #tpu.dot_dimension_numbers<[1], [0], [0], [1], [0, 0, 1, 1], [], []>} : vector<64x4xbf16>, vector<4x8xbf16>, vector<64x8xf32> -> vector<64x8xf32>
    %56 = arith.addf %49, %55 : vector<64x8xf32>
    %57 = vector.extract_strided_slice %42 {offsets = [1, 0, 0], sizes = [8, 8, 4], strides = [1, 1, 1]} : vector<9x9x4xf32> to vector<8x8x4xf32>
    %58 = vector.shape_cast %57 : vector<8x8x4xf32> to vector<64x4xf32>
    %c9 = arith.constant 9 : index
    %c0_30 = arith.constant 0 : index
    %c0_31 = arith.constant 0 : index
    %59 = vector.load %arg5[%c9, %c0_30, %c0_31] : memref<16x4x8xbf16, #tpu.memory_space<vmem>>, vector<1x4x8xbf16>
    %60 = vector.shape_cast %59 : vector<1x4x8xbf16> to vector<4x8xbf16>
    %61 = arith.truncf %58 : vector<64x4xf32> to vector<64x4xbf16>
    %cst_32 = arith.constant dense<0.000000e+00> : vector<64x8xf32>
    %62 = tpu.matmul %61, %60, %cst_32 {dimension_numbers = #tpu.dot_dimension_numbers<[1], [0], [0], [1], [0, 0, 1, 1], [], []>} : vector<64x4xbf16>, vector<4x8xbf16>, vector<64x8xf32> -> vector<64x8xf32>
    %63 = arith.addf %56, %62 : vector<64x8xf32>
    %64 = vector.extract_strided_slice %42 {offsets = [1, 1, 0], sizes = [8, 8, 4], strides = [1, 1, 1]} : vector<9x9x4xf32> to vector<8x8x4xf32>
    %65 = vector.shape_cast %64 : vector<8x8x4xf32> to vector<64x4xf32>
    %c11 = arith.constant 11 : index
    %c0_33 = arith.constant 0 : index
    %c0_34 = arith.constant 0 : index
    %66 = vector.load %arg5[%c11, %c0_33, %c0_34] : memref<16x4x8xbf16, #tpu.memory_space<vmem>>, vector<1x4x8xbf16>
    %67 = vector.shape_cast %66 : vector<1x4x8xbf16> to vector<4x8xbf16>
    %68 = arith.truncf %65 : vector<64x4xf32> to vector<64x4xbf16>
    %cst_35 = arith.constant dense<0.000000e+00> : vector<64x8xf32>
    %69 = tpu.matmul %68, %67, %cst_35 {dimension_numbers = #tpu.dot_dimension_numbers<[1], [0], [0], [1], [0, 0, 1, 1], [], []>} : vector<64x4xbf16>, vector<4x8xbf16>, vector<64x8xf32> -> vector<64x8xf32>
    %70 = arith.addf %63, %69 : vector<64x8xf32>
    %c0_36 = arith.constant 0 : index
    %c0_37 = arith.constant 0 : index
    %c0_38 = arith.constant 0 : index
    %c0_39 = arith.constant 0 : index
    %71 = vector.load %arg3[%c0_36, %c0_37, %c0_38, %c0_39] : memref<1x9x9x4xf32, #tpu.memory_space<vmem>>, vector<1x9x9x4xf32>
    %72 = vector.shape_cast %71 : vector<1x9x9x4xf32> to vector<9x9x4xf32>
    %cst_40 = arith.constant 0.000000e+00 : f32
    %73 = vector.broadcast %cst_40 : f32 to vector<9x9x4xf32>
    %74 = arith.cmpf oge, %72, %73 : vector<9x9x4xf32>
    %cst_41 = arith.constant 2.000000e-01 : f32
    %75 = vector.broadcast %cst_41 : f32 to vector<9x9x4xf32>
    %76 = arith.mulf %75, %72 : vector<9x9x4xf32>
    %77 = arith.select %74, %72, %76 : vector<9x9x4xi1>, vector<9x9x4xf32>
    %78 = vector.extract_strided_slice %77 {offsets = [0, 0, 0], sizes = [8, 8, 4], strides = [1, 1, 1]} : vector<9x9x4xf32> to vector<8x8x4xf32>
    %79 = vector.shape_cast %78 : vector<8x8x4xf32> to vector<64x4xf32>
    %c4 = arith.constant 4 : index
    %c0_42 = arith.constant 0 : index
    %c0_43 = arith.constant 0 : index
    %80 = vector.load %arg5[%c4, %c0_42, %c0_43] : memref<16x4x8xbf16, #tpu.memory_space<vmem>>, vector<1x4x8xbf16>
    %81 = vector.shape_cast %80 : vector<1x4x8xbf16> to vector<4x8xbf16>
    %82 = arith.truncf %79 : vector<64x4xf32> to vector<64x4xbf16>
    %cst_44 = arith.constant dense<0.000000e+00> : vector<64x8xf32>
    %83 = tpu.matmul %82, %81, %cst_44 {dimension_numbers = #tpu.dot_dimension_numbers<[1], [0], [0], [1], [0, 0, 1, 1], [], []>} : vector<64x4xbf16>, vector<4x8xbf16>, vector<64x8xf32> -> vector<64x8xf32>
    %84 = arith.addf %70, %83 : vector<64x8xf32>
    %85 = vector.extract_strided_slice %77 {offsets = [0, 1, 0], sizes = [8, 8, 4], strides = [1, 1, 1]} : vector<9x9x4xf32> to vector<8x8x4xf32>
    %86 = vector.shape_cast %85 : vector<8x8x4xf32> to vector<64x4xf32>
    %c6 = arith.constant 6 : index
    %c0_45 = arith.constant 0 : index
    %c0_46 = arith.constant 0 : index
    %87 = vector.load %arg5[%c6, %c0_45, %c0_46] : memref<16x4x8xbf16, #tpu.memory_space<vmem>>, vector<1x4x8xbf16>
    %88 = vector.shape_cast %87 : vector<1x4x8xbf16> to vector<4x8xbf16>
    %89 = arith.truncf %86 : vector<64x4xf32> to vector<64x4xbf16>
    %cst_47 = arith.constant dense<0.000000e+00> : vector<64x8xf32>
    %90 = tpu.matmul %89, %88, %cst_47 {dimension_numbers = #tpu.dot_dimension_numbers<[1], [0], [0], [1], [0, 0, 1, 1], [], []>} : vector<64x4xbf16>, vector<4x8xbf16>, vector<64x8xf32> -> vector<64x8xf32>
    %91 = arith.addf %84, %90 : vector<64x8xf32>
    %92 = vector.extract_strided_slice %77 {offsets = [1, 0, 0], sizes = [8, 8, 4], strides = [1, 1, 1]} : vector<9x9x4xf32> to vector<8x8x4xf32>
    %93 = vector.shape_cast %92 : vector<8x8x4xf32> to vector<64x4xf32>
    %c12 = arith.constant 12 : index
    %c0_48 = arith.constant 0 : index
    %c0_49 = arith.constant 0 : index
    %94 = vector.load %arg5[%c12, %c0_48, %c0_49] : memref<16x4x8xbf16, #tpu.memory_space<vmem>>, vector<1x4x8xbf16>
    %95 = vector.shape_cast %94 : vector<1x4x8xbf16> to vector<4x8xbf16>
    %96 = arith.truncf %93 : vector<64x4xf32> to vector<64x4xbf16>
    %cst_50 = arith.constant dense<0.000000e+00> : vector<64x8xf32>
    %97 = tpu.matmul %96, %95, %cst_50 {dimension_numbers = #tpu.dot_dimension_numbers<[1], [0], [0], [1], [0, 0, 1, 1], [], []>} : vector<64x4xbf16>, vector<4x8xbf16>, vector<64x8xf32> -> vector<64x8xf32>
    %98 = arith.addf %91, %97 : vector<64x8xf32>
    %99 = vector.extract_strided_slice %77 {offsets = [1, 1, 0], sizes = [8, 8, 4], strides = [1, 1, 1]} : vector<9x9x4xf32> to vector<8x8x4xf32>
    %100 = vector.shape_cast %99 : vector<8x8x4xf32> to vector<64x4xf32>
    %c14 = arith.constant 14 : index
    %c0_51 = arith.constant 0 : index
    %c0_52 = arith.constant 0 : index
    %101 = vector.load %arg5[%c14, %c0_51, %c0_52] : memref<16x4x8xbf16, #tpu.memory_space<vmem>>, vector<1x4x8xbf16>
    %102 = vector.shape_cast %101 : vector<1x4x8xbf16> to vector<4x8xbf16>
    %103 = arith.truncf %100 : vector<64x4xf32> to vector<64x4xbf16>
    %cst_53 = arith.constant dense<0.000000e+00> : vector<64x8xf32>
    %104 = tpu.matmul %103, %102, %cst_53 {dimension_numbers = #tpu.dot_dimension_numbers<[1], [0], [0], [1], [0, 0, 1, 1], [], []>} : vector<64x4xbf16>, vector<4x8xbf16>, vector<64x8xf32> -> vector<64x8xf32>
    %105 = arith.addf %98, %104 : vector<64x8xf32>
    %c0_54 = arith.constant 0 : index
    %c0_55 = arith.constant 0 : index
    %c0_56 = arith.constant 0 : index
    %c0_57 = arith.constant 0 : index
    %106 = vector.load %arg4[%c0_54, %c0_55, %c0_56, %c0_57] : memref<1x9x9x4xf32, #tpu.memory_space<vmem>>, vector<1x9x9x4xf32>
    %107 = vector.shape_cast %106 : vector<1x9x9x4xf32> to vector<9x9x4xf32>
    %cst_58 = arith.constant 0.000000e+00 : f32
    %108 = vector.broadcast %cst_58 : f32 to vector<9x9x4xf32>
    %109 = arith.cmpf oge, %107, %108 : vector<9x9x4xf32>
    %cst_59 = arith.constant 2.000000e-01 : f32
    %110 = vector.broadcast %cst_59 : f32 to vector<9x9x4xf32>
    %111 = arith.mulf %110, %107 : vector<9x9x4xf32>
    %112 = arith.select %109, %107, %111 : vector<9x9x4xi1>, vector<9x9x4xf32>
    %113 = vector.extract_strided_slice %112 {offsets = [0, 0, 0], sizes = [8, 8, 4], strides = [1, 1, 1]} : vector<9x9x4xf32> to vector<8x8x4xf32>
    %114 = vector.shape_cast %113 : vector<8x8x4xf32> to vector<64x4xf32>
    %c5 = arith.constant 5 : index
    %c0_60 = arith.constant 0 : index
    %c0_61 = arith.constant 0 : index
    %115 = vector.load %arg5[%c5, %c0_60, %c0_61] : memref<16x4x8xbf16, #tpu.memory_space<vmem>>, vector<1x4x8xbf16>
    %116 = vector.shape_cast %115 : vector<1x4x8xbf16> to vector<4x8xbf16>
    %117 = arith.truncf %114 : vector<64x4xf32> to vector<64x4xbf16>
    %cst_62 = arith.constant dense<0.000000e+00> : vector<64x8xf32>
    %118 = tpu.matmul %117, %116, %cst_62 {dimension_numbers = #tpu.dot_dimension_numbers<[1], [0], [0], [1], [0, 0, 1, 1], [], []>} : vector<64x4xbf16>, vector<4x8xbf16>, vector<64x8xf32> -> vector<64x8xf32>
    %119 = arith.addf %105, %118 : vector<64x8xf32>
    %120 = vector.extract_strided_slice %112 {offsets = [0, 1, 0], sizes = [8, 8, 4], strides = [1, 1, 1]} : vector<9x9x4xf32> to vector<8x8x4xf32>
    %121 = vector.shape_cast %120 : vector<8x8x4xf32> to vector<64x4xf32>
    %c7 = arith.constant 7 : index
    %c0_63 = arith.constant 0 : index
    %c0_64 = arith.constant 0 : index
    %122 = vector.load %arg5[%c7, %c0_63, %c0_64] : memref<16x4x8xbf16, #tpu.memory_space<vmem>>, vector<1x4x8xbf16>
    %123 = vector.shape_cast %122 : vector<1x4x8xbf16> to vector<4x8xbf16>
    %124 = arith.truncf %121 : vector<64x4xf32> to vector<64x4xbf16>
    %cst_65 = arith.constant dense<0.000000e+00> : vector<64x8xf32>
    %125 = tpu.matmul %124, %123, %cst_65 {dimension_numbers = #tpu.dot_dimension_numbers<[1], [0], [0], [1], [0, 0, 1, 1], [], []>} : vector<64x4xbf16>, vector<4x8xbf16>, vector<64x8xf32> -> vector<64x8xf32>
    %126 = arith.addf %119, %125 : vector<64x8xf32>
    %127 = vector.extract_strided_slice %112 {offsets = [1, 0, 0], sizes = [8, 8, 4], strides = [1, 1, 1]} : vector<9x9x4xf32> to vector<8x8x4xf32>
    %128 = vector.shape_cast %127 : vector<8x8x4xf32> to vector<64x4xf32>
    %c13 = arith.constant 13 : index
    %c0_66 = arith.constant 0 : index
    %c0_67 = arith.constant 0 : index
    %129 = vector.load %arg5[%c13, %c0_66, %c0_67] : memref<16x4x8xbf16, #tpu.memory_space<vmem>>, vector<1x4x8xbf16>
    %130 = vector.shape_cast %129 : vector<1x4x8xbf16> to vector<4x8xbf16>
    %131 = arith.truncf %128 : vector<64x4xf32> to vector<64x4xbf16>
    %cst_68 = arith.constant dense<0.000000e+00> : vector<64x8xf32>
    %132 = tpu.matmul %131, %130, %cst_68 {dimension_numbers = #tpu.dot_dimension_numbers<[1], [0], [0], [1], [0, 0, 1, 1], [], []>} : vector<64x4xbf16>, vector<4x8xbf16>, vector<64x8xf32> -> vector<64x8xf32>
    %133 = arith.addf %126, %132 : vector<64x8xf32>
    %134 = vector.extract_strided_slice %112 {offsets = [1, 1, 0], sizes = [8, 8, 4], strides = [1, 1, 1]} : vector<9x9x4xf32> to vector<8x8x4xf32>
    %135 = vector.shape_cast %134 : vector<8x8x4xf32> to vector<64x4xf32>
    %c15 = arith.constant 15 : index
    %c0_69 = arith.constant 0 : index
    %c0_70 = arith.constant 0 : index
    %136 = vector.load %arg5[%c15, %c0_69, %c0_70] : memref<16x4x8xbf16, #tpu.memory_space<vmem>>, vector<1x4x8xbf16>
    %137 = vector.shape_cast %136 : vector<1x4x8xbf16> to vector<4x8xbf16>
    %138 = arith.truncf %135 : vector<64x4xf32> to vector<64x4xbf16>
    %cst_71 = arith.constant dense<0.000000e+00> : vector<64x8xf32>
    %139 = tpu.matmul %138, %137, %cst_71 {dimension_numbers = #tpu.dot_dimension_numbers<[1], [0], [0], [1], [0, 0, 1, 1], [], []>} : vector<64x4xbf16>, vector<4x8xbf16>, vector<64x8xf32> -> vector<64x8xf32>
    %140 = arith.addf %133, %139 : vector<64x8xf32>
    %cst_72 = arith.constant 0.000000e+00 : f32
    %141 = vector.broadcast %cst_72 : f32 to vector<64x8xf32>
    %142 = arith.maximumf %140, %141 : vector<64x8xf32>
    %cst_73 = arith.constant 0.000000e+00 : f32
    %143 = vector.broadcast %cst_73 : f32 to vector<10x10x8xf32>
    %c0_74 = arith.constant 0 : index
    %c0_75 = arith.constant 0 : index
    %c0_76 = arith.constant 0 : index
    %144 = vector.load %arg12[%c0_74, %c0_75, %c0_76] : memref<10x10x8xf32, #tpu.memory_space<vmem>>, vector<10x10x8xf32>
    tpu.vector_store %arg12[%c0_74, %c0_75, %c0_76], %143 {strides = array<i32>} : memref<10x10x8xf32, #tpu.memory_space<vmem>>, vector<10x10x8xf32>,
    %145 = vector.shape_cast %142 : vector<64x8xf32> to vector<8x8x8xf32>
    %c1_77 = arith.constant 1 : index
    %c1_78 = arith.constant 1 : index
    %c0_79 = arith.constant 0 : index
    %146 = vector.load %arg12[%c1_77, %c1_78, %c0_79] : memref<10x10x8xf32, #tpu.memory_space<vmem>>, vector<8x8x8xf32>
    tpu.vector_store %arg12[%c1_77, %c1_78, %c0_79], %145 {strides = array<i32>} : memref<10x10x8xf32, #tpu.memory_space<vmem>>, vector<8x8x8xf32>,
    %cst_80 = arith.constant 0.000000e+00 : f32
    %147 = vector.broadcast %cst_80 : f32 to vector<1x128xf32>
    %cst_81 = arith.constant 0.000000e+00 : f32
    %148 = vector.broadcast %cst_81 : f32 to vector<1x128xf32>
    %cst_82 = arith.constant 0.000000e+00 : f32
    %149 = vector.broadcast %cst_82 : f32 to vector<64x128xf32>
    %c0_83 = arith.constant 0 : index
    %c0_84 = arith.constant 0 : index
    %c0_85 = arith.constant 0 : index
    %150 = vector.load %arg12[%c0_83, %c0_84, %c0_85] : memref<10x10x8xf32, #tpu.memory_space<vmem>>, vector<8x8x8xf32>
    %151 = vector.shape_cast %150 : vector<8x8x8xf32> to vector<64x8xf32>
    %c0_86 = arith.constant 0 : index
    %c0_87 = arith.constant 0 : index
    %c0_88 = arith.constant 0 : index
    %152 = vector.load %arg6[%c0_86, %c0_87, %c0_88] : memref<16x8x128xbf16, #tpu.memory_space<vmem>>, vector<1x8x128xbf16>
    %153 = vector.shape_cast %152 : vector<1x8x128xbf16> to vector<8x128xbf16>
    %154 = arith.truncf %151 : vector<64x8xf32> to vector<64x8xbf16>
    %cst_89 = arith.constant dense<0.000000e+00> : vector<64x128xf32>
    %155 = tpu.matmul %154, %153, %cst_89 {dimension_numbers = #tpu.dot_dimension_numbers<[1], [0], [0], [1], [0, 0, 1, 1], [], []>} : vector<64x8xbf16>, vector<8x128xbf16>, vector<64x128xf32> -> vector<64x128xf32>
    %156 = arith.addf %149, %155 : vector<64x128xf32>
    %c0_90 = arith.constant 0 : index
    %c1_91 = arith.constant 1 : index
    %c0_92 = arith.constant 0 : index
    %157 = vector.load %arg12[%c0_90, %c1_91, %c0_92] : memref<10x10x8xf32, #tpu.memory_space<vmem>>, vector<8x8x8xf32>
    %158 = vector.shape_cast %157 : vector<8x8x8xf32> to vector<64x8xf32>
    %c1_93 = arith.constant 1 : index
    %c0_94 = arith.constant 0 : index
    %c0_95 = arith.constant 0 : index
    %159 = vector.load %arg6[%c1_93, %c0_94, %c0_95] : memref<16x8x128xbf16, #tpu.memory_space<vmem>>, vector<1x8x128xbf16>
    %160 = vector.shape_cast %159 : vector<1x8x128xbf16> to vector<8x128xbf16>
    %161 = arith.truncf %158 : vector<64x8xf32> to vector<64x8xbf16>
    %cst_96 = arith.constant dense<0.000000e+00> : vector<64x128xf32>
    %162 = tpu.matmul %161, %160, %cst_96 {dimension_numbers = #tpu.dot_dimension_numbers<[1], [0], [0], [1], [0, 0, 1, 1], [], []>} : vector<64x8xbf16>, vector<8x128xbf16>, vector<64x128xf32> -> vector<64x128xf32>
    %163 = arith.addf %156, %162 : vector<64x128xf32>
    %c1_97 = arith.constant 1 : index
    %c0_98 = arith.constant 0 : index
    %c0_99 = arith.constant 0 : index
    %164 = vector.load %arg12[%c1_97, %c0_98, %c0_99] : memref<10x10x8xf32, #tpu.memory_space<vmem>>, vector<8x8x8xf32>
    %165 = vector.shape_cast %164 : vector<8x8x8xf32> to vector<64x8xf32>
    %c2_100 = arith.constant 2 : index
    %c0_101 = arith.constant 0 : index
    %c0_102 = arith.constant 0 : index
    %166 = vector.load %arg6[%c2_100, %c0_101, %c0_102] : memref<16x8x128xbf16, #tpu.memory_space<vmem>>, vector<1x8x128xbf16>
    %167 = vector.shape_cast %166 : vector<1x8x128xbf16> to vector<8x128xbf16>
    %168 = arith.truncf %165 : vector<64x8xf32> to vector<64x8xbf16>
    %cst_103 = arith.constant dense<0.000000e+00> : vector<64x128xf32>
    %169 = tpu.matmul %168, %167, %cst_103 {dimension_numbers = #tpu.dot_dimension_numbers<[1], [0], [0], [1], [0, 0, 1, 1], [], []>} : vector<64x8xbf16>, vector<8x128xbf16>, vector<64x128xf32> -> vector<64x128xf32>
    %170 = arith.addf %163, %169 : vector<64x128xf32>
    %c1_104 = arith.constant 1 : index
    %c1_105 = arith.constant 1 : index
    %c0_106 = arith.constant 0 : index
    %171 = vector.load %arg12[%c1_104, %c1_105, %c0_106] : memref<10x10x8xf32, #tpu.memory_space<vmem>>, vector<8x8x8xf32>
    %172 = vector.shape_cast %171 : vector<8x8x8xf32> to vector<64x8xf32>
    %c3_107 = arith.constant 3 : index
    %c0_108 = arith.constant 0 : index
    %c0_109 = arith.constant 0 : index
    %173 = vector.load %arg6[%c3_107, %c0_108, %c0_109] : memref<16x8x128xbf16, #tpu.memory_space<vmem>>, vector<1x8x128xbf16>
    %174 = vector.shape_cast %173 : vector<1x8x128xbf16> to vector<8x128xbf16>
    %175 = arith.truncf %172 : vector<64x8xf32> to vector<64x8xbf16>
    %cst_110 = arith.constant dense<0.000000e+00> : vector<64x128xf32>
    %176 = tpu.matmul %175, %174, %cst_110 {dimension_numbers = #tpu.dot_dimension_numbers<[1], [0], [0], [1], [0, 0, 1, 1], [], []>} : vector<64x8xbf16>, vector<8x128xbf16>, vector<64x128xf32> -> vector<64x128xf32>
    %177 = arith.addf %170, %176 : vector<64x128xf32>
    %c0_111 = arith.constant 0 : index
    %c0_112 = arith.constant 0 : index
    %c0_113 = arith.constant 0 : index
    %178 = vector.load %arg7[%c0_111, %c0_112, %c0_113] : memref<1x64x128xf32, #tpu.memory_space<vmem>>, vector<1x64x128xf32>
    %179 = vector.shape_cast %178 : vector<1x64x128xf32> to vector<64x128xf32>
    %180 = vector.shape_cast %177 : vector<64x128xf32> to vector<1x64x128xf32>
    tpu.vector_store %arg7[%c0_111, %c0_112, %c0_113], %180 {strides = array<i32>} : memref<1x64x128xf32, #tpu.memory_space<vmem>>, vector<1x64x128xf32>,
    %cst_114 = arith.constant dense<0.000000e+00> : vector<128xf32>
    %181 = vector.multi_reduction <add>, %177, %cst_114 [0] : vector<64x128xf32> to vector<128xf32>
    %182 = vector.shape_cast %181 : vector<128xf32> to vector<1x128xf32>
    %183 = arith.addf %147, %182 : vector<1x128xf32>
    %184 = arith.mulf %177, %177 : vector<64x128xf32>
    %cst_115 = arith.constant dense<0.000000e+00> : vector<128xf32>
    %185 = vector.multi_reduction <add>, %184, %cst_115 [0] : vector<64x128xf32> to vector<128xf32>
    %186 = vector.shape_cast %185 : vector<128xf32> to vector<1x128xf32>
    %187 = arith.addf %148, %186 : vector<1x128xf32>
    %cst_116 = arith.constant 0.000000e+00 : f32
    %188 = vector.broadcast %cst_116 : f32 to vector<64x128xf32>
    %c0_117 = arith.constant 0 : index
    %c1_118 = arith.constant 1 : index
    %c0_119 = arith.constant 0 : index
    %189 = vector.load %arg12[%c0_117, %c1_118, %c0_119] : memref<10x10x8xf32, #tpu.memory_space<vmem>>, vector<8x8x8xf32>
    %190 = vector.shape_cast %189 : vector<8x8x8xf32> to vector<64x8xf32>
    %c4_120 = arith.constant 4 : index
    %c0_121 = arith.constant 0 : index
    %c0_122 = arith.constant 0 : index
    %191 = vector.load %arg6[%c4_120, %c0_121, %c0_122] : memref<16x8x128xbf16, #tpu.memory_space<vmem>>, vector<1x8x128xbf16>
    %192 = vector.shape_cast %191 : vector<1x8x128xbf16> to vector<8x128xbf16>
    %193 = arith.truncf %190 : vector<64x8xf32> to vector<64x8xbf16>
    %cst_123 = arith.constant dense<0.000000e+00> : vector<64x128xf32>
    %194 = tpu.matmul %193, %192, %cst_123 {dimension_numbers = #tpu.dot_dimension_numbers<[1], [0], [0], [1], [0, 0, 1, 1], [], []>} : vector<64x8xbf16>, vector<8x128xbf16>, vector<64x128xf32> -> vector<64x128xf32>
    %195 = arith.addf %188, %194 : vector<64x128xf32>
    %c0_124 = arith.constant 0 : index
    %c2_125 = arith.constant 2 : index
    %c0_126 = arith.constant 0 : index
    %196 = vector.load %arg12[%c0_124, %c2_125, %c0_126] : memref<10x10x8xf32, #tpu.memory_space<vmem>>, vector<8x8x8xf32>
    %197 = vector.shape_cast %196 : vector<8x8x8xf32> to vector<64x8xf32>
    %c5_127 = arith.constant 5 : index
    %c0_128 = arith.constant 0 : index
    %c0_129 = arith.constant 0 : index
    %198 = vector.load %arg6[%c5_127, %c0_128, %c0_129] : memref<16x8x128xbf16, #tpu.memory_space<vmem>>, vector<1x8x128xbf16>
    %199 = vector.shape_cast %198 : vector<1x8x128xbf16> to vector<8x128xbf16>
    %200 = arith.truncf %197 : vector<64x8xf32> to vector<64x8xbf16>
    %cst_130 = arith.constant dense<0.000000e+00> : vector<64x128xf32>
    %201 = tpu.matmul %200, %199, %cst_130 {dimension_numbers = #tpu.dot_dimension_numbers<[1], [0], [0], [1], [0, 0, 1, 1], [], []>} : vector<64x8xbf16>, vector<8x128xbf16>, vector<64x128xf32> -> vector<64x128xf32>
    %202 = arith.addf %195, %201 : vector<64x128xf32>
    %c1_131 = arith.constant 1 : index
    %c1_132 = arith.constant 1 : index
    %c0_133 = arith.constant 0 : index
    %203 = vector.load %arg12[%c1_131, %c1_132, %c0_133] : memref<10x10x8xf32, #tpu.memory_space<vmem>>, vector<8x8x8xf32>
    %204 = vector.shape_cast %203 : vector<8x8x8xf32> to vector<64x8xf32>
    %c6_134 = arith.constant 6 : index
    %c0_135 = arith.constant 0 : index
    %c0_136 = arith.constant 0 : index
    %205 = vector.load %arg6[%c6_134, %c0_135, %c0_136] : memref<16x8x128xbf16, #tpu.memory_space<vmem>>, vector<1x8x128xbf16>
    %206 = vector.shape_cast %205 : vector<1x8x128xbf16> to vector<8x128xbf16>
    %207 = arith.truncf %204 : vector<64x8xf32> to vector<64x8xbf16>
    %cst_137 = arith.constant dense<0.000000e+00> : vector<64x128xf32>
    %208 = tpu.matmul %207, %206, %cst_137 {dimension_numbers = #tpu.dot_dimension_numbers<[1], [0], [0], [1], [0, 0, 1, 1], [], []>} : vector<64x8xbf16>, vector<8x128xbf16>, vector<64x128xf32> -> vector<64x128xf32>
    %209 = arith.addf %202, %208 : vector<64x128xf32>
    %c1_138 = arith.constant 1 : index
    %c2_139 = arith.constant 2 : index
    %c0_140 = arith.constant 0 : index
    %210 = vector.load %arg12[%c1_138, %c2_139, %c0_140] : memref<10x10x8xf32, #tpu.memory_space<vmem>>, vector<8x8x8xf32>
    %211 = vector.shape_cast %210 : vector<8x8x8xf32> to vector<64x8xf32>
    %c7_141 = arith.constant 7 : index
    %c0_142 = arith.constant 0 : index
    %c0_143 = arith.constant 0 : index
    %212 = vector.load %arg6[%c7_141, %c0_142, %c0_143] : memref<16x8x128xbf16, #tpu.memory_space<vmem>>, vector<1x8x128xbf16>
    %213 = vector.shape_cast %212 : vector<1x8x128xbf16> to vector<8x128xbf16>
    %214 = arith.truncf %211 : vector<64x8xf32> to vector<64x8xbf16>
    %cst_144 = arith.constant dense<0.000000e+00> : vector<64x128xf32>
    %215 = tpu.matmul %214, %213, %cst_144 {dimension_numbers = #tpu.dot_dimension_numbers<[1], [0], [0], [1], [0, 0, 1, 1], [], []>} : vector<64x8xbf16>, vector<8x128xbf16>, vector<64x128xf32> -> vector<64x128xf32>
    %216 = arith.addf %209, %215 : vector<64x128xf32>
    %c0_145 = arith.constant 0 : index
    %c0_146 = arith.constant 0 : index
    %c0_147 = arith.constant 0 : index
    %217 = vector.load %arg8[%c0_145, %c0_146, %c0_147] : memref<1x64x128xf32, #tpu.memory_space<vmem>>, vector<1x64x128xf32>
    %218 = vector.shape_cast %217 : vector<1x64x128xf32> to vector<64x128xf32>
    %219 = vector.shape_cast %216 : vector<64x128xf32> to vector<1x64x128xf32>
    tpu.vector_store %arg8[%c0_145, %c0_146, %c0_147], %219 {strides = array<i32>} : memref<1x64x128xf32, #tpu.memory_space<vmem>>, vector<1x64x128xf32>,
    %cst_148 = arith.constant dense<0.000000e+00> : vector<128xf32>
    %220 = vector.multi_reduction <add>, %216, %cst_148 [0] : vector<64x128xf32> to vector<128xf32>
    %221 = vector.shape_cast %220 : vector<128xf32> to vector<1x128xf32>
    %222 = arith.addf %183, %221 : vector<1x128xf32>
    %223 = arith.mulf %216, %216 : vector<64x128xf32>
    %cst_149 = arith.constant dense<0.000000e+00> : vector<128xf32>
    %224 = vector.multi_reduction <add>, %223, %cst_149 [0] : vector<64x128xf32> to vector<128xf32>
    %225 = vector.shape_cast %224 : vector<128xf32> to vector<1x128xf32>
    %226 = arith.addf %187, %225 : vector<1x128xf32>
    %cst_150 = arith.constant 0.000000e+00 : f32
    %227 = vector.broadcast %cst_150 : f32 to vector<64x128xf32>
    %c1_151 = arith.constant 1 : index
    %c0_152 = arith.constant 0 : index
    %c0_153 = arith.constant 0 : index
    %228 = vector.load %arg12[%c1_151, %c0_152, %c0_153] : memref<10x10x8xf32, #tpu.memory_space<vmem>>, vector<8x8x8xf32>
    %229 = vector.shape_cast %228 : vector<8x8x8xf32> to vector<64x8xf32>
    %c8_154 = arith.constant 8 : index
    %c0_155 = arith.constant 0 : index
    %c0_156 = arith.constant 0 : index
    %230 = vector.load %arg6[%c8_154, %c0_155, %c0_156] : memref<16x8x128xbf16, #tpu.memory_space<vmem>>, vector<1x8x128xbf16>
    %231 = vector.shape_cast %230 : vector<1x8x128xbf16> to vector<8x128xbf16>
    %232 = arith.truncf %229 : vector<64x8xf32> to vector<64x8xbf16>
    %cst_157 = arith.constant dense<0.000000e+00> : vector<64x128xf32>
    %233 = tpu.matmul %232, %231, %cst_157 {dimension_numbers = #tpu.dot_dimension_numbers<[1], [0], [0], [1], [0, 0, 1, 1], [], []>} : vector<64x8xbf16>, vector<8x128xbf16>, vector<64x128xf32> -> vector<64x128xf32>
    %234 = arith.addf %227, %233 : vector<64x128xf32>
    %c1_158 = arith.constant 1 : index
    %c1_159 = arith.constant 1 : index
    %c0_160 = arith.constant 0 : index
    %235 = vector.load %arg12[%c1_158, %c1_159, %c0_160] : memref<10x10x8xf32, #tpu.memory_space<vmem>>, vector<8x8x8xf32>
    %236 = vector.shape_cast %235 : vector<8x8x8xf32> to vector<64x8xf32>
    %c9_161 = arith.constant 9 : index
    %c0_162 = arith.constant 0 : index
    %c0_163 = arith.constant 0 : index
    %237 = vector.load %arg6[%c9_161, %c0_162, %c0_163] : memref<16x8x128xbf16, #tpu.memory_space<vmem>>, vector<1x8x128xbf16>
    %238 = vector.shape_cast %237 : vector<1x8x128xbf16> to vector<8x128xbf16>
    %239 = arith.truncf %236 : vector<64x8xf32> to vector<64x8xbf16>
    %cst_164 = arith.constant dense<0.000000e+00> : vector<64x128xf32>
    %240 = tpu.matmul %239, %238, %cst_164 {dimension_numbers = #tpu.dot_dimension_numbers<[1], [0], [0], [1], [0, 0, 1, 1], [], []>} : vector<64x8xbf16>, vector<8x128xbf16>, vector<64x128xf32> -> vector<64x128xf32>
    %241 = arith.addf %234, %240 : vector<64x128xf32>
    %c2_165 = arith.constant 2 : index
    %c0_166 = arith.constant 0 : index
    %c0_167 = arith.constant 0 : index
    %242 = vector.load %arg12[%c2_165, %c0_166, %c0_167] : memref<10x10x8xf32, #tpu.memory_space<vmem>>, vector<8x8x8xf32>
    %243 = vector.shape_cast %242 : vector<8x8x8xf32> to vector<64x8xf32>
    %c10_168 = arith.constant 10 : index
    %c0_169 = arith.constant 0 : index
    %c0_170 = arith.constant 0 : index
    %244 = vector.load %arg6[%c10_168, %c0_169, %c0_170] : memref<16x8x128xbf16, #tpu.memory_space<vmem>>, vector<1x8x128xbf16>
    %245 = vector.shape_cast %244 : vector<1x8x128xbf16> to vector<8x128xbf16>
    %246 = arith.truncf %243 : vector<64x8xf32> to vector<64x8xbf16>
    %cst_171 = arith.constant dense<0.000000e+00> : vector<64x128xf32>
    %247 = tpu.matmul %246, %245, %cst_171 {dimension_numbers = #tpu.dot_dimension_numbers<[1], [0], [0], [1], [0, 0, 1, 1], [], []>} : vector<64x8xbf16>, vector<8x128xbf16>, vector<64x128xf32> -> vector<64x128xf32>
    %248 = arith.addf %241, %247 : vector<64x128xf32>
    %c2_172 = arith.constant 2 : index
    %c1_173 = arith.constant 1 : index
    %c0_174 = arith.constant 0 : index
    %249 = vector.load %arg12[%c2_172, %c1_173, %c0_174] : memref<10x10x8xf32, #tpu.memory_space<vmem>>, vector<8x8x8xf32>
    %250 = vector.shape_cast %249 : vector<8x8x8xf32> to vector<64x8xf32>
    %c11_175 = arith.constant 11 : index
    %c0_176 = arith.constant 0 : index
    %c0_177 = arith.constant 0 : index
    %251 = vector.load %arg6[%c11_175, %c0_176, %c0_177] : memref<16x8x128xbf16, #tpu.memory_space<vmem>>, vector<1x8x128xbf16>
    %252 = vector.shape_cast %251 : vector<1x8x128xbf16> to vector<8x128xbf16>
    %253 = arith.truncf %250 : vector<64x8xf32> to vector<64x8xbf16>
    %cst_178 = arith.constant dense<0.000000e+00> : vector<64x128xf32>
    %254 = tpu.matmul %253, %252, %cst_178 {dimension_numbers = #tpu.dot_dimension_numbers<[1], [0], [0], [1], [0, 0, 1, 1], [], []>} : vector<64x8xbf16>, vector<8x128xbf16>, vector<64x128xf32> -> vector<64x128xf32>
    %255 = arith.addf %248, %254 : vector<64x128xf32>
    %c0_179 = arith.constant 0 : index
    %c0_180 = arith.constant 0 : index
    %c0_181 = arith.constant 0 : index
    %256 = vector.load %arg9[%c0_179, %c0_180, %c0_181] : memref<1x64x128xf32, #tpu.memory_space<vmem>>, vector<1x64x128xf32>
    %257 = vector.shape_cast %256 : vector<1x64x128xf32> to vector<64x128xf32>
    %258 = vector.shape_cast %255 : vector<64x128xf32> to vector<1x64x128xf32>
    tpu.vector_store %arg9[%c0_179, %c0_180, %c0_181], %258 {strides = array<i32>} : memref<1x64x128xf32, #tpu.memory_space<vmem>>, vector<1x64x128xf32>,
    %cst_182 = arith.constant dense<0.000000e+00> : vector<128xf32>
    %259 = vector.multi_reduction <add>, %255, %cst_182 [0] : vector<64x128xf32> to vector<128xf32>
    %260 = vector.shape_cast %259 : vector<128xf32> to vector<1x128xf32>
    %261 = arith.addf %222, %260 : vector<1x128xf32>
    %262 = arith.mulf %255, %255 : vector<64x128xf32>
    %cst_183 = arith.constant dense<0.000000e+00> : vector<128xf32>
    %263 = vector.multi_reduction <add>, %262, %cst_183 [0] : vector<64x128xf32> to vector<128xf32>
    %264 = vector.shape_cast %263 : vector<128xf32> to vector<1x128xf32>
    %265 = arith.addf %226, %264 : vector<1x128xf32>
    %cst_184 = arith.constant 0.000000e+00 : f32
    %266 = vector.broadcast %cst_184 : f32 to vector<64x128xf32>
    %c1_185 = arith.constant 1 : index
    %c1_186 = arith.constant 1 : index
    %c0_187 = arith.constant 0 : index
    %267 = vector.load %arg12[%c1_185, %c1_186, %c0_187] : memref<10x10x8xf32, #tpu.memory_space<vmem>>, vector<8x8x8xf32>
    %268 = vector.shape_cast %267 : vector<8x8x8xf32> to vector<64x8xf32>
    %c12_188 = arith.constant 12 : index
    %c0_189 = arith.constant 0 : index
    %c0_190 = arith.constant 0 : index
    %269 = vector.load %arg6[%c12_188, %c0_189, %c0_190] : memref<16x8x128xbf16, #tpu.memory_space<vmem>>, vector<1x8x128xbf16>
    %270 = vector.shape_cast %269 : vector<1x8x128xbf16> to vector<8x128xbf16>
    %271 = arith.truncf %268 : vector<64x8xf32> to vector<64x8xbf16>
    %cst_191 = arith.constant dense<0.000000e+00> : vector<64x128xf32>
    %272 = tpu.matmul %271, %270, %cst_191 {dimension_numbers = #tpu.dot_dimension_numbers<[1], [0], [0], [1], [0, 0, 1, 1], [], []>} : vector<64x8xbf16>, vector<8x128xbf16>, vector<64x128xf32> -> vector<64x128xf32>
    %273 = arith.addf %266, %272 : vector<64x128xf32>
    %c1_192 = arith.constant 1 : index
    %c2_193 = arith.constant 2 : index
    %c0_194 = arith.constant 0 : index
    %274 = vector.load %arg12[%c1_192, %c2_193, %c0_194] : memref<10x10x8xf32, #tpu.memory_space<vmem>>, vector<8x8x8xf32>
    %275 = vector.shape_cast %274 : vector<8x8x8xf32> to vector<64x8xf32>
    %c13_195 = arith.constant 13 : index
    %c0_196 = arith.constant 0 : index
    %c0_197 = arith.constant 0 : index
    %276 = vector.load %arg6[%c13_195, %c0_196, %c0_197] : memref<16x8x128xbf16, #tpu.memory_space<vmem>>, vector<1x8x128xbf16>
    %277 = vector.shape_cast %276 : vector<1x8x128xbf16> to vector<8x128xbf16>
    %278 = arith.truncf %275 : vector<64x8xf32> to vector<64x8xbf16>
    %cst_198 = arith.constant dense<0.000000e+00> : vector<64x128xf32>
    %279 = tpu.matmul %278, %277, %cst_198 {dimension_numbers = #tpu.dot_dimension_numbers<[1], [0], [0], [1], [0, 0, 1, 1], [], []>} : vector<64x8xbf16>, vector<8x128xbf16>, vector<64x128xf32> -> vector<64x128xf32>
    %280 = arith.addf %273, %279 : vector<64x128xf32>
    %c2_199 = arith.constant 2 : index
    %c1_200 = arith.constant 1 : index
    %c0_201 = arith.constant 0 : index
    %281 = vector.load %arg12[%c2_199, %c1_200, %c0_201] : memref<10x10x8xf32, #tpu.memory_space<vmem>>, vector<8x8x8xf32>
    %282 = vector.shape_cast %281 : vector<8x8x8xf32> to vector<64x8xf32>
    %c14_202 = arith.constant 14 : index
    %c0_203 = arith.constant 0 : index
    %c0_204 = arith.constant 0 : index
    %283 = vector.load %arg6[%c14_202, %c0_203, %c0_204] : memref<16x8x128xbf16, #tpu.memory_space<vmem>>, vector<1x8x128xbf16>
    %284 = vector.shape_cast %283 : vector<1x8x128xbf16> to vector<8x128xbf16>
    %285 = arith.truncf %282 : vector<64x8xf32> to vector<64x8xbf16>
    %cst_205 = arith.constant dense<0.000000e+00> : vector<64x128xf32>
    %286 = tpu.matmul %285, %284, %cst_205 {dimension_numbers = #tpu.dot_dimension_numbers<[1], [0], [0], [1], [0, 0, 1, 1], [], []>} : vector<64x8xbf16>, vector<8x128xbf16>, vector<64x128xf32> -> vector<64x128xf32>
    %287 = arith.addf %280, %286 : vector<64x128xf32>
    %c2_206 = arith.constant 2 : index
    %c2_207 = arith.constant 2 : index
    %c0_208 = arith.constant 0 : index
    %288 = vector.load %arg12[%c2_206, %c2_207, %c0_208] : memref<10x10x8xf32, #tpu.memory_space<vmem>>, vector<8x8x8xf32>
    %289 = vector.shape_cast %288 : vector<8x8x8xf32> to vector<64x8xf32>
    %c15_209 = arith.constant 15 : index
    %c0_210 = arith.constant 0 : index
    %c0_211 = arith.constant 0 : index
    %290 = vector.load %arg6[%c15_209, %c0_210, %c0_211] : memref<16x8x128xbf16, #tpu.memory_space<vmem>>, vector<1x8x128xbf16>
    %291 = vector.shape_cast %290 : vector<1x8x128xbf16> to vector<8x128xbf16>
    %292 = arith.truncf %289 : vector<64x8xf32> to vector<64x8xbf16>
    %cst_212 = arith.constant dense<0.000000e+00> : vector<64x128xf32>
    %293 = tpu.matmul %292, %291, %cst_212 {dimension_numbers = #tpu.dot_dimension_numbers<[1], [0], [0], [1], [0, 0, 1, 1], [], []>} : vector<64x8xbf16>, vector<8x128xbf16>, vector<64x128xf32> -> vector<64x128xf32>
    %294 = arith.addf %287, %293 : vector<64x128xf32>
    %c0_213 = arith.constant 0 : index
    %c0_214 = arith.constant 0 : index
    %c0_215 = arith.constant 0 : index
    %295 = vector.load %arg10[%c0_213, %c0_214, %c0_215] : memref<1x64x128xf32, #tpu.memory_space<vmem>>, vector<1x64x128xf32>
    %296 = vector.shape_cast %295 : vector<1x64x128xf32> to vector<64x128xf32>
    %297 = vector.shape_cast %294 : vector<64x128xf32> to vector<1x64x128xf32>
    tpu.vector_store %arg10[%c0_213, %c0_214, %c0_215], %297 {strides = array<i32>} : memref<1x64x128xf32, #tpu.memory_space<vmem>>, vector<1x64x128xf32>,
    %cst_216 = arith.constant dense<0.000000e+00> : vector<128xf32>
    %298 = vector.multi_reduction <add>, %294, %cst_216 [0] : vector<64x128xf32> to vector<128xf32>
    %299 = vector.shape_cast %298 : vector<128xf32> to vector<1x128xf32>
    %300 = arith.addf %261, %299 : vector<1x128xf32>
    %301 = arith.mulf %294, %294 : vector<64x128xf32>
    %cst_217 = arith.constant dense<0.000000e+00> : vector<128xf32>
    %302 = vector.multi_reduction <add>, %301, %cst_217 [0] : vector<64x128xf32> to vector<128xf32>
    %303 = vector.shape_cast %302 : vector<128xf32> to vector<1x128xf32>
    %304 = arith.addf %265, %303 : vector<1x128xf32>
    %cst_218 = arith.constant 0.000000e+00 : f32
    %305 = vector.broadcast %cst_218 : f32 to vector<8x128xf32>
    %c0_219 = arith.constant 0 : index
    %c0_220 = arith.constant 0 : index
    %c0_221 = arith.constant 0 : index
    %306 = vector.load %arg11[%c0_219, %c0_220, %c0_221] : memref<1x8x128xf32, #tpu.memory_space<vmem>>, vector<1x8x128xf32>
    %307 = vector.shape_cast %306 : vector<1x8x128xf32> to vector<8x128xf32>
    %308 = vector.shape_cast %305 : vector<8x128xf32> to vector<1x8x128xf32>
    tpu.vector_store %arg11[%c0_219, %c0_220, %c0_221], %308 {strides = array<i32>} : memref<1x8x128xf32, #tpu.memory_space<vmem>>, vector<1x8x128xf32>,
    %c0_222 = arith.constant 0 : index
    %c0_223 = arith.constant 0 : index
    %c0_224 = arith.constant 0 : index
    %309 = vector.load %arg11[%c0_222, %c0_223, %c0_224] : memref<1x8x128xf32, #tpu.memory_space<vmem>>, vector<1x1x128xf32>
    %310 = vector.shape_cast %309 : vector<1x1x128xf32> to vector<1x128xf32>
    %311 = vector.shape_cast %300 : vector<1x128xf32> to vector<1x1x128xf32>
    tpu.vector_store %arg11[%c0_222, %c0_223, %c0_224], %311 {strides = array<i32>} : memref<1x8x128xf32, #tpu.memory_space<vmem>>, vector<1x1x128xf32>,
    %c0_225 = arith.constant 0 : index
    %c1_226 = arith.constant 1 : index
    %c0_227 = arith.constant 0 : index
    %312 = vector.load %arg11[%c0_225, %c1_226, %c0_227] : memref<1x8x128xf32, #tpu.memory_space<vmem>>, vector<1x1x128xf32>
    %313 = vector.shape_cast %312 : vector<1x1x128xf32> to vector<1x128xf32>
    %314 = vector.shape_cast %304 : vector<1x128xf32> to vector<1x1x128xf32>
    tpu.vector_store %arg11[%c0_225, %c1_226, %c0_227], %314 {strides = array<i32>} : memref<1x8x128xf32, #tpu.memory_space<vmem>>, vector<1x1x128xf32>,
    return
  }
  func.func @transform_0(%arg0: i32) -> (i32, i32, i32, i32) {
    %c0_i32 = arith.constant 0 : i32
    %c0_i32_0 = arith.constant 0 : i32
    %c0_i32_1 = arith.constant 0 : i32
    %c0_i32_2 = arith.constant 0 : i32
    return %arg0, %c0_i32, %c0_i32_0, %c0_i32_1 : i32, i32, i32, i32
  }
  func.func @transform_1(%arg0: i32) -> (i32, i32, i32, i32) {
    %c0_i32 = arith.constant 0 : i32
    %c0_i32_0 = arith.constant 0 : i32
    %c0_i32_1 = arith.constant 0 : i32
    %c0_i32_2 = arith.constant 0 : i32
    return %arg0, %c0_i32, %c0_i32_0, %c0_i32_1 : i32, i32, i32, i32
  }
  func.func @transform_2(%arg0: i32) -> (i32, i32, i32, i32) {
    %c0_i32 = arith.constant 0 : i32
    %c0_i32_0 = arith.constant 0 : i32
    %c0_i32_1 = arith.constant 0 : i32
    %c0_i32_2 = arith.constant 0 : i32
    return %arg0, %c0_i32, %c0_i32_0, %c0_i32_1 : i32, i32, i32, i32
  }
  func.func @transform_3(%arg0: i32) -> (i32, i32, i32, i32) {
    %c0_i32 = arith.constant 0 : i32
    %c0_i32_0 = arith.constant 0 : i32
    %c0_i32_1 = arith.constant 0 : i32
    %c0_i32_2 = arith.constant 0 : i32
    return %arg0, %c0_i32, %c0_i32_0, %c0_i32_1 : i32, i32, i32, i32
  }
  func.func @transform_4(%arg0: i32) -> (i32, i32, i32) {
    %c0_i32 = arith.constant 0 : i32
    %c0_i32_0 = arith.constant 0 : i32
    %c0_i32_1 = arith.constant 0 : i32
    %c0_i32_2 = arith.constant 0 : i32
    return %c0_i32, %c0_i32_0, %c0_i32_1 : i32, i32, i32
  }
  func.func @transform_5(%arg0: i32) -> (i32, i32, i32) {
    %c0_i32 = arith.constant 0 : i32
    %c0_i32_0 = arith.constant 0 : i32
    %c0_i32_1 = arith.constant 0 : i32
    %c0_i32_2 = arith.constant 0 : i32
    return %c0_i32, %c0_i32_0, %c0_i32_1 : i32, i32, i32
  }
  func.func @transform_6(%arg0: i32) -> (i32, i32, i32) {
    %c0_i32 = arith.constant 0 : i32
    %c0_i32_0 = arith.constant 0 : i32
    %c0_i32_1 = arith.constant 0 : i32
    return %arg0, %c0_i32, %c0_i32_0 : i32, i32, i32
  }
  func.func @transform_7(%arg0: i32) -> (i32, i32, i32) {
    %c0_i32 = arith.constant 0 : i32
    %c0_i32_0 = arith.constant 0 : i32
    %c0_i32_1 = arith.constant 0 : i32
    return %arg0, %c0_i32, %c0_i32_0 : i32, i32, i32
  }
  func.func @transform_8(%arg0: i32) -> (i32, i32, i32) {
    %c0_i32 = arith.constant 0 : i32
    %c0_i32_0 = arith.constant 0 : i32
    %c0_i32_1 = arith.constant 0 : i32
    return %arg0, %c0_i32, %c0_i32_0 : i32, i32, i32
  }
  func.func @transform_9(%arg0: i32) -> (i32, i32, i32) {
    %c0_i32 = arith.constant 0 : i32
    %c0_i32_0 = arith.constant 0 : i32
    %c0_i32_1 = arith.constant 0 : i32
    return %arg0, %c0_i32, %c0_i32_0 : i32, i32, i32
  }
  func.func @transform_10(%arg0: i32) -> (i32, i32, i32) {
    %c0_i32 = arith.constant 0 : i32
    %c0_i32_0 = arith.constant 0 : i32
    %c0_i32_1 = arith.constant 0 : i32
    return %arg0, %c0_i32, %c0_i32_0 : i32, i32, i32
  }
}

module attributes {stable_mosaic.version = 11 : i64} {
  func.func @_bn_concat_kernel(%arg0: i32, %arg1: memref<1x16x16x4xf32, #tpu.memory_space<vmem>>, %arg2: memref<1x16x16x4xf32, #tpu.memory_space<vmem>>, %arg3: memref<1x1x4xf32, #tpu.memory_space<vmem>>, %arg4: memref<1x1x4xf32, #tpu.memory_space<vmem>>, %arg5: memref<1x16x16x8xf32, #tpu.memory_space<vmem>>) attributes {dimension_semantics = [#tpu.dimension_semantics<parallel>], iteration_bounds = array<i64: 2>, scalar_prefetch = 0 : i64, scratch_operands = 0 : i64, tpu.core_type = #tpu.core_type<tc>, window_params = [{transform_indices = @transform_0, window_bounds = array<i64: 1, 16, 16, 4>}, {transform_indices = @transform_1, window_bounds = array<i64: 1, 16, 16, 4>}, {pipeline_mode = #tpu.pipeline_mode<synchronous>, transform_indices = @transform_2, window_bounds = array<i64: 1, 1, 4>}, {pipeline_mode = #tpu.pipeline_mode<synchronous>, transform_indices = @transform_3, window_bounds = array<i64: 1, 1, 4>}, {transform_indices = @transform_4, window_bounds = array<i64: 1, 16, 16, 8>}]} {
    %c0 = arith.constant 0 : index
    %c0_0 = arith.constant 0 : index
    %c0_1 = arith.constant 0 : index
    %c0_2 = arith.constant 0 : index
    %0 = vector.load %arg1[%c0, %c0_0, %c0_1, %c0_2] : memref<1x16x16x4xf32, #tpu.memory_space<vmem>>, vector<1x16x16x4xf32>
    %1 = vector.shape_cast %0 : vector<1x16x16x4xf32> to vector<16x16x4xf32>
    %c0_3 = arith.constant 0 : index
    %c0_4 = arith.constant 0 : index
    %c0_5 = arith.constant 0 : index
    %c0_6 = arith.constant 0 : index
    %2 = vector.load %arg5[%c0_3, %c0_4, %c0_5, %c0_6] : memref<1x16x16x8xf32, #tpu.memory_space<vmem>>, vector<1x16x16x4xf32>
    %3 = vector.shape_cast %2 : vector<1x16x16x4xf32> to vector<16x16x4xf32>
    %4 = vector.shape_cast %1 : vector<16x16x4xf32> to vector<1x16x16x4xf32>
    tpu.vector_store %arg5[%c0_3, %c0_4, %c0_5, %c0_6], %4 {strides = array<i32>} : memref<1x16x16x8xf32, #tpu.memory_space<vmem>>, vector<1x16x16x4xf32>,
    %c0_7 = arith.constant 0 : index
    %c0_8 = arith.constant 0 : index
    %c0_9 = arith.constant 0 : index
    %c0_10 = arith.constant 0 : index
    %5 = vector.load %arg2[%c0_7, %c0_8, %c0_9, %c0_10] : memref<1x16x16x4xf32, #tpu.memory_space<vmem>>, vector<1x16x16x4xf32>
    %6 = vector.shape_cast %5 : vector<1x16x16x4xf32> to vector<16x16x4xf32>
    %c0_11 = arith.constant 0 : index
    %c0_12 = arith.constant 0 : index
    %c0_13 = arith.constant 0 : index
    %7 = vector.load %arg3[%c0_11, %c0_12, %c0_13] : memref<1x1x4xf32, #tpu.memory_space<vmem>>, vector<1x1x4xf32>
    %8 = vector.broadcast %7 : vector<1x1x4xf32> to vector<16x16x4xf32>
    %9 = arith.mulf %6, %8 : vector<16x16x4xf32>
    %c0_14 = arith.constant 0 : index
    %c0_15 = arith.constant 0 : index
    %c0_16 = arith.constant 0 : index
    %10 = vector.load %arg4[%c0_14, %c0_15, %c0_16] : memref<1x1x4xf32, #tpu.memory_space<vmem>>, vector<1x1x4xf32>
    %11 = vector.broadcast %10 : vector<1x1x4xf32> to vector<16x16x4xf32>
    %12 = arith.addf %9, %11 : vector<16x16x4xf32>
    %c0_17 = arith.constant 0 : index
    %c0_18 = arith.constant 0 : index
    %c0_19 = arith.constant 0 : index
    %c4 = arith.constant 4 : index
    %13 = vector.load %arg5[%c0_17, %c0_18, %c0_19, %c4] : memref<1x16x16x8xf32, #tpu.memory_space<vmem>>, vector<1x16x16x4xf32>
    %14 = vector.shape_cast %13 : vector<1x16x16x4xf32> to vector<16x16x4xf32>
    %15 = vector.shape_cast %12 : vector<16x16x4xf32> to vector<1x16x16x4xf32>
    tpu.vector_store %arg5[%c0_17, %c0_18, %c0_19, %c4], %15 {strides = array<i32>} : memref<1x16x16x8xf32, #tpu.memory_space<vmem>>, vector<1x16x16x4xf32>,
    return
  }
  func.func @transform_0(%arg0: i32) -> (i32, i32, i32, i32) {
    %c0_i32 = arith.constant 0 : i32
    %c0_i32_0 = arith.constant 0 : i32
    %c0_i32_1 = arith.constant 0 : i32
    %c0_i32_2 = arith.constant 0 : i32
    return %arg0, %c0_i32, %c0_i32_0, %c0_i32_1 : i32, i32, i32, i32
  }
  func.func @transform_1(%arg0: i32) -> (i32, i32, i32, i32) {
    %c0_i32 = arith.constant 0 : i32
    %c0_i32_0 = arith.constant 0 : i32
    %c0_i32_1 = arith.constant 0 : i32
    %c0_i32_2 = arith.constant 0 : i32
    return %arg0, %c0_i32, %c0_i32_0, %c0_i32_1 : i32, i32, i32, i32
  }
  func.func @transform_2(%arg0: i32) -> (i32, i32, i32) {
    %c0_i32 = arith.constant 0 : i32
    %c0_i32_0 = arith.constant 0 : i32
    %c0_i32_1 = arith.constant 0 : i32
    %c0_i32_2 = arith.constant 0 : i32
    return %c0_i32, %c0_i32_0, %c0_i32_1 : i32, i32, i32
  }
  func.func @transform_3(%arg0: i32) -> (i32, i32, i32) {
    %c0_i32 = arith.constant 0 : i32
    %c0_i32_0 = arith.constant 0 : i32
    %c0_i32_1 = arith.constant 0 : i32
    %c0_i32_2 = arith.constant 0 : i32
    return %c0_i32, %c0_i32_0, %c0_i32_1 : i32, i32, i32
  }
  func.func @transform_4(%arg0: i32) -> (i32, i32, i32, i32) {
    %c0_i32 = arith.constant 0 : i32
    %c0_i32_0 = arith.constant 0 : i32
    %c0_i32_1 = arith.constant 0 : i32
    %c0_i32_2 = arith.constant 0 : i32
    return %arg0, %c0_i32, %c0_i32_0, %c0_i32_1 : i32, i32, i32, i32
  }
}

</mosaic_0001>

<llo_original>
// kernel: unet_block_forward.3
$region0: #{unet_block_forward.3}
  #allocation0 [shape = 'u32[]', space=smem, size = 0x4, offset = 0x4, fixed_abs, tag = 'smem constant byte address 0x4 - core index']
  #allocation1 [shape = 'u32[144,128]{1,0:T(1,128)}', space=vmem, size = 0x12000, scoped, tag = 'internal scratch']
  %s0 = inlined_call_operand.vmem [shape: f32[2,16,16,4], index: 0, kind: input, shape index: {}]
  %s1 = inlined_call_operand.vmem [shape: f32[2,16,16,4], index: 1, kind: input, shape index: {}]
  %s2 = inlined_call_operand.vmem [shape: f32[1,1,4], index: 2, kind: input, shape index: {}]
  %s3 = inlined_call_operand.vmem [shape: f32[1,1,4], index: 3, kind: input, shape index: {}]
  %s4 = inlined_call_operand.vmem [shape: f32[2,16,16,8], index: 4, kind: output, shape index: {}]
  %s5 = sld [smem:[#allocation0]]
  $region49: #{unet_block_forward.3} parent=0
    _
  %s7 = ssub.s32 1, %s5
  %s8 = scalar_select 0, %s7, %s5
  loop: start=0, step=1, limit=4
  $region2: #{unet_block_forward.3} parent=0 // loop_pre_header
    _
  $region3: #{unet_block_forward.3} parent=0 // loop_header
    %s10 = sphi 0, %s14
    %p11 = scmp.ge.s32.totalorder %s10, 4
    %s20 = sphi 0, %s22
    %s23 = sphi 0, %s20
    %s24 = sphi 0, %s23
    %s40 = sphi 0, %s24
    %s46 = sphi 0, %s48
    %s49 = sphi 0, %s46
    %s50 = sphi 0, %s49
    %s66 = sphi 0, %s50
    %s70 = sphi 0, %s70
    %s72 = sphi 0, %s70
    %s73 = sphi 0, %s72
    %s87 = sphi 0, %s73
    %s91 = sphi 0, %s91
    %s93 = sphi 0, %s91
    %s94 = sphi 0, %s93
    %s108 = sphi 0, %s94
    %s114 = sphi 0, %s116
    %s117 = sphi 0, %s114
    %s118 = sphi 0, %s117
    %s134 = sphi 0, %s118
  $region4: #{unet_block_forward.3} parent=0 // loop_header_branch
    %13 = sbr.rel (%p11) target = $region8
  $region5: #{unet_block_forward.3} parent=0 // loop_body
    %s15 = ssub.s32 %s10, 1
    %s16 = ssub.s32 %s10, 2
    %s17 = sadd.s32 %s10, 1
    %s18 = ssub.s32 %s10, %s17
    %p19 = scmp.eq.s32.totalorder %s18, 0
    %s21 = sadd.s32 %s20, 1
    %s22 = scalar_select %p19, %s20, %s21
    %p25 = pneg %p19
    %p26 = scmp.eq.s32.totalorder %s10, 1
    %p27 = por %p25, %p26
    %p28 = scmp.ne.s32.totalorder %s20, %s23
    %p29 = scmp.eq.s32.totalorder %s10, 0
    %p30 = por %p28, %p29
    %p31 = scmp.ne.s32.totalorder %s20, %s23
    %p32 = scmp.eq.s32.totalorder %s15, 1
    %p33 = por %p31, %p32
    %p34 = scmp.ne.s32.totalorder %s23, %s24
    %p35 = scmp.eq.s32.totalorder %s15, 0
    %p36 = por %p34, %p35
    %p37 = scmp.ne.s32.totalorder %s23, %s24
    %p38 = scmp.eq.s32.totalorder %s16, 1
    %p39 = por %p37, %p38
    %p41 = scmp.ne.s32.totalorder %s24, %s40
    %p42 = scmp.eq.s32.totalorder %s16, 0
    %p43 = por %p41, %p42
    %s44 = ssub.s32 %s10, %s17
    %p45 = scmp.eq.s32.totalorder %s44, 0
    %s47 = sadd.s32 %s46, 1
    %s48 = scalar_select %p45, %s46, %s47
    %p51 = pneg %p45
    %p52 = scmp.eq.s32.totalorder %s10, 1
    %p53 = por %p51, %p52
    %p54 = scmp.ne.s32.totalorder %s46, %s49
    %p55 = scmp.eq.s32.totalorder %s10, 0
    %p56 = por %p54, %p55
    %p57 = scmp.ne.s32.totalorder %s46, %s49
    %p58 = scmp.eq.s32.totalorder %s15, 1
    %p59 = por %p57, %p58
    %p60 = scmp.ne.s32.totalorder %s49, %s50
    %p61 = scmp.eq.s32.totalorder %s15, 0
    %p62 = por %p60, %p61
    %p63 = scmp.ne.s32.totalorder %s49, %s50
    %p64 = scmp.eq.s32.totalorder %s16, 1
    %p65 = por %p63, %p64
    %p67 = scmp.ne.s32.totalorder %s50, %s66
    %p68 = scmp.eq.s32.totalorder %s16, 0
    %p69 = por %p67, %p68
    %s71 = sadd.s32 %s70, 1
    %p74 = scmp.eq.s32.totalorder %s10, 1
    %p75 = scmp.ne.s32.totalorder %s70, %s72
    %p76 = scmp.eq.s32.totalorder %s10, 0
    %p77 = por %p75, %p76
    %p78 = scmp.ne.s32.totalorder %s70, %s72
    %p79 = scmp.eq.s32.totalorder %s15, 1
    %p80 = por %p78, %p79
    %p81 = scmp.ne.s32.totalorder %s72, %s73
    %p82 = scmp.eq.s32.totalorder %s15, 0
    %p83 = por %p81, %p82
    %p84 = scmp.ne.s32.totalorder %s72, %s73
    %p85 = scmp.eq.s32.totalorder %s16, 1
    %p86 = por %p84, %p85
    %p88 = scmp.ne.s32.totalorder %s73, %s87
    %p89 = scmp.eq.s32.totalorder %s16, 0
    %p90 = por %p88, %p89
    %s92 = sadd.s32 %s91, 1
    %p95 = scmp.eq.s32.totalorder %s10, 1
    %p96 = scmp.ne.s32.totalorder %s91, %s93
    %p97 = scmp.eq.s32.totalorder %s10, 0
    %p98 = por %p96, %p97
    %p99 = scmp.ne.s32.totalorder %s91, %s93
    %p100 = scmp.eq.s32.totalorder %s15, 1
    %p101 = por %p99, %p100
    %p102 = scmp.ne.s32.totalorder %s93, %s94
    %p103 = scmp.eq.s32.totalorder %s15, 0
    %p104 = por %p102, %p103
    %p105 = scmp.ne.s32.totalorder %s93, %s94
    %p106 = scmp.eq.s32.totalorder %s16, 1
    %p107 = por %p105, %p106
    %p109 = scmp.ne.s32.totalorder %s94, %s108
    %p110 = scmp.eq.s32.totalorder %s16, 0
    %p111 = por %p109, %p110
    %s112 = ssub.s32 %s10, %s17
    %p113 = scmp.eq.s32.totalorder %s112, 0
    %s115 = sadd.s32 %s114, 1
    %s116 = scalar_select %p113, %s114, %s115
    %p119 = pneg %p113
    %p120 = scmp.eq.s32.totalorder %s10, 1
    %p121 = por %p119, %p120
    %p122 = scmp.ne.s32.totalorder %s114, %s117
    %p123 = scmp.eq.s32.totalorder %s10, 0
    %p124 = por %p122, %p123
    %p125 = scmp.ne.s32.totalorder %s114, %s117
    %p126 = scmp.eq.s32.totalorder %s15, 1
    %p127 = por %p125, %p126
    %p128 = scmp.ne.s32.totalorder %s117, %s118
    %p129 = scmp.eq.s32.totalorder %s15, 0
    %p130 = por %p128, %p129
    %p131 = scmp.ne.s32.totalorder %s117, %s118
    %p132 = scmp.eq.s32.totalorder %s16, 1
    %p133 = por %p131, %p132
    %p135 = scmp.ne.s32.totalorder %s118, %s134
    %p136 = scmp.eq.s32.totalorder %s16, 0
    %p137 = por %p135, %p136
    %p138 = scmp.le.s32.totalorder 1, %s10
    %p139 = scmp.lt.s32.totalorder %s10, 3
    %p140 = pnand %p138, %p139
    %p141 = pneg %p140
    // Predicated region
    $region9: #{unet_block_forward.3} parent=5 // pred_check
      _
    $region10: #{unet_block_forward.3} parent=5 // pred_check_branch
      %143 = sbr.rel (%p140) target = $region12
    $region11: #{unet_block_forward.3} parent=5 // pred_region
      %s144 = ssub.s32 %s10, 1
      // Predicated region
      $region13: #{unet_block_forward.3} parent=11 // pred_check
        %p145 = pneg %p83
      $region14: #{unet_block_forward.3} parent=11 // pred_check_branch
        %147 = sbr.rel (%p145) target = $region16
      $region15: #{unet_block_forward.3} parent=11 // pred_region
        _
      $region16: #{unet_block_forward.3} parent=11 // pred_fallthru
        _
      // Predicated region
      $region17: #{unet_block_forward.3} parent=11 // pred_check
        %p148 = pneg %p104
      $region18: #{unet_block_forward.3} parent=11 // pred_check_branch
        %150 = sbr.rel (%p148) target = $region20
      $region19: #{unet_block_forward.3} parent=11 // pred_region
        _
      $region20: #{unet_block_forward.3} parent=11 // pred_fallthru
        _
    $region12: #{unet_block_forward.3} parent=5 // pred_fallthru
      _
    %p151 = scmp.lt.s32.totalorder %s10, 2
    // Predicated region
    $region21: #{unet_block_forward.3} parent=5 // pred_check
      %p152 = pneg %p151
    $region22: #{unet_block_forward.3} parent=5 // pred_check_branch
      %154 = sbr.rel (%p152) target = $region24
    $region23: #{unet_block_forward.3} parent=5 // pred_region
      // Predicated region
      $region25: #{unet_block_forward.3} parent=23 // pred_check
        %p155 = pneg %p30
      $region26: #{unet_block_forward.3} parent=23 // pred_check_branch
        %157 = sbr.rel (%p155) target = $region28
      $region27: #{unet_block_forward.3} parent=23 // pred_region
        %p158 = scmp.lt.s32.totalorder %s10, 1
        %s159 = scalar_select %p158, %s10, 1
        %s160 = smul.addr %s159, 32
        %s161 = smul.addr %s160, 8
        %s162 = scalar_lea.vmem %s0, %s161
      $region28: #{unet_block_forward.3} parent=23 // pred_fallthru
        _
      // Predicated region
      $region29: #{unet_block_forward.3} parent=23 // pred_check
        %p163 = pneg %p56
      $region30: #{unet_block_forward.3} parent=23 // pred_check_branch
        %165 = sbr.rel (%p163) target = $region32
      $region31: #{unet_block_forward.3} parent=23 // pred_region
        %p166 = scmp.lt.s32.totalorder %s10, 1
        %s167 = scalar_select %p166, %s10, 1
        %s168 = smul.addr %s167, 32
        %s169 = smul.addr %s168, 8
        %s170 = scalar_lea.vmem %s1, %s169
      $region32: #{unet_block_forward.3} parent=23 // pred_fallthru
        _
    $region24: #{unet_block_forward.3} parent=5 // pred_fallthru
      _
    %p171 = scmp.le.s32.totalorder 1, %s10
    %p172 = scmp.lt.s32.totalorder %s10, 3
    %p173 = pnand %p171, %p172
    %p174 = pneg %p173
    // Predicated region
    $region33: #{unet_block_forward.3} parent=5 // pred_check
      _
    $region34: #{unet_block_forward.3} parent=5 // pred_check_branch
      %176 = sbr.rel (%p173) target = $region36
    $region35: #{unet_block_forward.3} parent=5 // pred_region
      %s177 = ssub.s32 %s10, 1
      %p178 = scmp.lt.s32.totalorder %s15, 1
      %s179 = scalar_select %p178, %s15, 1
      %s180 = smul.addr %s179, 32
      %s181 = smul.addr %s180, 8
      %s182 = scalar_lea.vmem %s0, %s181
      %p183 = pneg %p36
      %p184 = pneg %p33
      %p185 = scmp.lt.s32.totalorder %s15, 1
      %s186 = scalar_select %p185, %s15, 1
      %s187 = smul.addr %s186, 32
      %s188 = smul.addr %s187, 8
      %s189 = scalar_lea.vmem %s1, %s188
      %p190 = pneg %p62
      %p191 = pneg %p59
      %p192 = pneg %p83
      %p193 = pneg %p80
      %p194 = pneg %p104
      %p195 = pneg %p101
      %p196 = pneg %p130
      %p197 = pneg %p127
      %p198 = scmp.lt.s32.totalorder %s15, 1
      %s199 = scalar_select %p198, %s15, 1
      %s200 = smul.addr %s199, 32
      %s201 = smul.addr %s200, 8
      %s202 = scalar_lea.vmem %s4, %s201
      %p203 = scmp.lt.s32.totalorder %s15, 1
      %s204 = scalar_select %p203, %s15, 1
      %s205 = smul.addr %s204, 32
      %s206 = smul.addr %s205, 8
      %s207 = scalar_lea.vmem %s0, %s206
      %p208 = scmp.lt.s32.totalorder %s15, 1
      %s209 = scalar_select %p208, %s15, 1
      %s210 = smul.addr %s209, 32
      %s211 = smul.addr %s210, 8
      %s212 = scalar_lea.vmem %s1, %s211
      %p213 = scmp.lt.s32.totalorder %s15, 1
      %s214 = scalar_select %p213, %s15, 1
      %s215 = smul.addr %s214, 32
      %s216 = smul.addr %s215, 8
      %s217 = scalar_lea.vmem %s4, %s216
      %v218 = vld [vmem:[%s207] sm:$0xff]
      %v219 = vld [vmem:[%s207 + $0x8] sm:$0xff]
      %v220 = vld [vmem:[%s207 + $0x10] sm:$0xff]
      %v221 = vld [vmem:[%s207 + $0x18] sm:$0xff]
      %v222 = vld [vmem:[%s207 + $0x20] sm:$0xff]
      %v223 = vld [vmem:[%s207 + $0x28] sm:$0xff]
      %v224 = vld [vmem:[%s207 + $0x30] sm:$0xff]
      %v225 = vld [vmem:[%s207 + $0x38] sm:$0xff]
      %v226 = vld [vmem:[%s207 + $0x40] sm:$0xff]
      %v227 = vld [vmem:[%s207 + $0x48] sm:$0xff]
      %v228 = vld [vmem:[%s207 + $0x50] sm:$0xff]
      %v229 = vld [vmem:[%s207 + $0x58] sm:$0xff]
      %v230 = vld [vmem:[%s207 + $0x60] sm:$0xff]
      %v231 = vld [vmem:[%s207 + $0x68] sm:$0xff]
      %v232 = vld [vmem:[%s207 + $0x70] sm:$0xff]
      %v233 = vld [vmem:[%s207 + $0x78] sm:$0xff]
      %v234 = vld [vmem:[%s207 + $0x80] sm:$0xff]
      %v235 = vld [vmem:[%s207 + $0x88] sm:$0xff]
      %v236 = vld [vmem:[%s207 + $0x90] sm:$0xff]
      %v237 = vld [vmem:[%s207 + $0x98] sm:$0xff]
      %v238 = vld [vmem:[%s207 + $0xa0] sm:$0xff]
      %v239 = vld [vmem:[%s207 + $0xa8] sm:$0xff]
      %v240 = vld [vmem:[%s207 + $0xb0] sm:$0xff]
      %v241 = vld [vmem:[%s207 + $0xb8] sm:$0xff]
      %v242 = vld [vmem:[%s207 + $0xc0] sm:$0xff]
      %v243 = vld [vmem:[%s207 + $0xc8] sm:$0xff]
      %v244 = vld [vmem:[%s207 + $0xd0] sm:$0xff]
      %v245 = vld [vmem:[%s207 + $0xd8] sm:$0xff]
      %v246 = vld [vmem:[%s207 + $0xe0] sm:$0xff]
      %v247 = vld [vmem:[%s207 + $0xe8] sm:$0xff]
      %v248 = vld [vmem:[%s207 + $0xf0] sm:$0xff]
      %v249 = vld [vmem:[%s207 + $0xf8] sm:$0xff]
      %vm250 = vcmask 31744
      %251 = vst.msk [vmem:[%s217] sm:$0xff] %vm250, %v218
      %252 = vst.msk [vmem:[%s217 + $0x8] sm:$0xff] %vm250, %v219
      %253 = vst.msk [vmem:[%s217 + $0x10] sm:$0xff] %vm250, %v220
      %254 = vst.msk [vmem:[%s217 + $0x18] sm:$0xff] %vm250, %v221
      %255 = vst.msk [vmem:[%s217 + $0x20] sm:$0xff] %vm250, %v222
      %256 = vst.msk [vmem:[%s217 + $0x28] sm:$0xff] %vm250, %v223
      %257 = vst.msk [vmem:[%s217 + $0x30] sm:$0xff] %vm250, %v224
      %258 = vst.msk [vmem:[%s217 + $0x38] sm:$0xff] %vm250, %v225
      %259 = vst.msk [vmem:[%s217 + $0x40] sm:$0xff] %vm250, %v226
      %260 = vst.msk [vmem:[%s217 + $0x48] sm:$0xff] %vm250, %v227
      %261 = vst.msk [vmem:[%s217 + $0x50] sm:$0xff] %vm250, %v228
      %262 = vst.msk [vmem:[%s217 + $0x58] sm:$0xff] %vm250, %v229
      %263 = vst.msk [vmem:[%s217 + $0x60] sm:$0xff] %vm250, %v230
      %264 = vst.msk [vmem:[%s217 + $0x68] sm:$0xff] %vm250, %v231
      %265 = vst.msk [vmem:[%s217 + $0x70] sm:$0xff] %vm250, %v232
      %266 = vst.msk [vmem:[%s217 + $0x78] sm:$0xff] %vm250, %v233
      %267 = vst.msk [vmem:[%s217 + $0x80] sm:$0xff] %vm250, %v234
      %268 = vst.msk [vmem:[%s217 + $0x88] sm:$0xff] %vm250, %v235
      %269 = vst.msk [vmem:[%s217 + $0x90] sm:$0xff] %vm250, %v236
      %270 = vst.msk [vmem:[%s217 + $0x98] sm:$0xff] %vm250, %v237
      %271 = vst.msk [vmem:[%s217 + $0xa0] sm:$0xff] %vm250, %v238
      %272 = vst.msk [vmem:[%s217 + $0xa8] sm:$0xff] %vm250, %v239
      %273 = vst.msk [vmem:[%s217 + $0xb0] sm:$0xff] %vm250, %v240
      %274 = vst.msk [vmem:[%s217 + $0xb8] sm:$0xff] %vm250, %v241
      %275 = vst.msk [vmem:[%s217 + $0xc0] sm:$0xff] %vm250, %v242
      %276 = vst.msk [vmem:[%s217 + $0xc8] sm:$0xff] %vm250, %v243
      %277 = vst.msk [vmem:[%s217 + $0xd0] sm:$0xff] %vm250, %v244
      %278 = vst.msk [vmem:[%s217 + $0xd8] sm:$0xff] %vm250, %v245
      %279 = vst.msk [vmem:[%s217 + $0xe0] sm:$0xff] %vm250, %v246
      %280 = vst.msk [vmem:[%s217 + $0xe8] sm:$0xff] %vm250, %v247
      %281 = vst.msk [vmem:[%s217 + $0xf0] sm:$0xff] %vm250, %v248
      %282 = vst.msk [vmem:[%s217 + $0xf8] sm:$0xff] %vm250, %v249
      %v283 = vld [vmem:[%s212] sm:$0xff]
      %v284 = vld [vmem:[%s212 + $0x8] sm:$0xff]
      %v285 = vld [vmem:[%s212 + $0x10] sm:$0xff]
      %v286 = vld [vmem:[%s212 + $0x18] sm:$0xff]
      %v287 = vld [vmem:[%s212 + $0x20] sm:$0xff]
      %v288 = vld [vmem:[%s212 + $0x28] sm:$0xff]
      %v289 = vld [vmem:[%s212 + $0x30] sm:$0xff]
      %v290 = vld [vmem:[%s212 + $0x38] sm:$0xff]
      %v291 = vld [vmem:[%s212 + $0x40] sm:$0xff]
      %v292 = vld [vmem:[%s212 + $0x48] sm:$0xff]
      %v293 = vld [vmem:[%s212 + $0x50] sm:$0xff]
      %v294 = vld [vmem:[%s212 + $0x58] sm:$0xff]
      %v295 = vld [vmem:[%s212 + $0x60] sm:$0xff]
      %v296 = vld [vmem:[%s212 + $0x68] sm:$0xff]
      %v297 = vld [vmem:[%s212 + $0x70] sm:$0xff]
      %v298 = vld [vmem:[%s212 + $0x78] sm:$0xff]
      %v299 = vld [vmem:[%s212 + $0x80] sm:$0xff]
      %v300 = vld [vmem:[%s212 + $0x88] sm:$0xff]
      %v301 = vld [vmem:[%s212 + $0x90] sm:$0xff]
      %v302 = vld [vmem:[%s212 + $0x98] sm:$0xff]
      %v303 = vld [vmem:[%s212 + $0xa0] sm:$0xff]
      %v304 = vld [vmem:[%s212 + $0xa8] sm:$0xff]
      %v305 = vld [vmem:[%s212 + $0xb0] sm:$0xff]
      %v306 = vld [vmem:[%s212 + $0xb8] sm:$0xff]
      %v307 = vld [vmem:[%s212 + $0xc0] sm:$0xff]
      %v308 = vld [vmem:[%s212 + $0xc8] sm:$0xff]
      %v309 = vld [vmem:[%s212 + $0xd0] sm:$0xff]
      %v310 = vld [vmem:[%s212 + $0xd8] sm:$0xff]
      %v311 = vld [vmem:[%s212 + $0xe0] sm:$0xff]
      %v312 = vld [vmem:[%s212 + $0xe8] sm:$0xff]
      %v313 = vld [vmem:[%s212 + $0xf0] sm:$0xff]
      %v314 = vld [vmem:[%s212 + $0xf8] sm:$0xff]
      %v315 = vld [vmem:[%s2] sm:$0x1]
      %v317 = vlaneseq
      %v318 = vshrl.u32 %v317, 7
      %v319 = vsub.s32 0, %v318
      %v320 = vrot.slane %v315, %v319
      %v322 = vmul.f32 %v283, %v320
      %v323 = vmul.f32 %v284, %v320
      %v324 = vmul.f32 %v285, %v320
      %v325 = vmul.f32 %v286, %v320
      %v326 = vmul.f32 %v287, %v320
      %v327 = vmul.f32 %v288, %v320
      %v328 = vmul.f32 %v289, %v320
      %v329 = vmul.f32 %v290, %v320
      %v330 = vmul.f32 %v291, %v320
      %v331 = vmul.f32 %v292, %v320
      %v332 = vmul.f32 %v293, %v320
      %v333 = vmul.f32 %v294, %v320
      %v334 = vmul.f32 %v295, %v320
      %v335 = vmul.f32 %v296, %v320
      %v336 = vmul.f32 %v297, %v320
      %v337 = vmul.f32 %v298, %v320
      %v338 = vmul.f32 %v299, %v320
      %v339 = vmul.f32 %v300, %v320
      %v340 = vmul.f32 %v301, %v320
      %v341 = vmul.f32 %v302, %v320
      %v342 = vmul.f32 %v303, %v320
      %v343 = vmul.f32 %v304, %v320
      %v344 = vmul.f32 %v305, %v320
      %v345 = vmul.f32 %v306, %v320
      %v346 = vmul.f32 %v307, %v320
      %v347 = vmul.f32 %v308, %v320
      %v348 = vmul.f32 %v309, %v320
      %v349 = vmul.f32 %v310, %v320
      %v350 = vmul.f32 %v311, %v320
      %v351 = vmul.f32 %v312, %v320
      %v352 = vmul.f32 %v313, %v320
      %v353 = vmul.f32 %v314, %v320
      %v354 = vld [vmem:[%s3] sm:$0x1]
      %v356 = vlaneseq
      %v357 = vshrl.u32 %v356, 7
      %v358 = vsub.s32 0, %v357
      %v359 = vrot.slane %v354, %v358
      %v361 = vadd.f32 %v322, %v359
      %v362 = vadd.f32 %v323, %v359
      %v363 = vadd.f32 %v324, %v359
      %v364 = vadd.f32 %v325, %v359
      %v365 = vadd.f32 %v326, %v359
      %v366 = vadd.f32 %v327, %v359
      %v367 = vadd.f32 %v328, %v359
      %v368 = vadd.f32 %v329, %v359
      %v369 = vadd.f32 %v330, %v359
      %v370 = vadd.f32 %v331, %v359
      %v371 = vadd.f32 %v332, %v359
      %v372 = vadd.f32 %v333, %v359
      %v373 = vadd.f32 %v334, %v359
      %v374 = vadd.f32 %v335, %v359
      %v375 = vadd.f32 %v336, %v359
      %v376 = vadd.f32 %v337, %v359
      %v377 = vadd.f32 %v338, %v359
      %v378 = vadd.f32 %v339, %v359
      %v379 = vadd.f32 %v340, %v359
      %v380 = vadd.f32 %v341, %v359
      %v381 = vadd.f32 %v342, %v359
      %v382 = vadd.f32 %v343, %v359
      %v383 = vadd.f32 %v344, %v359
      %v384 = vadd.f32 %v345, %v359
      %v385 = vadd.f32 %v346, %v359
      %v386 = vadd.f32 %v347, %v359
      %v387 = vadd.f32 %v348, %v359
      %v388 = vadd.f32 %v349, %v359
      %v389 = vadd.f32 %v350, %v359
      %v390 = vadd.f32 %v351, %v359
      %v391 = vadd.f32 %v352, %v359
      %v392 = vadd.f32 %v353, %v359
      %425 = vrot.lane.b32.xlu0 %v361, 4
      %v426 = vpop.permute.xlu0 %425
      %427 = vrot.lane.b32.xlu0 %v362, 4
      %v428 = vpop.permute.xlu0 %427
      %429 = vrot.lane.b32.xlu0 %v363, 4
      %v430 = vpop.permute.xlu0 %429
      %431 = vrot.lane.b32.xlu0 %v364, 4
      %v432 = vpop.permute.xlu0 %431
      %433 = vrot.lane.b32.xlu0 %v365, 4
      %v434 = vpop.permute.xlu0 %433
      %435 = vrot.lane.b32.xlu0 %v366, 4
      %v436 = vpop.permute.xlu0 %435
      %437 = vrot.lane.b32.xlu0 %v367, 4
      %v438 = vpop.permute.xlu0 %437
      %439 = vrot.lane.b32.xlu0 %v368, 4
      %v440 = vpop.permute.xlu0 %439
      %441 = vrot.lane.b32.xlu0 %v369, 4
      %v442 = vpop.permute.xlu0 %441
      %443 = vrot.lane.b32.xlu0 %v370, 4
      %v444 = vpop.permute.xlu0 %443
      %445 = vrot.lane.b32.xlu0 %v371, 4
      %v446 = vpop.permute.xlu0 %445
      %447 = vrot.lane.b32.xlu0 %v372, 4
      %v448 = vpop.permute.xlu0 %447
      %449 = vrot.lane.b32.xlu0 %v373, 4
      %v450 = vpop.permute.xlu0 %449
      %451 = vrot.lane.b32.xlu0 %v374, 4
      %v452 = vpop.permute.xlu0 %451
      %453 = vrot.lane.b32.xlu0 %v375, 4
      %v454 = vpop.permute.xlu0 %453
      %455 = vrot.lane.b32.xlu0 %v376, 4
      %v456 = vpop.permute.xlu0 %455
      %457 = vrot.lane.b32.xlu0 %v377, 4
      %v458 = vpop.permute.xlu0 %457
      %459 = vrot.lane.b32.xlu0 %v378, 4
      %v460 = vpop.permute.xlu0 %459
      %461 = vrot.lane.b32.xlu0 %v379, 4
      %v462 = vpop.permute.xlu0 %461
      %463 = vrot.lane.b32.xlu0 %v380, 4
      %v464 = vpop.permute.xlu0 %463
      %465 = vrot.lane.b32.xlu0 %v381, 4
      %v466 = vpop.permute.xlu0 %465
      %467 = vrot.lane.b32.xlu0 %v382, 4
      %v468 = vpop.permute.xlu0 %467
      %469 = vrot.lane.b32.xlu0 %v383, 4
      %v470 = vpop.permute.xlu0 %469
      %471 = vrot.lane.b32.xlu0 %v384, 4
      %v472 = vpop.permute.xlu0 %471
      %473 = vrot.lane.b32.xlu0 %v385, 4
      %v474 = vpop.permute.xlu0 %473
      %475 = vrot.lane.b32.xlu0 %v386, 4
      %v476 = vpop.permute.xlu0 %475
      %477 = vrot.lane.b32.xlu0 %v387, 4
      %v478 = vpop.permute.xlu0 %477
      %479 = vrot.lane.b32.xlu0 %v388, 4
      %v480 = vpop.permute.xlu0 %479
      %481 = vrot.lane.b32.xlu0 %v389, 4
      %v482 = vpop.permute.xlu0 %481
      %483 = vrot.lane.b32.xlu0 %v390, 4
      %v484 = vpop.permute.xlu0 %483
      %485 = vrot.lane.b32.xlu0 %v391, 4
      %v486 = vpop.permute.xlu0 %485
      %487 = vrot.lane.b32.xlu0 %v392, 4
      %v488 = vpop.permute.xlu0 %487
      %vm521 = vcmask 64544
      %522 = vst.msk [vmem:[%s217] sm:$0xff] %vm521, %v426
      %523 = vst.msk [vmem:[%s217 + $0x8] sm:$0xff] %vm521, %v428
      %524 = vst.msk [vmem:[%s217 + $0x10] sm:$0xff] %vm521, %v430
      %525 = vst.msk [vmem:[%s217 + $0x18] sm:$0xff] %vm521, %v432
      %526 = vst.msk [vmem:[%s217 + $0x20] sm:$0xff] %vm521, %v434
      %527 = vst.msk [vmem:[%s217 + $0x28] sm:$0xff] %vm521, %v436
      %528 = vst.msk [vmem:[%s217 + $0x30] sm:$0xff] %vm521, %v438
      %529 = vst.msk [vmem:[%s217 + $0x38] sm:$0xff] %vm521, %v440
      %530 = vst.msk [vmem:[%s217 + $0x40] sm:$0xff] %vm521, %v442
      %531 = vst.msk [vmem:[%s217 + $0x48] sm:$0xff] %vm521, %v444
      %532 = vst.msk [vmem:[%s217 + $0x50] sm:$0xff] %vm521, %v446
      %533 = vst.msk [vmem:[%s217 + $0x58] sm:$0xff] %vm521, %v448
      %534 = vst.msk [vmem:[%s217 + $0x60] sm:$0xff] %vm521, %v450
      %535 = vst.msk [vmem:[%s217 + $0x68] sm:$0xff] %vm521, %v452
      %536 = vst.msk [vmem:[%s217 + $0x70] sm:$0xff] %vm521, %v454
      %537 = vst.msk [vmem:[%s217 + $0x78] sm:$0xff] %vm521, %v456
      %538 = vst.msk [vmem:[%s217 + $0x80] sm:$0xff] %vm521, %v458
      %539 = vst.msk [vmem:[%s217 + $0x88] sm:$0xff] %vm521, %v460
      %540 = vst.msk [vmem:[%s217 + $0x90] sm:$0xff] %vm521, %v462
      %541 = vst.msk [vmem:[%s217 + $0x98] sm:$0xff] %vm521, %v464
      %542 = vst.msk [vmem:[%s217 + $0xa0] sm:$0xff] %vm521, %v466
      %543 = vst.msk [vmem:[%s217 + $0xa8] sm:$0xff] %vm521, %v468
      %544 = vst.msk [vmem:[%s217 + $0xb0] sm:$0xff] %vm521, %v470
      %545 = vst.msk [vmem:[%s217 + $0xb8] sm:$0xff] %vm521, %v472
      %546 = vst.msk [vmem:[%s217 + $0xc0] sm:$0xff] %vm521, %v474
      %547 = vst.msk [vmem:[%s217 + $0xc8] sm:$0xff] %vm521, %v476
      %548 = vst.msk [vmem:[%s217 + $0xd0] sm:$0xff] %vm521, %v478
      %549 = vst.msk [vmem:[%s217 + $0xd8] sm:$0xff] %vm521, %v480
      %550 = vst.msk [vmem:[%s217 + $0xe0] sm:$0xff] %vm521, %v482
      %551 = vst.msk [vmem:[%s217 + $0xe8] sm:$0xff] %vm521, %v484
      %552 = vst.msk [vmem:[%s217 + $0xf0] sm:$0xff] %vm521, %v486
      %553 = vst.msk [vmem:[%s217 + $0xf8] sm:$0xff] %vm521, %v488
      %p554 = scmp.lt.s32.totalorder %s15, 1
      %s555 = scalar_select %p554, %s15, 1
      %s556 = smul.addr %s555, 32
      %s557 = smul.addr %s556, 8
      %s558 = scalar_lea.vmem %s4, %s557
      // Predicated region
      $region37: #{unet_block_forward.3} parent=35 // pred_check
        %p559 = pneg %p127
      $region38: #{unet_block_forward.3} parent=35 // pred_check_branch
        %561 = sbr.rel (%p559) target = $region40
      $region39: #{unet_block_forward.3} parent=35 // pred_region
        _
      $region40: #{unet_block_forward.3} parent=35 // pred_fallthru
        _
    $region36: #{unet_block_forward.3} parent=5 // pred_fallthru
      _
    %p562 = scmp.le.s32.totalorder 2, %s10
    // Predicated region
    $region41: #{unet_block_forward.3} parent=5 // pred_check
      %p563 = pneg %p562
    $region42: #{unet_block_forward.3} parent=5 // pred_check_branch
      %565 = sbr.rel (%p563) target = $region44
    $region43: #{unet_block_forward.3} parent=5 // pred_region
      %s566 = ssub.s32 %s10, 2
      // Predicated region
      $region45: #{unet_block_forward.3} parent=43 // pred_check
        %p567 = pneg %p133
      $region46: #{unet_block_forward.3} parent=43 // pred_check_branch
        %569 = sbr.rel (%p567) target = $region48
      $region47: #{unet_block_forward.3} parent=43 // pred_region
        %p570 = scmp.lt.s32.totalorder %s16, 1
        %s571 = scalar_select %p570, %s16, 1
        %s572 = smul.addr %s571, 32
        %s573 = smul.addr %s572, 8
        %s574 = scalar_lea.vmem %s4, %s573
      $region48: #{unet_block_forward.3} parent=43 // pred_fallthru
        _
    $region44: #{unet_block_forward.3} parent=5 // pred_fallthru
      _
  $region6: #{unet_block_forward.3} parent=0 // loop_footer
    %s14 = sadd.s32 1, %s10
  $region7: #{unet_block_forward.3} parent=0 // loop_footer_branch
    %9 = sbr.rel target = $region3
  $region8: #{unet_block_forward.3} parent=0 // loop_exit
    _

// kernel: unet_block_forward.2
$region0: #{unet_block_forward.2}
  #allocation0 [shape = 'u32[]', space=smem, size = 0x4, offset = 0x4, fixed_abs, tag = 'smem constant byte address 0x4 - core index']
  #allocation1 [shape = 'u32[144,128]{1,0:T(1,128)}', space=vmem, size = 0x12000, scoped, tag = 'internal scratch']
  #allocation2 [shape = 'f32[10,10,8]{2,1,0:T(8,128)}', space=vmem, size = 0x14000, scoped, tag = 'scratch operand']
  %s0 = inlined_call_operand.vmem [shape: f32[2,9,9,4], index: 0, kind: input, shape index: {}]
  %s1 = inlined_call_operand.vmem [shape: f32[2,9,9,4], index: 1, kind: input, shape index: {}]
  %s2 = inlined_call_operand.vmem [shape: f32[2,9,9,4], index: 2, kind: input, shape index: {}]
  %s3 = inlined_call_operand.vmem [shape: f32[2,9,9,4], index: 3, kind: input, shape index: {}]
  %s4 = inlined_call_operand.vmem [shape: bf16[16,4,8], index: 4, kind: input, shape index: {}]
  %s5 = inlined_call_operand.vmem [shape: bf16[16,8,128], index: 5, kind: input, shape index: {}]
  %s6 = inlined_call_operand.vmem [shape: f32[2,64,128], index: 6, kind: output, shape index: {0}]
  %s7 = inlined_call_operand.vmem [shape: f32[2,64,128], index: 7, kind: output, shape index: {1}]
  %s8 = inlined_call_operand.vmem [shape: f32[2,64,128], index: 8, kind: output, shape index: {2}]
  %s9 = inlined_call_operand.vmem [shape: f32[2,64,128], index: 9, kind: output, shape index: {3}]
  %s10 = inlined_call_operand.vmem [shape: f32[2,8,128], index: 10, kind: output, shape index: {4}]
  %11 = xla_tuple %s6, %s7, %s8, %s9, %s10
  %s12 = sld [smem:[#allocation0]]
  $region89: #{unet_block_forward.2} parent=0
    _
  %s14 = ssub.s32 1, %s12
  %s15 = scalar_select 0, %s14, %s12
  loop: start=0, step=1, limit=4
  $region2: #{unet_block_forward.2} parent=0 // loop_pre_header
    _
  $region3: #{unet_block_forward.2} parent=0 // loop_header
    %s17 = sphi 0, %s21
    %p18 = scmp.ge.s32.totalorder %s17, 4
    %s27 = sphi 0, %s29
    %s30 = sphi 0, %s27
    %s31 = sphi 0, %s30
    %s47 = sphi 0, %s31
    %s53 = sphi 0, %s55
    %s56 = sphi 0, %s53
    %s57 = sphi 0, %s56
    %s73 = sphi 0, %s57
    %s79 = sphi 0, %s81
    %s82 = sphi 0, %s79
    %s83 = sphi 0, %s82
    %s99 = sphi 0, %s83
    %s105 = sphi 0, %s107
    %s108 = sphi 0, %s105
    %s109 = sphi 0, %s108
    %s125 = sphi 0, %s109
    %s129 = sphi 0, %s129
    %s131 = sphi 0, %s129
    %s132 = sphi 0, %s131
    %s146 = sphi 0, %s132
    %s150 = sphi 0, %s150
    %s152 = sphi 0, %s150
    %s153 = sphi 0, %s152
    %s167 = sphi 0, %s153
    %s173 = sphi 0, %s175
    %s176 = sphi 0, %s173
    %s177 = sphi 0, %s176
    %s193 = sphi 0, %s177
    %s199 = sphi 0, %s201
    %s202 = sphi 0, %s199
    %s203 = sphi 0, %s202
    %s219 = sphi 0, %s203
    %s225 = sphi 0, %s227
    %s228 = sphi 0, %s225
    %s229 = sphi 0, %s228
    %s245 = sphi 0, %s229
    %s251 = sphi 0, %s253
    %s254 = sphi 0, %s251
    %s255 = sphi 0, %s254
    %s271 = sphi 0, %s255
    %s277 = sphi 0, %s279
    %s280 = sphi 0, %s277
    %s281 = sphi 0, %s280
    %s297 = sphi 0, %s281
  $region4: #{unet_block_forward.2} parent=0 // loop_header_branch
    %20 = sbr.rel (%p18) target = $region8
  $region5: #{unet_block_forward.2} parent=0 // loop_body
    %s22 = ssub.s32 %s17, 1
    %s23 = ssub.s32 %s17, 2
    %s24 = sadd.s32 %s17, 1
    %s25 = ssub.s32 %s17, %s24
    %p26 = scmp.eq.s32.totalorder %s25, 0
    %s28 = sadd.s32 %s27, 1
    %s29 = scalar_select %p26, %s27, %s28
    %p32 = pneg %p26
    %p33 = scmp.eq.s32.totalorder %s17, 1
    %p34 = por %p32, %p33
    %p35 = scmp.ne.s32.totalorder %s27, %s30
    %p36 = scmp.eq.s32.totalorder %s17, 0
    %p37 = por %p35, %p36
    %p38 = scmp.ne.s32.totalorder %s27, %s30
    %p39 = scmp.eq.s32.totalorder %s22, 1
    %p40 = por %p38, %p39
    %p41 = scmp.ne.s32.totalorder %s30, %s31
    %p42 = scmp.eq.s32.totalorder %s22, 0
    %p43 = por %p41, %p42
    %p44 = scmp.ne.s32.totalorder %s30, %s31
    %p45 = scmp.eq.s32.totalorder %s23, 1
    %p46 = por %p44, %p45
    %p48 = scmp.ne.s32.totalorder %s31, %s47
    %p49 = scmp.eq.s32.totalorder %s23, 0
    %p50 = por %p48, %p49
    %s51 = ssub.s32 %s17, %s24
    %p52 = scmp.eq.s32.totalorder %s51, 0
    %s54 = sadd.s32 %s53, 1
    %s55 = scalar_select %p52, %s53, %s54
    %p58 = pneg %p52
    %p59 = scmp.eq.s32.totalorder %s17, 1
    %p60 = por %p58, %p59
    %p61 = scmp.ne.s32.totalorder %s53, %s56
    %p62 = scmp.eq.s32.totalorder %s17, 0
    %p63 = por %p61, %p62
    %p64 = scmp.ne.s32.totalorder %s53, %s56
    %p65 = scmp.eq.s32.totalorder %s22, 1
    %p66 = por %p64, %p65
    %p67 = scmp.ne.s32.totalorder %s56, %s57
    %p68 = scmp.eq.s32.totalorder %s22, 0
    %p69 = por %p67, %p68
    %p70 = scmp.ne.s32.totalorder %s56, %s57
    %p71 = scmp.eq.s32.totalorder %s23, 1
    %p72 = por %p70, %p71
    %p74 = scmp.ne.s32.totalorder %s57, %s73
    %p75 = scmp.eq.s32.totalorder %s23, 0
    %p76 = por %p74, %p75
    %s77 = ssub.s32 %s17, %s24
    %p78 = scmp.eq.s32.totalorder %s77, 0
    %s80 = sadd.s32 %s79, 1
    %s81 = scalar_select %p78, %s79, %s80
    %p84 = pneg %p78
    %p85 = scmp.eq.s32.totalorder %s17, 1
    %p86 = por %p84, %p85
    %p87 = scmp.ne.s32.totalorder %s79, %s82
    %p88 = scmp.eq.s32.totalorder %s17, 0
    %p89 = por %p87, %p88
    %p90 = scmp.ne.s32.totalorder %s79, %s82
    %p91 = scmp.eq.s32.totalorder %s22, 1
    %p92 = por %p90, %p91
    %p93 = scmp.ne.s32.totalorder %s82, %s83
    %p94 = scmp.eq.s32.totalorder %s22, 0
    %p95 = por %p93, %p94
    %p96 = scmp.ne.s32.totalorder %s82, %s83
    %p97 = scmp.eq.s32.totalorder %s23, 1
    %p98 = por %p96, %p97
    %p100 = scmp.ne.s32.totalorder %s83, %s99
    %p101 = scmp.eq.s32.totalorder %s23, 0
    %p102 = por %p100, %p101
    %s103 = ssub.s32 %s17, %s24
    %p104 = scmp.eq.s32.totalorder %s103, 0
    %s106 = sadd.s32 %s105, 1
    %s107 = scalar_select %p104, %s105, %s106
    %p110 = pneg %p104
    %p111 = scmp.eq.s32.totalorder %s17, 1
    %p112 = por %p110, %p111
    %p113 = scmp.ne.s32.totalorder %s105, %s108
    %p114 = scmp.eq.s32.totalorder %s17, 0
    %p115 = por %p113, %p114
    %p116 = scmp.ne.s32.totalorder %s105, %s108
    %p117 = scmp.eq.s32.totalorder %s22, 1
    %p118 = por %p116, %p117
    %p119 = scmp.ne.s32.totalorder %s108, %s109
    %p120 = scmp.eq.s32.totalorder %s22, 0
    %p121 = por %p119, %p120
    %p122 = scmp.ne.s32.totalorder %s108, %s109
    %p123 = scmp.eq.s32.totalorder %s23, 1
    %p124 = por %p122, %p123
    %p126 = scmp.ne.s32.totalorder %s109, %s125
    %p127 = scmp.eq.s32.totalorder %s23, 0
    %p128 = por %p126, %p127
    %s130 = sadd.s32 %s129, 1
    %p133 = scmp.eq.s32.totalorder %s17, 1
    %p134 = scmp.ne.s32.totalorder %s129, %s131
    %p135 = scmp.eq.s32.totalorder %s17, 0
    %p136 = por %p134, %p135
    %p137 = scmp.ne.s32.totalorder %s129, %s131
    %p138 = scmp.eq.s32.totalorder %s22, 1
    %p139 = por %p137, %p138
    %p140 = scmp.ne.s32.totalorder %s131, %s132
    %p141 = scmp.eq.s32.totalorder %s22, 0
    %p142 = por %p140, %p141
    %p143 = scmp.ne.s32.totalorder %s131, %s132
    %p144 = scmp.eq.s32.totalorder %s23, 1
    %p145 = por %p143, %p144
    %p147 = scmp.ne.s32.totalorder %s132, %s146
    %p148 = scmp.eq.s32.totalorder %s23, 0
    %p149 = por %p147, %p148
    %s151 = sadd.s32 %s150, 1
    %p154 = scmp.eq.s32.totalorder %s17, 1
    %p155 = scmp.ne.s32.totalorder %s150, %s152
    %p156 = scmp.eq.s32.totalorder %s17, 0
    %p157 = por %p155, %p156
    %p158 = scmp.ne.s32.totalorder %s150, %s152
    %p159 = scmp.eq.s32.totalorder %s22, 1
    %p160 = por %p158, %p159
    %p161 = scmp.ne.s32.totalorder %s152, %s153
    %p162 = scmp.eq.s32.totalorder %s22, 0
    %p163 = por %p161, %p162
    %p164 = scmp.ne.s32.totalorder %s152, %s153
    %p165 = scmp.eq.s32.totalorder %s23, 1
    %p166 = por %p164, %p165
    %p168 = scmp.ne.s32.totalorder %s153, %s167
    %p169 = scmp.eq.s32.totalorder %s23, 0
    %p170 = por %p168, %p169
    %s171 = ssub.s32 %s17, %s24
    %p172 = scmp.eq.s32.totalorder %s171, 0
    %s174 = sadd.s32 %s173, 1
    %s175 = scalar_select %p172, %s173, %s174
    %p178 = pneg %p172
    %p179 = scmp.eq.s32.totalorder %s17, 1
    %p180 = por %p178, %p179
    %p181 = scmp.ne.s32.totalorder %s173, %s176
    %p182 = scmp.eq.s32.totalorder %s17, 0
    %p183 = por %p181, %p182
    %p184 = scmp.ne.s32.totalorder %s173, %s176
    %p185 = scmp.eq.s32.totalorder %s22, 1
    %p186 = por %p184, %p185
    %p187 = scmp.ne.s32.totalorder %s176, %s177
    %p188 = scmp.eq.s32.totalorder %s22, 0
    %p189 = por %p187, %p188
    %p190 = scmp.ne.s32.totalorder %s176, %s177
    %p191 = scmp.eq.s32.totalorder %s23, 1
    %p192 = por %p190, %p191
    %p194 = scmp.ne.s32.totalorder %s177, %s193
    %p195 = scmp.eq.s32.totalorder %s23, 0
    %p196 = por %p194, %p195
    %s197 = ssub.s32 %s17, %s24
    %p198 = scmp.eq.s32.totalorder %s197, 0
    %s200 = sadd.s32 %s199, 1
    %s201 = scalar_select %p198, %s199, %s200
    %p204 = pneg %p198
    %p205 = scmp.eq.s32.totalorder %s17, 1
    %p206 = por %p204, %p205
    %p207 = scmp.ne.s32.totalorder %s199, %s202
    %p208 = scmp.eq.s32.totalorder %s17, 0
    %p209 = por %p207, %p208
    %p210 = scmp.ne.s32.totalorder %s199, %s202
    %p211 = scmp.eq.s32.totalorder %s22, 1
    %p212 = por %p210, %p211
    %p213 = scmp.ne.s32.totalorder %s202, %s203
    %p214 = scmp.eq.s32.totalorder %s22, 0
    %p215 = por %p213, %p214
    %p216 = scmp.ne.s32.totalorder %s202, %s203
    %p217 = scmp.eq.s32.totalorder %s23, 1
    %p218 = por %p216, %p217
    %p220 = scmp.ne.s32.totalorder %s203, %s219
    %p221 = scmp.eq.s32.totalorder %s23, 0
    %p222 = por %p220, %p221
    %s223 = ssub.s32 %s17, %s24
    %p224 = scmp.eq.s32.totalorder %s223, 0
    %s226 = sadd.s32 %s225, 1
    %s227 = scalar_select %p224, %s225, %s226
    %p230 = pneg %p224
    %p231 = scmp.eq.s32.totalorder %s17, 1
    %p232 = por %p230, %p231
    %p233 = scmp.ne.s32.totalorder %s225, %s228
    %p234 = scmp.eq.s32.totalorder %s17, 0
    %p235 = por %p233, %p234
    %p236 = scmp.ne.s32.totalorder %s225, %s228
    %p237 = scmp.eq.s32.totalorder %s22, 1
    %p238 = por %p236, %p237
    %p239 = scmp.ne.s32.totalorder %s228, %s229
    %p240 = scmp.eq.s32.totalorder %s22, 0
    %p241 = por %p239, %p240
    %p242 = scmp.ne.s32.totalorder %s228, %s229
    %p243 = scmp.eq.s32.totalorder %s23, 1
    %p244 = por %p242, %p243
    %p246 = scmp.ne.s32.totalorder %s229, %s245
    %p247 = scmp.eq.s32.totalorder %s23, 0
    %p248 = por %p246, %p247
    %s249 = ssub.s32 %s17, %s24
    %p250 = scmp.eq.s32.totalorder %s249, 0
    %s252 = sadd.s32 %s251, 1
    %s253 = scalar_select %p250, %s251, %s252
    %p256 = pneg %p250
    %p257 = scmp.eq.s32.totalorder %s17, 1
    %p258 = por %p256, %p257
    %p259 = scmp.ne.s32.totalorder %s251, %s254
    %p260 = scmp.eq.s32.totalorder %s17, 0
    %p261 = por %p259, %p260
    %p262 = scmp.ne.s32.totalorder %s251, %s254
    %p263 = scmp.eq.s32.totalorder %s22, 1
    %p264 = por %p262, %p263
    %p265 = scmp.ne.s32.totalorder %s254, %s255
    %p266 = scmp.eq.s32.totalorder %s22, 0
    %p267 = por %p265, %p266
    %p268 = scmp.ne.s32.totalorder %s254, %s255
    %p269 = scmp.eq.s32.totalorder %s23, 1
    %p270 = por %p268, %p269
    %p272 = scmp.ne.s32.totalorder %s255, %s271
    %p273 = scmp.eq.s32.totalorder %s23, 0
    %p274 = por %p272, %p273
    %s275 = ssub.s32 %s17, %s24
    %p276 = scmp.eq.s32.totalorder %s275, 0
    %s278 = sadd.s32 %s277, 1
    %s279 = scalar_select %p276, %s277, %s278
    %p282 = pneg %p276
    %p283 = scmp.eq.s32.totalorder %s17, 1
    %p284 = por %p282, %p283
    %p285 = scmp.ne.s32.totalorder %s277, %s280
    %p286 = scmp.eq.s32.totalorder %s17, 0
    %p287 = por %p285, %p286
    %p288 = scmp.ne.s32.totalorder %s277, %s280
    %p289 = scmp.eq.s32.totalorder %s22, 1
    %p290 = por %p288, %p289
    %p291 = scmp.ne.s32.totalorder %s280, %s281
    %p292 = scmp.eq.s32.totalorder %s22, 0
    %p293 = por %p291, %p292
    %p294 = scmp.ne.s32.totalorder %s280, %s281
    %p295 = scmp.eq.s32.totalorder %s23, 1
    %p296 = por %p294, %p295
    %p298 = scmp.ne.s32.totalorder %s281, %s297
    %p299 = scmp.eq.s32.totalorder %s23, 0
    %p300 = por %p298, %p299
    %p301 = scmp.le.s32.totalorder 1, %s17
    %p302 = scmp.lt.s32.totalorder %s17, 3
    %p303 = pnand %p301, %p302
    %p304 = pneg %p303
    // Predicated region
    $region9: #{unet_block_forward.2} parent=5 // pred_check
      _
    $region10: #{unet_block_forward.2} parent=5 // pred_check_branch
      %306 = sbr.rel (%p303) target = $region12
    $region11: #{unet_block_forward.2} parent=5 // pred_region
      %s307 = ssub.s32 %s17, 1
      // Predicated region
      $region13: #{unet_block_forward.2} parent=11 // pred_check
        %p308 = pneg %p142
      $region14: #{unet_block_forward.2} parent=11 // pred_check_branch
        %310 = sbr.rel (%p308) target = $region16
      $region15: #{unet_block_forward.2} parent=11 // pred_region
        _
      $region16: #{unet_block_forward.2} parent=11 // pred_fallthru
        _
      // Predicated region
      $region17: #{unet_block_forward.2} parent=11 // pred_check
        %p311 = pneg %p163
      $region18: #{unet_block_forward.2} parent=11 // pred_check_branch
        %313 = sbr.rel (%p311) target = $region20
      $region19: #{unet_block_forward.2} parent=11 // pred_region
        _
      $region20: #{unet_block_forward.2} parent=11 // pred_fallthru
        _
    $region12: #{unet_block_forward.2} parent=5 // pred_fallthru
      _
    %p314 = scmp.lt.s32.totalorder %s17, 2
    // Predicated region
    $region21: #{unet_block_forward.2} parent=5 // pred_check
      %p315 = pneg %p314
    $region22: #{unet_block_forward.2} parent=5 // pred_check_branch
      %317 = sbr.rel (%p315) target = $region24
    $region23: #{unet_block_forward.2} parent=5 // pred_region
      // Predicated region
      $region25: #{unet_block_forward.2} parent=23 // pred_check
        %p318 = pneg %p37
      $region26: #{unet_block_forward.2} parent=23 // pred_check_branch
        %320 = sbr.rel (%p318) target = $region28
      $region27: #{unet_block_forward.2} parent=23 // pred_region
        %p321 = scmp.lt.s32.totalorder %s17, 1
        %s322 = scalar_select %p321, %s17, 1
        %s323 = smul.addr %s322, 18
        %s324 = smul.addr %s323, 8
        %s325 = scalar_lea.vmem %s0, %s324
      $region28: #{unet_block_forward.2} parent=23 // pred_fallthru
        _
      // Predicated region
      $region29: #{unet_block_forward.2} parent=23 // pred_check
        %p326 = pneg %p63
      $region30: #{unet_block_forward.2} parent=23 // pred_check_branch
        %328 = sbr.rel (%p326) target = $region32
      $region31: #{unet_block_forward.2} parent=23 // pred_region
        %p329 = scmp.lt.s32.totalorder %s17, 1
        %s330 = scalar_select %p329, %s17, 1
        %s331 = smul.addr %s330, 18
        %s332 = smul.addr %s331, 8
        %s333 = scalar_lea.vmem %s1, %s332
      $region32: #{unet_block_forward.2} parent=23 // pred_fallthru
        _
      // Predicated region
      $region33: #{unet_block_forward.2} parent=23 // pred_check
        %p334 = pneg %p89
      $region34: #{unet_block_forward.2} parent=23 // pred_check_branch
        %336 = sbr.rel (%p334) target = $region36
      $region35: #{unet_block_forward.2} parent=23 // pred_region
        %p337 = scmp.lt.s32.totalorder %s17, 1
        %s338 = scalar_select %p337, %s17, 1
        %s339 = smul.addr %s338, 18
        %s340 = smul.addr %s339, 8
        %s341 = scalar_lea.vmem %s2, %s340
      $region36: #{unet_block_forward.2} parent=23 // pred_fallthru
        _
      // Predicated region
      $region37: #{unet_block_forward.2} parent=23 // pred_check
        %p342 = pneg %p115
      $region38: #{unet_block_forward.2} parent=23 // pred_check_branch
        %344 = sbr.rel (%p342) target = $region40
      $region39: #{unet_block_forward.2} parent=23 // pred_region
        %p345 = scmp.lt.s32.totalorder %s17, 1
        %s346 = scalar_select %p345, %s17, 1
        %s347 = smul.addr %s346, 18
        %s348 = smul.addr %s347, 8
        %s349 = scalar_lea.vmem %s3, %s348
      $region40: #{unet_block_forward.2} parent=23 // pred_fallthru
        _
    $region24: #{unet_block_forward.2} parent=5 // pred_fallthru
      _
    %p350 = scmp.le.s32.totalorder 1, %s17
    %p351 = scmp.lt.s32.totalorder %s17, 3
    %p352 = pnand %p350, %p351
    %p353 = pneg %p352
    // Predicated region
    $region41: #{unet_block_forward.2} parent=5 // pred_check
      _
    $region42: #{unet_block_forward.2} parent=5 // pred_check_branch
      %355 = sbr.rel (%p352) target = $region44
    $region43: #{unet_block_forward.2} parent=5 // pred_region
      %s356 = ssub.s32 %s17, 1
      %p357 = scmp.lt.s32.totalorder %s22, 1
      %s358 = scalar_select %p357, %s22, 1
      %s359 = smul.addr %s358, 18
      %s360 = smul.addr %s359, 8
      %s361 = scalar_lea.vmem %s0, %s360
      %p362 = pneg %p43
      %p363 = pneg %p40
      %p364 = scmp.lt.s32.totalorder %s22, 1
      %s365 = scalar_select %p364, %s22, 1
      %s366 = smul.addr %s365, 18
      %s367 = smul.addr %s366, 8
      %s368 = scalar_lea.vmem %s1, %s367
      %p369 = pneg %p69
      %p370 = pneg %p66
      %p371 = scmp.lt.s32.totalorder %s22, 1
      %s372 = scalar_select %p371, %s22, 1
      %s373 = smul.addr %s372, 18
      %s374 = smul.addr %s373, 8
      %s375 = scalar_lea.vmem %s2, %s374
      %p376 = pneg %p95
      %p377 = pneg %p92
      %p378 = scmp.lt.s32.totalorder %s22, 1
      %s379 = scalar_select %p378, %s22, 1
      %s380 = smul.addr %s379, 18
      %s381 = smul.addr %s380, 8
      %s382 = scalar_lea.vmem %s3, %s381
      %p383 = pneg %p121
      %p384 = pneg %p118
      %p385 = pneg %p142
      %p386 = pneg %p139
      %p387 = pneg %p163
      %p388 = pneg %p160
      %p389 = pneg %p189
      %p390 = pneg %p186
      %p391 = scmp.lt.s32.totalorder %s22, 1
      %s392 = scalar_select %p391, %s22, 1
      %s393 = smul.addr %s392, 8
      %s394 = smul.addr %s393, 8
      %s395 = scalar_lea.vmem %s6, %s394
      %p396 = pneg %p215
      %p397 = pneg %p212
      %p398 = scmp.lt.s32.totalorder %s22, 1
      %s399 = scalar_select %p398, %s22, 1
      %s400 = smul.addr %s399, 8
      %s401 = smul.addr %s400, 8
      %s402 = scalar_lea.vmem %s7, %s401
      %p403 = pneg %p241
      %p404 = pneg %p238
      %p405 = scmp.lt.s32.totalorder %s22, 1
      %s406 = scalar_select %p405, %s22, 1
      %s407 = smul.addr %s406, 8
      %s408 = smul.addr %s407, 8
      %s409 = scalar_lea.vmem %s8, %s408
      %p410 = pneg %p267
      %p411 = pneg %p264
      %p412 = scmp.lt.s32.totalorder %s22, 1
      %s413 = scalar_select %p412, %s22, 1
      %s414 = smul.addr %s413, 8
      %s415 = smul.addr %s414, 8
      %s416 = scalar_lea.vmem %s9, %s415
      %p417 = pneg %p293
      %p418 = pneg %p290
      %p419 = scmp.lt.s32.totalorder %s22, 1
      %s420 = scalar_select %p419, %s22, 1
      %s421 = smul.addr %s420, 8
      %s422 = scalar_lea.vmem %s10, %s421
      %p423 = scmp.lt.s32.totalorder %s22, 1
      %s424 = scalar_select %p423, %s22, 1
      %s425 = smul.addr %s424, 18
      %s426 = smul.addr %s425, 8
      %s427 = scalar_lea.vmem %s0, %s426
      %p428 = scmp.lt.s32.totalorder %s22, 1
      %s429 = scalar_select %p428, %s22, 1
      %s430 = smul.addr %s429, 18
      %s431 = smul.addr %s430, 8
      %s432 = scalar_lea.vmem %s1, %s431
      %p433 = scmp.lt.s32.totalorder %s22, 1
      %s434 = scalar_select %p433, %s22, 1
      %s435 = smul.addr %s434, 18
      %s436 = smul.addr %s435, 8
      %s437 = scalar_lea.vmem %s2, %s436
      %p438 = scmp.lt.s32.totalorder %s22, 1
      %s439 = scalar_select %p438, %s22, 1
      %s440 = smul.addr %s439, 18
      %s441 = smul.addr %s440, 8
      %s442 = scalar_lea.vmem %s3, %s441
      %p443 = scmp.lt.s32.totalorder %s22, 1
      %s444 = scalar_select %p443, %s22, 1
      %s445 = smul.addr %s444, 8
      %s446 = smul.addr %s445, 8
      %s447 = scalar_lea.vmem %s6, %s446
      %p448 = scmp.lt.s32.totalorder %s22, 1
      %s449 = scalar_select %p448, %s22, 1
      %s450 = smul.addr %s449, 8
      %s451 = smul.addr %s450, 8
      %s452 = scalar_lea.vmem %s7, %s451
      %p453 = scmp.lt.s32.totalorder %s22, 1
      %s454 = scalar_select %p453, %s22, 1
      %s455 = smul.addr %s454, 8
      %s456 = smul.addr %s455, 8
      %s457 = scalar_lea.vmem %s8, %s456
      %p458 = scmp.lt.s32.totalorder %s22, 1
      %s459 = scalar_select %p458, %s22, 1
      %s460 = smul.addr %s459, 8
      %s461 = smul.addr %s460, 8
      %s462 = scalar_lea.vmem %s9, %s461
      %p463 = scmp.lt.s32.totalorder %s22, 1
      %s464 = scalar_select %p463, %s22, 1
      %s465 = smul.addr %s464, 8
      %s466 = scalar_lea.vmem %s10, %s465
      %v468 = vld [vmem:[%s427] sm:$0xff]
      %v469 = vld [vmem:[%s427 + $0x8] sm:$0x1]
      %v470 = vld [vmem:[%s427 + $0x10] sm:$0xff]
      %v471 = vld [vmem:[%s427 + $0x18] sm:$0x1]
      %v472 = vld [vmem:[%s427 + $0x20] sm:$0xff]
      %v473 = vld [vmem:[%s427 + $0x28] sm:$0x1]
      %v474 = vld [vmem:[%s427 + $0x30] sm:$0xff]
      %v475 = vld [vmem:[%s427 + $0x38] sm:$0x1]
      %v476 = vld [vmem:[%s427 + $0x40] sm:$0xff]
      %v477 = vld [vmem:[%s427 + $0x48] sm:$0x1]
      %v478 = vld [vmem:[%s427 + $0x50] sm:$0xff]
      %v479 = vld [vmem:[%s427 + $0x58] sm:$0x1]
      %v480 = vld [vmem:[%s427 + $0x60] sm:$0xff]
      %v481 = vld [vmem:[%s427 + $0x68] sm:$0x1]
      %v482 = vld [vmem:[%s427 + $0x70] sm:$0xff]
      %v483 = vld [vmem:[%s427 + $0x78] sm:$0x1]
      %v484 = vld [vmem:[%s427 + $0x80] sm:$0xff]
      %v485 = vld [vmem:[%s427 + $0x88] sm:$0x1]
      %vm486 = vcmp.ge.f32.partialorder %v468, 0.0
      %vm487 = vcmp.ge.f32.partialorder %v469, 0.0
      %vm488 = vcmp.ge.f32.partialorder %v470, 0.0
      %vm489 = vcmp.ge.f32.partialorder %v471, 0.0
      %vm490 = vcmp.ge.f32.partialorder %v472, 0.0
      %vm491 = vcmp.ge.f32.partialorder %v473, 0.0
      %vm492 = vcmp.ge.f32.partialorder %v474, 0.0
      %vm493 = vcmp.ge.f32.partialorder %v475, 0.0
      %vm494 = vcmp.ge.f32.partialorder %v476, 0.0
      %vm495 = vcmp.ge.f32.partialorder %v477, 0.0
      %vm496 = vcmp.ge.f32.partialorder %v478, 0.0
      %vm497 = vcmp.ge.f32.partialorder %v479, 0.0
      %vm498 = vcmp.ge.f32.partialorder %v480, 0.0
      %vm499 = vcmp.ge.f32.partialorder %v481, 0.0
      %vm500 = vcmp.ge.f32.partialorder %v482, 0.0
      %vm501 = vcmp.ge.f32.partialorder %v483, 0.0
      %vm502 = vcmp.ge.f32.partialorder %v484, 0.0
      %vm503 = vcmp.ge.f32.partialorder %v485, 0.0
      %v504 = vmul.f32 %v468, 0.2
      %v505 = vmul.f32 %v469, 0.2
      %v506 = vmul.f32 %v470, 0.2
      %v507 = vmul.f32 %v471, 0.2
      %v508 = vmul.f32 %v472, 0.2
      %v509 = vmul.f32 %v473, 0.2
      %v510 = vmul.f32 %v474, 0.2
      %v511 = vmul.f32 %v475, 0.2
      %v512 = vmul.f32 %v476, 0.2
      %v513 = vmul.f32 %v477, 0.2
      %v514 = vmul.f32 %v478, 0.2
      %v515 = vmul.f32 %v479, 0.2
      %v516 = vmul.f32 %v480, 0.2
      %v517 = vmul.f32 %v481, 0.2
      %v518 = vmul.f32 %v482, 0.2
      %v519 = vmul.f32 %v483, 0.2
      %v520 = vmul.f32 %v484, 0.2
      %v521 = vmul.f32 %v485, 0.2
      %v522 = vsel %vm486, %v468, %v504
      %v523 = vsel %vm487, %v469, %v505
      %v524 = vsel %vm488, %v470, %v506
      %v525 = vsel %vm489, %v471, %v507
      %v526 = vsel %vm490, %v472, %v508
      %v527 = vsel %vm491, %v473, %v509
      %v528 = vsel %vm492, %v474, %v510
      %v529 = vsel %vm493, %v475, %v511
      %v530 = vsel %vm494, %v476, %v512
      %v531 = vsel %vm495, %v477, %v513
      %v532 = vsel %vm496, %v478, %v514
      %v533 = vsel %vm497, %v479, %v515
      %v534 = vsel %vm498, %v480, %v516
      %v535 = vsel %vm499, %v481, %v517
      %v536 = vsel %vm500, %v482, %v518
      %v537 = vsel %vm501, %v483, %v519
      %v538 = vsel %vm502, %v484, %v520
      %v539 = vsel %vm503, %v485, %v521
      %v540 = vld [vmem:[%s4] sm:$0x3]
      %v541 = vpack.c.bf16 %v524, %v522
      %v542 = vpack.c.bf16 %v528, %v526
      %v543 = vpack.c.bf16 %v532, %v530
      %v544 = vpack.c.bf16 %v536, %v534
      %vm561 = vcmask 1046528
      %v562 = vrot.slane %v522, 1
      %v563 = vrot.slane %v523, 1
      %v564 = vsel %vm561, %v562, %v563
      %v565 = vrot.slane %v524, 1
      %v566 = vrot.slane %v525, 1
      %v567 = vsel %vm561, %v565, %v566
      %v568 = vrot.slane %v526, 1
      %v569 = vrot.slane %v527, 1
      %v570 = vsel %vm561, %v568, %v569
      %v571 = vrot.slane %v528, 1
      %v572 = vrot.slane %v529, 1
      %v573 = vsel %vm561, %v571, %v572
      %v574 = vrot.slane %v530, 1
      %v575 = vrot.slane %v531, 1
      %v576 = vsel %vm561, %v574, %v575
      %v577 = vrot.slane %v532, 1
      %v578 = vrot.slane %v533, 1
      %v579 = vsel %vm561, %v577, %v578
      %v580 = vrot.slane %v534, 1
      %v581 = vrot.slane %v535, 1
      %v582 = vsel %vm561, %v580, %v581
      %v583 = vrot.slane %v536, 1
      %v584 = vrot.slane %v537, 1
      %v585 = vsel %vm561, %v583, %v584
      %s594 = scalar_lea.vmem %s4, 4
      %v595 = vld [vmem:[%s594] sm:$0x3]
      %v596 = vpack.c.bf16 %v567, %v564
      %v597 = vpack.c.bf16 %v573, %v570
      %v598 = vpack.c.bf16 %v579, %v576
      %v599 = vpack.c.bf16 %v585, %v582
      %vm600 = vcmask 31744
      %v602 = vsel %vm600, %v596, 0
      %v605 = vsel %vm600, %v597, 0
      %v608 = vsel %vm600, %v598, 0
      %v611 = vsel %vm600, %v599, 0
      %vm613 = vcmask 1041408
      %v615 = vsel %vm613, %v595, 0
      %617 = vmatprep.subr.bf16.mxu0 0
      %618 = vmatpush1.bf16.msra.mxu0 %v615
      %619 = vmatprep.subr.bf16.mxu0 0
      %620 = vmatpush1.bf16.msra.mxu0 0
      %621 = vmatprep.subr.bf16.mxu0 0
      %622 = vmatpush1.bf16.msra.mxu0 0
      %623 = vmatprep.subr.bf16.mxu0 0
      %624 = vmatpush1.bf16.msra.mxu0 0
      %625 = vmatprep.subr.bf16.mxu0 0
      %626 = vmatpush1.bf16.msra.mxu0 0
      %627 = vmatprep.subr.bf16.mxu0 0
      %628 = vmatpush1.bf16.msra.mxu0 0
      %629 = vmatprep.subr.bf16.mxu0 0
      %630 = vmatpush1.bf16.msra.mxu0 0
      %631 = vmatprep.subr.bf16.mxu0 0
      %632 = vmatpush1.bf16.msra.mxu0 0
      %633 = vmatprep.subr.bf16.mxu0 0
      %634 = vmatpush1.bf16.msra.mxu0 0
      %635 = vmatprep.subr.bf16.mxu0 0
      %636 = vmatpush1.bf16.msra.mxu0 0
      %637 = vmatprep.subr.bf16.mxu0 0
      %638 = vmatpush1.bf16.msra.mxu0 0
      %639 = vmatprep.subr.bf16.mxu0 0
      %640 = vmatpush1.bf16.msra.mxu0 0
      %641 = vmatprep.subr.bf16.mxu0 0
      %642 = vmatpush1.bf16.msra.mxu0 0
      %643 = vmatprep.subr.bf16.mxu0 0
      %644 = vmatpush1.bf16.msra.mxu0 0
      %645 = vmatprep.subr.bf16.mxu0 0
      %646 = vmatpush1.bf16.msra.mxu0 0
      %647 = vmatprep.subr.bf16.mxu0 0
      %648 = vmatpush1.bf16.msra.mxu0 0
      %649 = vmatprep.mubr.bf16.mxu0 0
      %650 = vmatmul.mubr.bf16.gmra.mrb[0].mxu0 %v602
      %v651 = vpop.f32.mrb[0].mxu0
      %v652 = vadd.f32 0.0, %v651
      %v653 = vpop.f32.mrb[0].mxu0
      %v654 = vpop.f32.mrb[0].mxu0
      %v655 = vadd.f32 0.0, %v654
      %v656 = vpop.f32.mrb[0].mxu0
      %657 = vmatprep.mubr.bf16.mxu0 0
      %658 = vmatmul.mubr.bf16.gmra.mrb[0].mxu0 %v605
      %v659 = vpop.f32.mrb[0].mxu0
      %v660 = vadd.f32 0.0, %v659
      %v661 = vpop.f32.mrb[0].mxu0
      %v662 = vpop.f32.mrb[0].mxu0
      %v663 = vadd.f32 0.0, %v662
      %v664 = vpop.f32.mrb[0].mxu0
      %665 = vmatprep.mubr.bf16.mxu0 0
      %666 = vmatmul.mubr.bf16.gmra.mrb[0].mxu0 %v608
      %v667 = vpop.f32.mrb[0].mxu0
      %v668 = vadd.f32 0.0, %v667
      %v669 = vpop.f32.mrb[0].mxu0
      %v670 = vpop.f32.mrb[0].mxu0
      %v671 = vadd.f32 0.0, %v670
      %v672 = vpop.f32.mrb[0].mxu0
      %673 = vmatprep.mubr.bf16.mxu0 0
      %674 = vmatmul.mubr.bf16.gmra.mrb[0].mxu0 %v611
      %v675 = vpop.f32.mrb[0].mxu0
      %v676 = vadd.f32 0.0, %v675
      %v677 = vpop.f32.mrb[0].mxu0
      %v678 = vpop.f32.mrb[0].mxu0
      %v679 = vadd.f32 0.0, %v678
      %v680 = vpop.f32.mrb[0].mxu0
      %681 = vdwg.mxu0
      %v683 = vsel %vm600, %v541, 0
      %v686 = vsel %vm600, %v542, 0
      %v689 = vsel %vm600, %v543, 0
      %v692 = vsel %vm600, %v544, 0
      %v695 = vsel %vm613, %v540, 0
      %697 = vmatprep.subr.bf16.mxu0 0
      %698 = vmatpush1.bf16.msra.mxu0 %v695
      %699 = vmatprep.subr.bf16.mxu0 0
      %700 = vmatpush1.bf16.msra.mxu0 0
      %701 = vmatprep.subr.bf16.mxu0 0
      %702 = vmatpush1.bf16.msra.mxu0 0
      %703 = vmatprep.subr.bf16.mxu0 0
      %704 = vmatpush1.bf16.msra.mxu0 0
      %705 = vmatprep.subr.bf16.mxu0 0
      %706 = vmatpush1.bf16.msra.mxu0 0
      %707 = vmatprep.subr.bf16.mxu0 0
      %708 = vmatpush1.bf16.msra.mxu0 0
      %709 = vmatprep.subr.bf16.mxu0 0
      %710 = vmatpush1.bf16.msra.mxu0 0
      %711 = vmatprep.subr.bf16.mxu0 0
      %712 = vmatpush1.bf16.msra.mxu0 0
      %713 = vmatprep.subr.bf16.mxu0 0
      %714 = vmatpush1.bf16.msra.mxu0 0
      %715 = vmatprep.subr.bf16.mxu0 0
      %716 = vmatpush1.bf16.msra.mxu0 0
      %717 = vmatprep.subr.bf16.mxu0 0
      %718 = vmatpush1.bf16.msra.mxu0 0
      %719 = vmatprep.subr.bf16.mxu0 0
      %720 = vmatpush1.bf16.msra.mxu0 0
      %721 = vmatprep.subr.bf16.mxu0 0
      %722 = vmatpush1.bf16.msra.mxu0 0
      %723 = vmatprep.subr.bf16.mxu0 0
      %724 = vmatpush1.bf16.msra.mxu0 0
      %725 = vmatprep.subr.bf16.mxu0 0
      %726 = vmatpush1.bf16.msra.mxu0 0
      %727 = vmatprep.subr.bf16.mxu0 0
      %728 = vmatpush1.bf16.msra.mxu0 0
      %729 = vmatprep.mubr.bf16.mxu0 0
      %730 = vmatmul.mubr.bf16.gmra.mrb[0].mxu0 %v683
      %v731 = vpop.f32.mrb[0].mxu0
      %v732 = vadd.f32 %v652, %v731
      %v733 = vpop.f32.mrb[0].mxu0
      %v734 = vpop.f32.mrb[0].mxu0
      %v735 = vadd.f32 %v655, %v734
      %v736 = vpop.f32.mrb[0].mxu0
      %737 = vmatprep.mubr.bf16.mxu0 0
      %738 = vmatmul.mubr.bf16.gmra.mrb[0].mxu0 %v686
      %v739 = vpop.f32.mrb[0].mxu0
      %v740 = vadd.f32 %v660, %v739
      %v741 = vpop.f32.mrb[0].mxu0
      %v742 = vpop.f32.mrb[0].mxu0
      %v743 = vadd.f32 %v663, %v742
      %v744 = vpop.f32.mrb[0].mxu0
      %745 = vmatprep.mubr.bf16.mxu0 0
      %746 = vmatmul.mubr.bf16.gmra.mrb[0].mxu0 %v689
      %v747 = vpop.f32.mrb[0].mxu0
      %v748 = vadd.f32 %v668, %v747
      %v749 = vpop.f32.mrb[0].mxu0
      %v750 = vpop.f32.mrb[0].mxu0
      %v751 = vadd.f32 %v671, %v750
      %v752 = vpop.f32.mrb[0].mxu0
      %753 = vmatprep.mubr.bf16.mxu0 0
      %754 = vmatmul.mubr.bf16.gmra.mrb[0].mxu0 %v692
      %v755 = vpop.f32.mrb[0].mxu0
      %v756 = vadd.f32 %v676, %v755
      %v757 = vpop.f32.mrb[0].mxu0
      %v758 = vpop.f32.mrb[0].mxu0
      %v759 = vadd.f32 %v679, %v758
      %v760 = vpop.f32.mrb[0].mxu0
      %761 = vdwg.mxu0
      %s762 = scalar_lea.vmem %s4, 16
      %v763 = vld [vmem:[%s762] sm:$0x3]
      %v764 = vpack.c.bf16 %v526, %v524
      %v765 = vpack.c.bf16 %v530, %v528
      %v766 = vpack.c.bf16 %v534, %v532
      %v767 = vpack.c.bf16 %v538, %v536
      %v769 = vsel %vm600, %v764, 0
      %v772 = vsel %vm600, %v765, 0
      %v775 = vsel %vm600, %v766, 0
      %v778 = vsel %vm600, %v767, 0
      %v781 = vsel %vm613, %v763, 0
      %783 = vmatprep.subr.bf16.mxu0 0
      %784 = vmatpush1.bf16.msra.mxu0 %v781
      %785 = vmatprep.subr.bf16.mxu0 0
      %786 = vmatpush1.bf16.msra.mxu0 0
      %787 = vmatprep.subr.bf16.mxu0 0
      %788 = vmatpush1.bf16.msra.mxu0 0
      %789 = vmatprep.subr.bf16.mxu0 0
      %790 = vmatpush1.bf16.msra.mxu0 0
      %791 = vmatprep.subr.bf16.mxu0 0
      %792 = vmatpush1.bf16.msra.mxu0 0
      %793 = vmatprep.subr.bf16.mxu0 0
      %794 = vmatpush1.bf16.msra.mxu0 0
      %795 = vmatprep.subr.bf16.mxu0 0
      %796 = vmatpush1.bf16.msra.mxu0 0
      %797 = vmatprep.subr.bf16.mxu0 0
      %798 = vmatpush1.bf16.msra.mxu0 0
      %799 = vmatprep.subr.bf16.mxu0 0
      %800 = vmatpush1.bf16.msra.mxu0 0
      %801 = vmatprep.subr.bf16.mxu0 0
      %802 = vmatpush1.bf16.msra.mxu0 0
      %803 = vmatprep.subr.bf16.mxu0 0
      %804 = vmatpush1.bf16.msra.mxu0 0
      %805 = vmatprep.subr.bf16.mxu0 0
      %806 = vmatpush1.bf16.msra.mxu0 0
      %807 = vmatprep.subr.bf16.mxu0 0
      %808 = vmatpush1.bf16.msra.mxu0 0
      %809 = vmatprep.subr.bf16.mxu0 0
      %810 = vmatpush1.bf16.msra.mxu0 0
      %811 = vmatprep.subr.bf16.mxu0 0
      %812 = vmatpush1.bf16.msra.mxu0 0
      %813 = vmatprep.subr.bf16.mxu0 0
      %814 = vmatpush1.bf16.msra.mxu0 0
      %815 = vmatprep.mubr.bf16.mxu0 0
      %816 = vmatmul.mubr.bf16.gmra.mrb[0].mxu0 %v769
      %v817 = vpop.f32.mrb[0].mxu0
      %v818 = vadd.f32 0.0, %v817
      %v819 = vpop.f32.mrb[0].mxu0
      %v820 = vpop.f32.mrb[0].mxu0
      %v821 = vadd.f32 0.0, %v820
      %v822 = vpop.f32.mrb[0].mxu0
      %823 = vmatprep.mubr.bf16.mxu0 0
      %824 = vmatmul.mubr.bf16.gmra.mrb[0].mxu0 %v772
      %v825 = vpop.f32.mrb[0].mxu0
      %v826 = vadd.f32 0.0, %v825
      %v827 = vpop.f32.mrb[0].mxu0
      %v828 = vpop.f32.mrb[0].mxu0
      %v829 = vadd.f32 0.0, %v828
      %v830 = vpop.f32.mrb[0].mxu0
      %831 = vmatprep.mubr.bf16.mxu0 0
      %832 = vmatmul.mubr.bf16.gmra.mrb[0].mxu0 %v775
      %v833 = vpop.f32.mrb[0].mxu0
      %v834 = vadd.f32 0.0, %v833
      %v835 = vpop.f32.mrb[0].mxu0
      %v836 = vpop.f32.mrb[0].mxu0
      %v837 = vadd.f32 0.0, %v836
      %v838 = vpop.f32.mrb[0].mxu0
      %839 = vmatprep.mubr.bf16.mxu0 0
      %840 = vmatmul.mubr.bf16.gmra.mrb[0].mxu0 %v778
      %v841 = vpop.f32.mrb[0].mxu0
      %v842 = vadd.f32 0.0, %v841
      %v843 = vpop.f32.mrb[0].mxu0
      %v844 = vpop.f32.mrb[0].mxu0
      %v845 = vadd.f32 0.0, %v844
      %v846 = vpop.f32.mrb[0].mxu0
      %847 = vdwg.mxu0
      %v848 = vadd.f32 %v732, %v818
      %v849 = vadd.f32 %v735, %v821
      %v850 = vadd.f32 %v740, %v826
      %v851 = vadd.f32 %v743, %v829
      %v852 = vadd.f32 %v748, %v834
      %v853 = vadd.f32 %v751, %v837
      %v854 = vadd.f32 %v756, %v842
      %v855 = vadd.f32 %v759, %v845
      %v858 = vrot.slane %v538, 1
      %v859 = vrot.slane %v539, 1
      %v860 = vsel %vm561, %v858, %v859
      %s862 = scalar_lea.vmem %s4, 20
      %v863 = vld [vmem:[%s862] sm:$0x3]
      %v864 = vpack.c.bf16 %v570, %v567
      %v865 = vpack.c.bf16 %v576, %v573
      %v866 = vpack.c.bf16 %v582, %v579
      %v867 = vpack.c.bf16 %v860, %v585
      %v869 = vsel %vm600, %v864, 0
      %v872 = vsel %vm600, %v865, 0
      %v875 = vsel %vm600, %v866, 0
      %v878 = vsel %vm600, %v867, 0
      %v881 = vsel %vm613, %v863, 0
      %883 = vmatprep.subr.bf16.mxu0 0
      %884 = vmatpush1.bf16.msra.mxu0 %v881
      %885 = vmatprep.subr.bf16.mxu0 0
      %886 = vmatpush1.bf16.msra.mxu0 0
      %887 = vmatprep.subr.bf16.mxu0 0
      %888 = vmatpush1.bf16.msra.mxu0 0
      %889 = vmatprep.subr.bf16.mxu0 0
      %890 = vmatpush1.bf16.msra.mxu0 0
      %891 = vmatprep.subr.bf16.mxu0 0
      %892 = vmatpush1.bf16.msra.mxu0 0
      %893 = vmatprep.subr.bf16.mxu0 0
      %894 = vmatpush1.bf16.msra.mxu0 0
      %895 = vmatprep.subr.bf16.mxu0 0
      %896 = vmatpush1.bf16.msra.mxu0 0
      %897 = vmatprep.subr.bf16.mxu0 0
      %898 = vmatpush1.bf16.msra.mxu0 0
      %899 = vmatprep.subr.bf16.mxu0 0
      %900 = vmatpush1.bf16.msra.mxu0 0
      %901 = vmatprep.subr.bf16.mxu0 0
      %902 = vmatpush1.bf16.msra.mxu0 0
      %903 = vmatprep.subr.bf16.mxu0 0
      %904 = vmatpush1.bf16.msra.mxu0 0
      %905 = vmatprep.subr.bf16.mxu0 0
      %906 = vmatpush1.bf16.msra.mxu0 0
      %907 = vmatprep.subr.bf16.mxu0 0
      %908 = vmatpush1.bf16.msra.mxu0 0
      %909 = vmatprep.subr.bf16.mxu0 0
      %910 = vmatpush1.bf16.msra.mxu0 0
      %911 = vmatprep.subr.bf16.mxu0 0
      %912 = vmatpush1.bf16.msra.mxu0 0
      %913 = vmatprep.subr.bf16.mxu0 0
      %914 = vmatpush1.bf16.msra.mxu0 0
      %915 = vmatprep.mubr.bf16.mxu0 0
      %916 = vmatmul.mubr.bf16.gmra.mrb[0].mxu0 %v869
      %v917 = vpop.f32.mrb[0].mxu0
      %v918 = vadd.f32 0.0, %v917
      %v919 = vpop.f32.mrb[0].mxu0
      %v920 = vpop.f32.mrb[0].mxu0
      %v921 = vadd.f32 0.0, %v920
      %v922 = vpop.f32.mrb[0].mxu0
      %923 = vmatprep.mubr.bf16.mxu0 0
      %924 = vmatmul.mubr.bf16.gmra.mrb[0].mxu0 %v872
      %v925 = vpop.f32.mrb[0].mxu0
      %v926 = vadd.f32 0.0, %v925
      %v927 = vpop.f32.mrb[0].mxu0
      %v928 = vpop.f32.mrb[0].mxu0
      %v929 = vadd.f32 0.0, %v928
      %v930 = vpop.f32.mrb[0].mxu0
      %931 = vmatprep.mubr.bf16.mxu0 0
      %932 = vmatmul.mubr.bf16.gmra.mrb[0].mxu0 %v875
      %v933 = vpop.f32.mrb[0].mxu0
      %v934 = vadd.f32 0.0, %v933
      %v935 = vpop.f32.mrb[0].mxu0
      %v936 = vpop.f32.mrb[0].mxu0
      %v937 = vadd.f32 0.0, %v936
      %v938 = vpop.f32.mrb[0].mxu0
      %939 = vmatprep.mubr.bf16.mxu0 0
      %940 = vmatmul.mubr.bf16.gmra.mrb[0].mxu0 %v878
      %v941 = vpop.f32.mrb[0].mxu0
      %v942 = vadd.f32 0.0, %v941
      %v943 = vpop.f32.mrb[0].mxu0
      %v944 = vpop.f32.mrb[0].mxu0
      %v945 = vadd.f32 0.0, %v944
      %v946 = vpop.f32.mrb[0].mxu0
      %947 = vdwg.mxu0
      %v948 = vadd.f32 %v848, %v918
      %v949 = vadd.f32 %v849, %v921
      %v950 = vadd.f32 %v850, %v926
      %v951 = vadd.f32 %v851, %v929
      %v952 = vadd.f32 %v852, %v934
      %v953 = vadd.f32 %v853, %v937
      %v954 = vadd.f32 %v854, %v942
      %v955 = vadd.f32 %v855, %v945
      %v956 = vld [vmem:[%s432] sm:$0xff]
      %v957 = vld [vmem:[%s432 + $0x8] sm:$0x1]
      %v958 = vld [vmem:[%s432 + $0x10] sm:$0xff]
      %v959 = vld [vmem:[%s432 + $0x18] sm:$0x1]
      %v960 = vld [vmem:[%s432 + $0x20] sm:$0xff]
      %v961 = vld [vmem:[%s432 + $0x28] sm:$0x1]
      %v962 = vld [vmem:[%s432 + $0x30] sm:$0xff]
      %v963 = vld [vmem:[%s432 + $0x38] sm:$0x1]
      %v964 = vld [vmem:[%s432 + $0x40] sm:$0xff]
      %v965 = vld [vmem:[%s432 + $0x48] sm:$0x1]
      %v966 = vld [vmem:[%s432 + $0x50] sm:$0xff]
      %v967 = vld [vmem:[%s432 + $0x58] sm:$0x1]
      %v968 = vld [vmem:[%s432 + $0x60] sm:$0xff]
      %v969 = vld [vmem:[%s432 + $0x68] sm:$0x1]
      %v970 = vld [vmem:[%s432 + $0x70] sm:$0xff]
      %v971 = vld [vmem:[%s432 + $0x78] sm:$0x1]
      %v972 = vld [vmem:[%s432 + $0x80] sm:$0xff]
      %v973 = vld [vmem:[%s432 + $0x88] sm:$0x1]
      %vm974 = vcmp.ge.f32.partialorder %v956, 0.0
      %vm975 = vcmp.ge.f32.partialorder %v957, 0.0
      %vm976 = vcmp.ge.f32.partialorder %v958, 0.0
      %vm977 = vcmp.ge.f32.partialorder %v959, 0.0
      %vm978 = vcmp.ge.f32.partialorder %v960, 0.0
      %vm979 = vcmp.ge.f32.partialorder %v961, 0.0
      %vm980 = vcmp.ge.f32.partialorder %v962, 0.0
      %vm981 = vcmp.ge.f32.partialorder %v963, 0.0
      %vm982 = vcmp.ge.f32.partialorder %v964, 0.0
      %vm983 = vcmp.ge.f32.partialorder %v965, 0.0
      %vm984 = vcmp.ge.f32.partialorder %v966, 0.0
      %vm985 = vcmp.ge.f32.partialorder %v967, 0.0
      %vm986 = vcmp.ge.f32.partialorder %v968, 0.0
      %vm987 = vcmp.ge.f32.partialorder %v969, 0.0
      %vm988 = vcmp.ge.f32.partialorder %v970, 0.0
      %vm989 = vcmp.ge.f32.partialorder %v971, 0.0
      %vm990 = vcmp.ge.f32.partialorder %v972, 0.0
      %vm991 = vcmp.ge.f32.partialorder %v973, 0.0
      %v992 = vmul.f32 %v956, 0.2
      %v993 = vmul.f32 %v957, 0.2
      %v994 = vmul.f32 %v958, 0.2
      %v995 = vmul.f32 %v959, 0.2
      %v996 = vmul.f32 %v960, 0.2
      %v997 = vmul.f32 %v961, 0.2
      %v998 = vmul.f32 %v962, 0.2
      %v999 = vmul.f32 %v963, 0.2
      %v1000 = vmul.f32 %v964, 0.2
      %v1001 = vmul.f32 %v965, 0.2
      %v1002 = vmul.f32 %v966, 0.2
      %v1003 = vmul.f32 %v967, 0.2
      %v1004 = vmul.f32 %v968, 0.2
      %v1005 = vmul.f32 %v969, 0.2
      %v1006 = vmul.f32 %v970, 0.2
      %v1007 = vmul.f32 %v971, 0.2
      %v1008 = vmul.f32 %v972, 0.2
      %v1009 = vmul.f32 %v973, 0.2
      %v1010 = vsel %vm974, %v956, %v992
      %v1011 = vsel %vm975, %v957, %v993
      %v1012 = vsel %vm976, %v958, %v994
      %v1013 = vsel %vm977, %v959, %v995
      %v1014 = vsel %vm978, %v960, %v996
      %v1015 = vsel %vm979, %v961, %v997
      %v1016 = vsel %vm980, %v962, %v998
      %v1017 = vsel %vm981, %v963, %v999
      %v1018 = vsel %vm982, %v964, %v1000
      %v1019 = vsel %vm983, %v965, %v1001
      %v1020 = vsel %vm984, %v966, %v1002
      %v1021 = vsel %vm985, %v967, %v1003
      %v1022 = vsel %vm986, %v968, %v1004
      %v1023 = vsel %vm987, %v969, %v1005
      %v1024 = vsel %vm988, %v970, %v1006
      %v1025 = vsel %vm989, %v971, %v1007
      %v1026 = vsel %vm990, %v972, %v1008
      %v1027 = vsel %vm991, %v973, %v1009
      %s1028 = scalar_lea.vmem %s4, 2
      %v1029 = vld [vmem:[%s1028] sm:$0x3]
      %v1030 = vpack.c.bf16 %v1012, %v1010
      %v1031 = vpack.c.bf16 %v1016, %v1014
      %v1032 = vpack.c.bf16 %v1020, %v1018
      %v1033 = vpack.c.bf16 %v1024, %v1022
      %v1035 = vsel %vm600, %v1030, 0
      %v1038 = vsel %vm600, %v1031, 0
      %v1041 = vsel %vm600, %v1032, 0
      %v1044 = vsel %vm600, %v1033, 0
      %v1047 = vsel %vm613, %v1029, 0
      %1049 = vmatprep.subr.bf16.mxu0 0
      %1050 = vmatpush1.bf16.msra.mxu0 %v1047
      %1051 = vmatprep.subr.bf16.mxu0 0
      %1052 = vmatpush1.bf16.msra.mxu0 0
      %1053 = vmatprep.subr.bf16.mxu0 0
      %1054 = vmatpush1.bf16.msra.mxu0 0
      %1055 = vmatprep.subr.bf16.mxu0 0
      %1056 = vmatpush1.bf16.msra.mxu0 0
      %1057 = vmatprep.subr.bf16.mxu0 0
      %1058 = vmatpush1.bf16.msra.mxu0 0
      %1059 = vmatprep.subr.bf16.mxu0 0
      %1060 = vmatpush1.bf16.msra.mxu0 0
      %1061 = vmatprep.subr.bf16.mxu0 0
      %1062 = vmatpush1.bf16.msra.mxu0 0
      %1063 = vmatprep.subr.bf16.mxu0 0
      %1064 = vmatpush1.bf16.msra.mxu0 0
      %1065 = vmatprep.subr.bf16.mxu0 0
      %1066 = vmatpush1.bf16.msra.mxu0 0
      %1067 = vmatprep.subr.bf16.mxu0 0
      %1068 = vmatpush1.bf16.msra.mxu0 0
      %1069 = vmatprep.subr.bf16.mxu0 0
      %1070 = vmatpush1.bf16.msra.mxu0 0
      %1071 = vmatprep.subr.bf16.mxu0 0
      %1072 = vmatpush1.bf16.msra.mxu0 0
      %1073 = vmatprep.subr.bf16.mxu0 0
      %1074 = vmatpush1.bf16.msra.mxu0 0
      %1075 = vmatprep.subr.bf16.mxu0 0
      %1076 = vmatpush1.bf16.msra.mxu0 0
      %1077 = vmatprep.subr.bf16.mxu0 0
      %1078 = vmatpush1.bf16.msra.mxu0 0
      %1079 = vmatprep.subr.bf16.mxu0 0
      %1080 = vmatpush1.bf16.msra.mxu0 0
      %1081 = vmatprep.mubr.bf16.mxu0 0
      %1082 = vmatmul.mubr.bf16.gmra.mrb[0].mxu0 %v1035
      %v1083 = vpop.f32.mrb[0].mxu0
      %v1084 = vadd.f32 0.0, %v1083
      %v1085 = vpop.f32.mrb[0].mxu0
      %v1086 = vpop.f32.mrb[0].mxu0
      %v1087 = vadd.f32 0.0, %v1086
      %v1088 = vpop.f32.mrb[0].mxu0
      %1089 = vmatprep.mubr.bf16.mxu0 0
      %1090 = vmatmul.mubr.bf16.gmra.mrb[0].mxu0 %v1038
      %v1091 = vpop.f32.mrb[0].mxu0
      %v1092 = vadd.f32 0.0, %v1091
      %v1093 = vpop.f32.mrb[0].mxu0
      %v1094 = vpop.f32.mrb[0].mxu0
      %v1095 = vadd.f32 0.0, %v1094
      %v1096 = vpop.f32.mrb[0].mxu0
      %1097 = vmatprep.mubr.bf16.mxu0 0
      %1098 = vmatmul.mubr.bf16.gmra.mrb[0].mxu0 %v1041
      %v1099 = vpop.f32.mrb[0].mxu0
      %v1100 = vadd.f32 0.0, %v1099
      %v1101 = vpop.f32.mrb[0].mxu0
      %v1102 = vpop.f32.mrb[0].mxu0
      %v1103 = vadd.f32 0.0, %v1102
      %v1104 = vpop.f32.mrb[0].mxu0
      %1105 = vmatprep.mubr.bf16.mxu0 0
      %1106 = vmatmul.mubr.bf16.gmra.mrb[0].mxu0 %v1044
      %v1107 = vpop.f32.mrb[0].mxu0
      %v1108 = vadd.f32 0.0, %v1107
      %v1109 = vpop.f32.mrb[0].mxu0
      %v1110 = vpop.f32.mrb[0].mxu0
      %v1111 = vadd.f32 0.0, %v1110
      %v1112 = vpop.f32.mrb[0].mxu0
      %1113 = vdwg.mxu0
      %v1114 = vadd.f32 %v948, %v1084
      %v1115 = vadd.f32 %v949, %v1087
      %v1116 = vadd.f32 %v950, %v1092
      %v1117 = vadd.f32 %v951, %v1095
      %v1118 = vadd.f32 %v952, %v1100
      %v1119 = vadd.f32 %v953, %v1103
      %v1120 = vadd.f32 %v954, %v1108
      %v1121 = vadd.f32 %v955, %v1111
      %v1138 = vrot.slane %v1010, 1
      %v1139 = vrot.slane %v1011, 1
      %v1140 = vsel %vm561, %v1138, %v1139
      %v1141 = vrot.slane %v1012, 1
      %v1142 = vrot.slane %v1013, 1
      %v1143 = vsel %vm561, %v1141, %v1142
      %v1144 = vrot.slane %v1014, 1
      %v1145 = vrot.slane %v1015, 1
      %v1146 = vsel %vm561, %v1144, %v1145
      %v1147 = vrot.slane %v1016, 1
      %v1148 = vrot.slane %v1017, 1
      %v1149 = vsel %vm561, %v1147, %v1148
      %v1150 = vrot.slane %v1018, 1
      %v1151 = vrot.slane %v1019, 1
      %v1152 = vsel %vm561, %v1150, %v1151
      %v1153 = vrot.slane %v1020, 1
      %v1154 = vrot.slane %v1021, 1
      %v1155 = vsel %vm561, %v1153, %v1154
      %v1156 = vrot.slane %v1022, 1
      %v1157 = vrot.slane %v1023, 1
      %v1158 = vsel %vm561, %v1156, %v1157
      %v1159 = vrot.slane %v1024, 1
      %v1160 = vrot.slane %v1025, 1
      %v1161 = vsel %vm561, %v1159, %v1160
      %s1170 = scalar_lea.vmem %s4, 6
      %v1171 = vld [vmem:[%s1170] sm:$0x3]
      %v1172 = vpack.c.bf16 %v1143, %v1140
      %v1173 = vpack.c.bf16 %v1149, %v1146
      %v1174 = vpack.c.bf16 %v1155, %v1152
      %v1175 = vpack.c.bf16 %v1161, %v1158
      %v1177 = vsel %vm600, %v1172, 0
      %v1180 = vsel %vm600, %v1173, 0
      %v1183 = vsel %vm600, %v1174, 0
      %v1186 = vsel %vm600, %v1175, 0
      %v1189 = vsel %vm613, %v1171, 0
      %1191 = vmatprep.subr.bf16.mxu0 0
      %1192 = vmatpush1.bf16.msra.mxu0 %v1189
      %1193 = vmatprep.subr.bf16.mxu0 0
      %1194 = vmatpush1.bf16.msra.mxu0 0
      %1195 = vmatprep.subr.bf16.mxu0 0
      %1196 = vmatpush1.bf16.msra.mxu0 0
      %1197 = vmatprep.subr.bf16.mxu0 0
      %1198 = vmatpush1.bf16.msra.mxu0 0
      %1199 = vmatprep.subr.bf16.mxu0 0
      %1200 = vmatpush1.bf16.msra.mxu0 0
      %1201 = vmatprep.subr.bf16.mxu0 0
      %1202 = vmatpush1.bf16.msra.mxu0 0
      %1203 = vmatprep.subr.bf16.mxu0 0
      %1204 = vmatpush1.bf16.msra.mxu0 0
      %1205 = vmatprep.subr.bf16.mxu0 0
      %1206 = vmatpush1.bf16.msra.mxu0 0
      %1207 = vmatprep.subr.bf16.mxu0 0
      %1208 = vmatpush1.bf16.msra.mxu0 0
      %1209 = vmatprep.subr.bf16.mxu0 0
      %1210 = vmatpush1.bf16.msra.mxu0 0
      %1211 = vmatprep.subr.bf16.mxu0 0
      %1212 = vmatpush1.bf16.msra.mxu0 0
      %1213 = vmatprep.subr.bf16.mxu0 0
      %1214 = vmatpush1.bf16.msra.mxu0 0
      %1215 = vmatprep.subr.bf16.mxu0 0
      %1216 = vmatpush1.bf16.msra.mxu0 0
      %1217 = vmatprep.subr.bf16.mxu0 0
      %1218 = vmatpush1.bf16.msra.mxu0 0
      %1219 = vmatprep.subr.bf16.mxu0 0
      %1220 = vmatpush1.bf16.msra.mxu0 0
      %1221 = vmatprep.subr.bf16.mxu0 0
      %1222 = vmatpush1.bf16.msra.mxu0 0
      %1223 = vmatprep.mubr.bf16.mxu0 0
      %1224 = vmatmul.mubr.bf16.gmra.mrb[0].mxu0 %v1177
      %v1225 = vpop.f32.mrb[0].mxu0
      %v1226 = vadd.f32 0.0, %v1225
      %v1227 = vpop.f32.mrb[0].mxu0
      %v1228 = vpop.f32.mrb[0].mxu0
      %v1229 = vadd.f32 0.0, %v1228
      %v1230 = vpop.f32.mrb[0].mxu0
      %1231 = vmatprep.mubr.bf16.mxu0 0
      %1232 = vmatmul.mubr.bf16.gmra.mrb[0].mxu0 %v1180
      %v1233 = vpop.f32.mrb[0].mxu0
      %v1234 = vadd.f32 0.0, %v1233
      %v1235 = vpop.f32.mrb[0].mxu0
      %v1236 = vpop.f32.mrb[0].mxu0
      %v1237 = vadd.f32 0.0, %v1236
      %v1238 = vpop.f32.mrb[0].mxu0
      %1239 = vmatprep.mubr.bf16.mxu0 0
      %1240 = vmatmul.mubr.bf16.gmra.mrb[0].mxu0 %v1183
      %v1241 = vpop.f32.mrb[0].mxu0
      %v1242 = vadd.f32 0.0, %v1241
      %v1243 = vpop.f32.mrb[0].mxu0
      %v1244 = vpop.f32.mrb[0].mxu0
      %v1245 = vadd.f32 0.0, %v1244
      %v1246 = vpop.f32.mrb[0].mxu0
      %1247 = vmatprep.mubr.bf16.mxu0 0
      %1248 = vmatmul.mubr.bf16.gmra.mrb[0].mxu0 %v1186
      %v1249 = vpop.f32.mrb[0].mxu0
      %v1250 = vadd.f32 0.0, %v1249
      %v1251 = vpop.f32.mrb[0].mxu0
      %v1252 = vpop.f32.mrb[0].mxu0
      %v1253 = vadd.f32 0.0, %v1252
      %v1254 = vpop.f32.mrb[0].mxu0
      %1255 = vdwg.mxu0
      %v1256 = vadd.f32 %v1114, %v1226
      %v1257 = vadd.f32 %v1115, %v1229
      %v1258 = vadd.f32 %v1116, %v1234
      %v1259 = vadd.f32 %v1117, %v1237
      %v1260 = vadd.f32 %v1118, %v1242
      %v1261 = vadd.f32 %v1119, %v1245
      %v1262 = vadd.f32 %v1120, %v1250
      %v1263 = vadd.f32 %v1121, %v1253
      %s1264 = scalar_lea.vmem %s4, 18
      %v1265 = vld [vmem:[%s1264] sm:$0x3]
      %v1266 = vpack.c.bf16 %v1014, %v1012
      %v1267 = vpack.c.bf16 %v1018, %v1016
      %v1268 = vpack.c.bf16 %v1022, %v1020
      %v1269 = vpack.c.bf16 %v1026, %v1024
      %v1271 = vsel %vm600, %v1266, 0
      %v1274 = vsel %vm600, %v1267, 0
      %v1277 = vsel %vm600, %v1268, 0
      %v1280 = vsel %vm600, %v1269, 0
      %v1283 = vsel %vm613, %v1265, 0
      %1285 = vmatprep.subr.bf16.mxu0 0
      %1286 = vmatpush1.bf16.msra.mxu0 %v1283
      %1287 = vmatprep.subr.bf16.mxu0 0
      %1288 = vmatpush1.bf16.msra.mxu0 0
      %1289 = vmatprep.subr.bf16.mxu0 0
      %1290 = vmatpush1.bf16.msra.mxu0 0
      %1291 = vmatprep.subr.bf16.mxu0 0
      %1292 = vmatpush1.bf16.msra.mxu0 0
      %1293 = vmatprep.subr.bf16.mxu0 0
      %1294 = vmatpush1.bf16.msra.mxu0 0
      %1295 = vmatprep.subr.bf16.mxu0 0
      %1296 = vmatpush1.bf16.msra.mxu0 0
      %1297 = vmatprep.subr.bf16.mxu0 0
      %1298 = vmatpush1.bf16.msra.mxu0 0
      %1299 = vmatprep.subr.bf16.mxu0 0
      %1300 = vmatpush1.bf16.msra.mxu0 0
      %1301 = vmatprep.subr.bf16.mxu0 0
      %1302 = vmatpush1.bf16.msra.mxu0 0
      %1303 = vmatprep.subr.bf16.mxu0 0
      %1304 = vmatpush1.bf16.msra.mxu0 0
      %1305 = vmatprep.subr.bf16.mxu0 0
      %1306 = vmatpush1.bf16.msra.mxu0 0
      %1307 = vmatprep.subr.bf16.mxu0 0
      %1308 = vmatpush1.bf16.msra.mxu0 0
      %1309 = vmatprep.subr.bf16.mxu0 0
      %1310 = vmatpush1.bf16.msra.mxu0 0
      %1311 = vmatprep.subr.bf16.mxu0 0
      %1312 = vmatpush1.bf16.msra.mxu0 0
      %1313 = vmatprep.subr.bf16.mxu0 0
      %1314 = vmatpush1.bf16.msra.mxu0 0
      %1315 = vmatprep.subr.bf16.mxu0 0
      %1316 = vmatpush1.bf16.msra.mxu0 0
      %1317 = vmatprep.mubr.bf16.mxu0 0
      %1318 = vmatmul.mubr.bf16.gmra.mrb[0].mxu0 %v1271
      %v1319 = vpop.f32.mrb[0].mxu0
      %v1320 = vadd.f32 0.0, %v1319
      %v1321 = vpop.f32.mrb[0].mxu0
      %v1322 = vpop.f32.mrb[0].mxu0
      %v1323 = vadd.f32 0.0, %v1322
      %v1324 = vpop.f32.mrb[0].mxu0
      %1325 = vmatprep.mubr.bf16.mxu0 0
      %1326 = vmatmul.mubr.bf16.gmra.mrb[0].mxu0 %v1274
      %v1327 = vpop.f32.mrb[0].mxu0
      %v1328 = vadd.f32 0.0, %v1327
      %v1329 = vpop.f32.mrb[0].mxu0
      %v1330 = vpop.f32.mrb[0].mxu0
      %v1331 = vadd.f32 0.0, %v1330
      %v1332 = vpop.f32.mrb[0].mxu0
      %1333 = vmatprep.mubr.bf16.mxu0 0
      %1334 = vmatmul.mubr.bf16.gmra.mrb[0].mxu0 %v1277
      %v1335 = vpop.f32.mrb[0].mxu0
      %v1336 = vadd.f32 0.0, %v1335
      %v1337 = vpop.f32.mrb[0].mxu0
      %v1338 = vpop.f32.mrb[0].mxu0
      %v1339 = vadd.f32 0.0, %v1338
      %v1340 = vpop.f32.mrb[0].mxu0
      %1341 = vmatprep.mubr.bf16.mxu0 0
      %1342 = vmatmul.mubr.bf16.gmra.mrb[0].mxu0 %v1280
      %v1343 = vpop.f32.mrb[0].mxu0
      %v1344 = vadd.f32 0.0, %v1343
      %v1345 = vpop.f32.mrb[0].mxu0
      %v1346 = vpop.f32.mrb[0].mxu0
      %v1347 = vadd.f32 0.0, %v1346
      %v1348 = vpop.f32.mrb[0].mxu0
      %1349 = vdwg.mxu0
      %v1350 = vadd.f32 %v1256, %v1320
      %v1351 = vadd.f32 %v1257, %v1323
      %v1352 = vadd.f32 %v1258, %v1328
      %v1353 = vadd.f32 %v1259, %v1331
      %v1354 = vadd.f32 %v1260, %v1336
      %v1355 = vadd.f32 %v1261, %v1339
      %v1356 = vadd.f32 %v1262, %v1344
      %v1357 = vadd.f32 %v1263, %v1347
      %v1360 = vrot.slane %v1026, 1
      %v1361 = vrot.slane %v1027, 1
      %v1362 = vsel %vm561, %v1360, %v1361
      %s1364 = scalar_lea.vmem %s4, 22
      %v1365 = vld [vmem:[%s1364] sm:$0x3]
      %v1366 = vpack.c.bf16 %v1146, %v1143
      %v1367 = vpack.c.bf16 %v1152, %v1149
      %v1368 = vpack.c.bf16 %v1158, %v1155
      %v1369 = vpack.c.bf16 %v1362, %v1161
      %v1371 = vsel %vm600, %v1366, 0
      %v1374 = vsel %vm600, %v1367, 0
      %v1377 = vsel %vm600, %v1368, 0
      %v1380 = vsel %vm600, %v1369, 0
      %v1383 = vsel %vm613, %v1365, 0
      %1385 = vmatprep.subr.bf16.mxu0 0
      %1386 = vmatpush1.bf16.msra.mxu0 %v1383
      %1387 = vmatprep.subr.bf16.mxu0 0
      %1388 = vmatpush1.bf16.msra.mxu0 0
      %1389 = vmatprep.subr.bf16.mxu0 0
      %1390 = vmatpush1.bf16.msra.mxu0 0
      %1391 = vmatprep.subr.bf16.mxu0 0
      %1392 = vmatpush1.bf16.msra.mxu0 0
      %1393 = vmatprep.subr.bf16.mxu0 0
      %1394 = vmatpush1.bf16.msra.mxu0 0
      %1395 = vmatprep.subr.bf16.mxu0 0
      %1396 = vmatpush1.bf16.msra.mxu0 0
      %1397 = vmatprep.subr.bf16.mxu0 0
      %1398 = vmatpush1.bf16.msra.mxu0 0
      %1399 = vmatprep.subr.bf16.mxu0 0
      %1400 = vmatpush1.bf16.msra.mxu0 0
      %1401 = vmatprep.subr.bf16.mxu0 0
      %1402 = vmatpush1.bf16.msra.mxu0 0
      %1403 = vmatprep.subr.bf16.mxu0 0
      %1404 = vmatpush1.bf16.msra.mxu0 0
      %1405 = vmatprep.subr.bf16.mxu0 0
      %1406 = vmatpush1.bf16.msra.mxu0 0
      %1407 = vmatprep.subr.bf16.mxu0 0
      %1408 = vmatpush1.bf16.msra.mxu0 0
      %1409 = vmatprep.subr.bf16.mxu0 0
      %1410 = vmatpush1.bf16.msra.mxu0 0
      %1411 = vmatprep.subr.bf16.mxu0 0
      %1412 = vmatpush1.bf16.msra.mxu0 0
      %1413 = vmatprep.subr.bf16.mxu0 0
      %1414 = vmatpush1.bf16.msra.mxu0 0
      %1415 = vmatprep.subr.bf16.mxu0 0
      %1416 = vmatpush1.bf16.msra.mxu0 0
      %1417 = vmatprep.mubr.bf16.mxu0 0
      %1418 = vmatmul.mubr.bf16.gmra.mrb[0].mxu0 %v1371
      %v1419 = vpop.f32.mrb[0].mxu0
      %v1420 = vadd.f32 0.0, %v1419
      %v1421 = vpop.f32.mrb[0].mxu0
      %v1422 = vpop.f32.mrb[0].mxu0
      %v1423 = vadd.f32 0.0, %v1422
      %v1424 = vpop.f32.mrb[0].mxu0
      %1425 = vmatprep.mubr.bf16.mxu0 0
      %1426 = vmatmul.mubr.bf16.gmra.mrb[0].mxu0 %v1374
      %v1427 = vpop.f32.mrb[0].mxu0
      %v1428 = vadd.f32 0.0, %v1427
      %v1429 = vpop.f32.mrb[0].mxu0
      %v1430 = vpop.f32.mrb[0].mxu0
      %v1431 = vadd.f32 0.0, %v1430
      %v1432 = vpop.f32.mrb[0].mxu0
      %1433 = vmatprep.mubr.bf16.mxu0 0
      %1434 = vmatmul.mubr.bf16.gmra.mrb[0].mxu0 %v1377
      %v1435 = vpop.f32.mrb[0].mxu0
      %v1436 = vadd.f32 0.0, %v1435
      %v1437 = vpop.f32.mrb[0].mxu0
      %v1438 = vpop.f32.mrb[0].mxu0
      %v1439 = vadd.f32 0.0, %v1438
      %v1440 = vpop.f32.mrb[0].mxu0
      %1441 = vmatprep.mubr.bf16.mxu0 0
      %1442 = vmatmul.mubr.bf16.gmra.mrb[0].mxu0 %v1380
      %v1443 = vpop.f32.mrb[0].mxu0
      %v1444 = vadd.f32 0.0, %v1443
      %v1445 = vpop.f32.mrb[0].mxu0
      %v1446 = vpop.f32.mrb[0].mxu0
      %v1447 = vadd.f32 0.0, %v1446
      %v1448 = vpop.f32.mrb[0].mxu0
      %1449 = vdwg.mxu0
      %v1450 = vadd.f32 %v1350, %v1420
      %v1451 = vadd.f32 %v1351, %v1423
      %v1452 = vadd.f32 %v1352, %v1428
      %v1453 = vadd.f32 %v1353, %v1431
      %v1454 = vadd.f32 %v1354, %v1436
      %v1455 = vadd.f32 %v1355, %v1439
      %v1456 = vadd.f32 %v1356, %v1444
      %v1457 = vadd.f32 %v1357, %v1447
      %v1458 = vld [vmem:[%s437] sm:$0xff]
      %v1459 = vld [vmem:[%s437 + $0x8] sm:$0x1]
      %v1460 = vld [vmem:[%s437 + $0x10] sm:$0xff]
      %v1461 = vld [vmem:[%s437 + $0x18] sm:$0x1]
      %v1462 = vld [vmem:[%s437 + $0x20] sm:$0xff]
      %v1463 = vld [vmem:[%s437 + $0x28] sm:$0x1]
      %v1464 = vld [vmem:[%s437 + $0x30] sm:$0xff]
      %v1465 = vld [vmem:[%s437 + $0x38] sm:$0x1]
      %v1466 = vld [vmem:[%s437 + $0x40] sm:$0xff]
      %v1467 = vld [vmem:[%s437 + $0x48] sm:$0x1]
      %v1468 = vld [vmem:[%s437 + $0x50] sm:$0xff]
      %v1469 = vld [vmem:[%s437 + $0x58] sm:$0x1]
      %v1470 = vld [vmem:[%s437 + $0x60] sm:$0xff]
      %v1471 = vld [vmem:[%s437 + $0x68] sm:$0x1]
      %v1472 = vld [vmem:[%s437 + $0x70] sm:$0xff]
      %v1473 = vld [vmem:[%s437 + $0x78] sm:$0x1]
      %v1474 = vld [vmem:[%s437 + $0x80] sm:$0xff]
      %v1475 = vld [vmem:[%s437 + $0x88] sm:$0x1]
      %vm1476 = vcmp.ge.f32.partialorder %v1458, 0.0
      %vm1477 = vcmp.ge.f32.partialorder %v1459, 0.0
      %vm1478 = vcmp.ge.f32.partialorder %v1460, 0.0
      %vm1479 = vcmp.ge.f32.partialorder %v1461, 0.0
      %vm1480 = vcmp.ge.f32.partialorder %v1462, 0.0
      %vm1481 = vcmp.ge.f32.partialorder %v1463, 0.0
      %vm1482 = vcmp.ge.f32.partialorder %v1464, 0.0
      %vm1483 = vcmp.ge.f32.partialorder %v1465, 0.0
      %vm1484 = vcmp.ge.f32.partialorder %v1466, 0.0
      %vm1485 = vcmp.ge.f32.partialorder %v1467, 0.0
      %vm1486 = vcmp.ge.f32.partialorder %v1468, 0.0
      %vm1487 = vcmp.ge.f32.partialorder %v1469, 0.0
      %vm1488 = vcmp.ge.f32.partialorder %v1470, 0.0
      %vm1489 = vcmp.ge.f32.partialorder %v1471, 0.0
      %vm1490 = vcmp.ge.f32.partialorder %v1472, 0.0
      %vm1491 = vcmp.ge.f32.partialorder %v1473, 0.0
      %vm1492 = vcmp.ge.f32.partialorder %v1474, 0.0
      %vm1493 = vcmp.ge.f32.partialorder %v1475, 0.0
      %v1494 = vmul.f32 %v1458, 0.2
      %v1495 = vmul.f32 %v1459, 0.2
      %v1496 = vmul.f32 %v1460, 0.2
      %v1497 = vmul.f32 %v1461, 0.2
      %v1498 = vmul.f32 %v1462, 0.2
      %v1499 = vmul.f32 %v1463, 0.2
      %v1500 = vmul.f32 %v1464, 0.2
      %v1501 = vmul.f32 %v1465, 0.2
      %v1502 = vmul.f32 %v1466, 0.2
      %v1503 = vmul.f32 %v1467, 0.2
      %v1504 = vmul.f32 %v1468, 0.2
      %v1505 = vmul.f32 %v1469, 0.2
      %v1506 = vmul.f32 %v1470, 0.2
      %v1507 = vmul.f32 %v1471, 0.2
      %v1508 = vmul.f32 %v1472, 0.2
      %v1509 = vmul.f32 %v1473, 0.2
      %v1510 = vmul.f32 %v1474, 0.2
      %v1511 = vmul.f32 %v1475, 0.2
      %v1512 = vsel %vm1476, %v1458, %v1494
      %v1513 = vsel %vm1477, %v1459, %v1495
      %v1514 = vsel %vm1478, %v1460, %v1496
      %v1515 = vsel %vm1479, %v1461, %v1497
      %v1516 = vsel %vm1480, %v1462, %v1498
      %v1517 = vsel %vm1481, %v1463, %v1499
      %v1518 = vsel %vm1482, %v1464, %v1500
      %v1519 = vsel %vm1483, %v1465, %v1501
      %v1520 = vsel %vm1484, %v1466, %v1502
      %v1521 = vsel %vm1485, %v1467, %v1503
      %v1522 = vsel %vm1486, %v1468, %v1504
      %v1523 = vsel %vm1487, %v1469, %v1505
      %v1524 = vsel %vm1488, %v1470, %v1506
      %v1525 = vsel %vm1489, %v1471, %v1507
      %v1526 = vsel %vm1490, %v1472, %v1508
      %v1527 = vsel %vm1491, %v1473, %v1509
      %v1528 = vsel %vm1492, %v1474, %v1510
      %v1529 = vsel %vm1493, %v1475, %v1511
      %s1530 = scalar_lea.vmem %s4, 8
      %v1531 = vld [vmem:[%s1530] sm:$0x3]
      %v1532 = vpack.c.bf16 %v1514, %v1512
      %v1533 = vpack.c.bf16 %v1518, %v1516
      %v1534 = vpack.c.bf16 %v1522, %v1520
      %v1535 = vpack.c.bf16 %v1526, %v1524
      %v1537 = vsel %vm600, %v1532, 0
      %v1540 = vsel %vm600, %v1533, 0
      %v1543 = vsel %vm600, %v1534, 0
      %v1546 = vsel %vm600, %v1535, 0
      %v1549 = vsel %vm613, %v1531, 0
      %1551 = vmatprep.subr.bf16.mxu0 0
      %1552 = vmatpush1.bf16.msra.mxu0 %v1549
      %1553 = vmatprep.subr.bf16.mxu0 0
      %1554 = vmatpush1.bf16.msra.mxu0 0
      %1555 = vmatprep.subr.bf16.mxu0 0
      %1556 = vmatpush1.bf16.msra.mxu0 0
      %1557 = vmatprep.subr.bf16.mxu0 0
      %1558 = vmatpush1.bf16.msra.mxu0 0
      %1559 = vmatprep.subr.bf16.mxu0 0
      %1560 = vmatpush1.bf16.msra.mxu0 0
      %1561 = vmatprep.subr.bf16.mxu0 0
      %1562 = vmatpush1.bf16.msra.mxu0 0
      %1563 = vmatprep.subr.bf16.mxu0 0
      %1564 = vmatpush1.bf16.msra.mxu0 0
      %1565 = vmatprep.subr.bf16.mxu0 0
      %1566 = vmatpush1.bf16.msra.mxu0 0
      %1567 = vmatprep.subr.bf16.mxu0 0
      %1568 = vmatpush1.bf16.msra.mxu0 0
      %1569 = vmatprep.subr.bf16.mxu0 0
      %1570 = vmatpush1.bf16.msra.mxu0 0
      %1571 = vmatprep.subr.bf16.mxu0 0
      %1572 = vmatpush1.bf16.msra.mxu0 0
      %1573 = vmatprep.subr.bf16.mxu0 0
      %1574 = vmatpush1.bf16.msra.mxu0 0
      %1575 = vmatprep.subr.bf16.mxu0 0
      %1576 = vmatpush1.bf16.msra.mxu0 0
      %1577 = vmatprep.subr.bf16.mxu0 0
      %1578 = vmatpush1.bf16.msra.mxu0 0
      %1579 = vmatprep.subr.bf16.mxu0 0
      %1580 = vmatpush1.bf16.msra.mxu0 0
      %1581 = vmatprep.subr.bf16.mxu0 0
      %1582 = vmatpush1.bf16.msra.mxu0 0
      %1583 = vmatprep.mubr.bf16.mxu0 0
      %1584 = vmatmul.mubr.bf16.gmra.mrb[0].mxu0 %v1537
      %v1585 = vpop.f32.mrb[0].mxu0
      %v1586 = vadd.f32 0.0, %v1585
      %v1587 = vpop.f32.mrb[0].mxu0
      %v1588 = vpop.f32.mrb[0].mxu0
      %v1589 = vadd.f32 0.0, %v1588
      %v1590 = vpop.f32.mrb[0].mxu0
      %1591 = vmatprep.mubr.bf16.mxu0 0
      %1592 = vmatmul.mubr.bf16.gmra.mrb[0].mxu0 %v1540
      %v1593 = vpop.f32.mrb[0].mxu0
      %v1594 = vadd.f32 0.0, %v1593
      %v1595 = vpop.f32.mrb[0].mxu0
      %v1596 = vpop.f32.mrb[0].mxu0
      %v1597 = vadd.f32 0.0, %v1596
      %v1598 = vpop.f32.mrb[0].mxu0
      %1599 = vmatprep.mubr.bf16.mxu0 0
      %1600 = vmatmul.mubr.bf16.gmra.mrb[0].mxu0 %v1543
      %v1601 = vpop.f32.mrb[0].mxu0
      %v1602 = vadd.f32 0.0, %v1601
      %v1603 = vpop.f32.mrb[0].mxu0
      %v1604 = vpop.f32.mrb[0].mxu0
      %v1605 = vadd.f32 0.0, %v1604
      %v1606 = vpop.f32.mrb[0].mxu0
      %1607 = vmatprep.mubr.bf16.mxu0 0
      %1608 = vmatmul.mubr.bf16.gmra.mrb[0].mxu0 %v1546
      %v1609 = vpop.f32.mrb[0].mxu0
      %v1610 = vadd.f32 0.0, %v1609
      %v1611 = vpop.f32.mrb[0].mxu0
      %v1612 = vpop.f32.mrb[0].mxu0
      %v1613 = vadd.f32 0.0, %v1612
      %v1614 = vpop.f32.mrb[0].mxu0
      %1615 = vdwg.mxu0
      %v1616 = vadd.f32 %v1450, %v1586
      %v1617 = vadd.f32 %v1451, %v1589
      %v1618 = vadd.f32 %v1452, %v1594
      %v1619 = vadd.f32 %v1453, %v1597
      %v1620 = vadd.f32 %v1454, %v1602
      %v1621 = vadd.f32 %v1455, %v1605
      %v1622 = vadd.f32 %v1456, %v1610
      %v1623 = vadd.f32 %v1457, %v1613
      %v1640 = vrot.slane %v1512, 1
      %v1641 = vrot.slane %v1513, 1
      %v1642 = vsel %vm561, %v1640, %v1641
      %v1643 = vrot.slane %v1514, 1
      %v1644 = vrot.slane %v1515, 1
      %v1645 = vsel %vm561, %v1643, %v1644
      %v1646 = vrot.slane %v1516, 1
      %v1647 = vrot.slane %v1517, 1
      %v1648 = vsel %vm561, %v1646, %v1647
      %v1649 = vrot.slane %v1518, 1
      %v1650 = vrot.slane %v1519, 1
      %v1651 = vsel %vm561, %v1649, %v1650
      %v1652 = vrot.slane %v1520, 1
      %v1653 = vrot.slane %v1521, 1
      %v1654 = vsel %vm561, %v1652, %v1653
      %v1655 = vrot.slane %v1522, 1
      %v1656 = vrot.slane %v1523, 1
      %v1657 = vsel %vm561, %v1655, %v1656
      %v1658 = vrot.slane %v1524, 1
      %v1659 = vrot.slane %v1525, 1
      %v1660 = vsel %vm561, %v1658, %v1659
      %v1661 = vrot.slane %v1526, 1
      %v1662 = vrot.slane %v1527, 1
      %v1663 = vsel %vm561, %v1661, %v1662
      %s1672 = scalar_lea.vmem %s4, 12
      %v1673 = vld [vmem:[%s1672] sm:$0x3]
      %v1674 = vpack.c.bf16 %v1645, %v1642
      %v1675 = vpack.c.bf16 %v1651, %v1648
      %v1676 = vpack.c.bf16 %v1657, %v1654
      %v1677 = vpack.c.bf16 %v1663, %v1660
      %v1679 = vsel %vm600, %v1674, 0
      %v1682 = vsel %vm600, %v1675, 0
      %v1685 = vsel %vm600, %v1676, 0
      %v1688 = vsel %vm600, %v1677, 0
      %v1691 = vsel %vm613, %v1673, 0
      %1693 = vmatprep.subr.bf16.mxu0 0
      %1694 = vmatpush1.bf16.msra.mxu0 %v1691
      %1695 = vmatprep.subr.bf16.mxu0 0
      %1696 = vmatpush1.bf16.msra.mxu0 0
      %1697 = vmatprep.subr.bf16.mxu0 0
      %1698 = vmatpush1.bf16.msra.mxu0 0
      %1699 = vmatprep.subr.bf16.mxu0 0
      %1700 = vmatpush1.bf16.msra.mxu0 0
      %1701 = vmatprep.subr.bf16.mxu0 0
      %1702 = vmatpush1.bf16.msra.mxu0 0
      %1703 = vmatprep.subr.bf16.mxu0 0
      %1704 = vmatpush1.bf16.msra.mxu0 0
      %1705 = vmatprep.subr.bf16.mxu0 0
      %1706 = vmatpush1.bf16.msra.mxu0 0
      %1707 = vmatprep.subr.bf16.mxu0 0
      %1708 = vmatpush1.bf16.msra.mxu0 0
      %1709 = vmatprep.subr.bf16.mxu0 0
      %1710 = vmatpush1.bf16.msra.mxu0 0
      %1711 = vmatprep.subr.bf16.mxu0 0
      %1712 = vmatpush1.bf16.msra.mxu0 0
      %1713 = vmatprep.subr.bf16.mxu0 0
      %1714 = vmatpush1.bf16.msra.mxu0 0
      %1715 = vmatprep.subr.bf16.mxu0 0
      %1716 = vmatpush1.bf16.msra.mxu0 0
      %1717 = vmatprep.subr.bf16.mxu0 0
      %1718 = vmatpush1.bf16.msra.mxu0 0
      %1719 = vmatprep.subr.bf16.mxu0 0
      %1720 = vmatpush1.bf16.msra.mxu0 0
      %1721 = vmatprep.subr.bf16.mxu0 0
      %1722 = vmatpush1.bf16.msra.mxu0 0
      %1723 = vmatprep.subr.bf16.mxu0 0
      %1724 = vmatpush1.bf16.msra.mxu0 0
      %1725 = vmatprep.mubr.bf16.mxu0 0
      %1726 = vmatmul.mubr.bf16.gmra.mrb[0].mxu0 %v1679
      %v1727 = vpop.f32.mrb[0].mxu0
      %v1728 = vadd.f32 0.0, %v1727
      %v1729 = vpop.f32.mrb[0].mxu0
      %v1730 = vpop.f32.mrb[0].mxu0
      %v1731 = vadd.f32 0.0, %v1730
      %v1732 = vpop.f32.mrb[0].mxu0
      %1733 = vmatprep.mubr.bf16.mxu0 0
      %1734 = vmatmul.mubr.bf16.gmra.mrb[0].mxu0 %v1682
      %v1735 = vpop.f32.mrb[0].mxu0
      %v1736 = vadd.f32 0.0, %v1735
      %v1737 = vpop.f32.mrb[0].mxu0
      %v1738 = vpop.f32.mrb[0].mxu0
      %v1739 = vadd.f32 0.0, %v1738
      %v1740 = vpop.f32.mrb[0].mxu0
      %1741 = vmatprep.mubr.bf16.mxu0 0
      %1742 = vmatmul.mubr.bf16.gmra.mrb[0].mxu0 %v1685
      %v1743 = vpop.f32.mrb[0].mxu0
      %v1744 = vadd.f32 0.0, %v1743
      %v1745 = vpop.f32.mrb[0].mxu0
      %v1746 = vpop.f32.mrb[0].mxu0
      %v1747 = vadd.f32 0.0, %v1746
      %v1748 = vpop.f32.mrb[0].mxu0
      %1749 = vmatprep.mubr.bf16.mxu0 0
      %1750 = vmatmul.mubr.bf16.gmra.mrb[0].mxu0 %v1688
      %v1751 = vpop.f32.mrb[0].mxu0
      %v1752 = vadd.f32 0.0, %v1751
      %v1753 = vpop.f32.mrb[0].mxu0
      %v1754 = vpop.f32.mrb[0].mxu0
      %v1755 = vadd.f32 0.0, %v1754
      %v1756 = vpop.f32.mrb[0].mxu0
      %1757 = vdwg.mxu0
      %v1758 = vadd.f32 %v1616, %v1728
      %v1759 = vadd.f32 %v1617, %v1731
      %v1760 = vadd.f32 %v1618, %v1736
      %v1761 = vadd.f32 %v1619, %v1739
      %v1762 = vadd.f32 %v1620, %v1744
      %v1763 = vadd.f32 %v1621, %v1747
      %v1764 = vadd.f32 %v1622, %v1752
      %v1765 = vadd.f32 %v1623, %v1755
      %s1766 = scalar_lea.vmem %s4, 24
      %v1767 = vld [vmem:[%s1766] sm:$0x3]
      %v1768 = vpack.c.bf16 %v1516, %v1514
      %v1769 = vpack.c.bf16 %v1520, %v1518
      %v1770 = vpack.c.bf16 %v1524, %v1522
      %v1771 = vpack.c.bf16 %v1528, %v1526
      %v1773 = vsel %vm600, %v1768, 0
      %v1776 = vsel %vm600, %v1769, 0
      %v1779 = vsel %vm600, %v1770, 0
      %v1782 = vsel %vm600, %v1771, 0
      %v1785 = vsel %vm613, %v1767, 0
      %1787 = vmatprep.subr.bf16.mxu0 0
      %1788 = vmatpush1.bf16.msra.mxu0 %v1785
      %1789 = vmatprep.subr.bf16.mxu0 0
      %1790 = vmatpush1.bf16.msra.mxu0 0
      %1791 = vmatprep.subr.bf16.mxu0 0
      %1792 = vmatpush1.bf16.msra.mxu0 0
      %1793 = vmatprep.subr.bf16.mxu0 0
      %1794 = vmatpush1.bf16.msra.mxu0 0
      %1795 = vmatprep.subr.bf16.mxu0 0
      %1796 = vmatpush1.bf16.msra.mxu0 0
      %1797 = vmatprep.subr.bf16.mxu0 0
      %1798 = vmatpush1.bf16.msra.mxu0 0
      %1799 = vmatprep.subr.bf16.mxu0 0
      %1800 = vmatpush1.bf16.msra.mxu0 0
      %1801 = vmatprep.subr.bf16.mxu0 0
      %1802 = vmatpush1.bf16.msra.mxu0 0
      %1803 = vmatprep.subr.bf16.mxu0 0
      %1804 = vmatpush1.bf16.msra.mxu0 0
      %1805 = vmatprep.subr.bf16.mxu0 0
      %1806 = vmatpush1.bf16.msra.mxu0 0
      %1807 = vmatprep.subr.bf16.mxu0 0
      %1808 = vmatpush1.bf16.msra.mxu0 0
      %1809 = vmatprep.subr.bf16.mxu0 0
      %1810 = vmatpush1.bf16.msra.mxu0 0
      %1811 = vmatprep.subr.bf16.mxu0 0
      %1812 = vmatpush1.bf16.msra.mxu0 0
      %1813 = vmatprep.subr.bf16.mxu0 0
      %1814 = vmatpush1.bf16.msra.mxu0 0
      %1815 = vmatprep.subr.bf16.mxu0 0
      %1816 = vmatpush1.bf16.msra.mxu0 0
      %1817 = vmatprep.subr.bf16.mxu0 0
      %1818 = vmatpush1.bf16.msra.mxu0 0
      %1819 = vmatprep.mubr.bf16.mxu0 0
      %1820 = vmatmul.mubr.bf16.gmra.mrb[0].mxu0 %v1773
      %v1821 = vpop.f32.mrb[0].mxu0
      %v1822 = vadd.f32 0.0, %v1821
      %v1823 = vpop.f32.mrb[0].mxu0
      %v1824 = vpop.f32.mrb[0].mxu0
      %v1825 = vadd.f32 0.0, %v1824
      %v1826 = vpop.f32.mrb[0].mxu0
      %1827 = vmatprep.mubr.bf16.mxu0 0
      %1828 = vmatmul.mubr.bf16.gmra.mrb[0].mxu0 %v1776
      %v1829 = vpop.f32.mrb[0].mxu0
      %v1830 = vadd.f32 0.0, %v1829
      %v1831 = vpop.f32.mrb[0].mxu0
      %v1832 = vpop.f32.mrb[0].mxu0
      %v1833 = vadd.f32 0.0, %v1832
      %v1834 = vpop.f32.mrb[0].mxu0
      %1835 = vmatprep.mubr.bf16.mxu0 0
      %1836 = vmatmul.mubr.bf16.gmra.mrb[0].mxu0 %v1779
      %v1837 = vpop.f32.mrb[0].mxu0
      %v1838 = vadd.f32 0.0, %v1837
      %v1839 = vpop.f32.mrb[0].mxu0
      %v1840 = vpop.f32.mrb[0].mxu0
      %v1841 = vadd.f32 0.0, %v1840
      %v1842 = vpop.f32.mrb[0].mxu0
      %1843 = vmatprep.mubr.bf16.mxu0 0
      %1844 = vmatmul.mubr.bf16.gmra.mrb[0].mxu0 %v1782
      %v1845 = vpop.f32.mrb[0].mxu0
      %v1846 = vadd.f32 0.0, %v1845
      %v1847 = vpop.f32.mrb[0].mxu0
      %v1848 = vpop.f32.mrb[0].mxu0
      %v1849 = vadd.f32 0.0, %v1848
      %v1850 = vpop.f32.mrb[0].mxu0
      %1851 = vdwg.mxu0
      %v1852 = vadd.f32 %v1758, %v1822
      %v1853 = vadd.f32 %v1759, %v1825
      %v1854 = vadd.f32 %v1760, %v1830
      %v1855 = vadd.f32 %v1761, %v1833
      %v1856 = vadd.f32 %v1762, %v1838
      %v1857 = vadd.f32 %v1763, %v1841
      %v1858 = vadd.f32 %v1764, %v1846
      %v1859 = vadd.f32 %v1765, %v1849
      %v1862 = vrot.slane %v1528, 1
      %v1863 = vrot.slane %v1529, 1
      %v1864 = vsel %vm561, %v1862, %v1863
      %s1866 = scalar_lea.vmem %s4, 28
      %v1867 = vld [vmem:[%s1866] sm:$0x3]
      %v1868 = vpack.c.bf16 %v1648, %v1645
      %v1869 = vpack.c.bf16 %v1654, %v1651
      %v1870 = vpack.c.bf16 %v1660, %v1657
      %v1871 = vpack.c.bf16 %v1864, %v1663
      %v1873 = vsel %vm600, %v1868, 0
      %v1876 = vsel %vm600, %v1869, 0
      %v1879 = vsel %vm600, %v1870, 0
      %v1882 = vsel %vm600, %v1871, 0
      %v1885 = vsel %vm613, %v1867, 0
      %1887 = vmatprep.subr.bf16.mxu0 0
      %1888 = vmatpush1.bf16.msra.mxu0 %v1885
      %1889 = vmatprep.subr.bf16.mxu0 0
      %1890 = vmatpush1.bf16.msra.mxu0 0
      %1891 = vmatprep.subr.bf16.mxu0 0
      %1892 = vmatpush1.bf16.msra.mxu0 0
      %1893 = vmatprep.subr.bf16.mxu0 0
      %1894 = vmatpush1.bf16.msra.mxu0 0
      %1895 = vmatprep.subr.bf16.mxu0 0
      %1896 = vmatpush1.bf16.msra.mxu0 0
      %1897 = vmatprep.subr.bf16.mxu0 0
      %1898 = vmatpush1.bf16.msra.mxu0 0
      %1899 = vmatprep.subr.bf16.mxu0 0
      %1900 = vmatpush1.bf16.msra.mxu0 0
      %1901 = vmatprep.subr.bf16.mxu0 0
      %1902 = vmatpush1.bf16.msra.mxu0 0
      %1903 = vmatprep.subr.bf16.mxu0 0
      %1904 = vmatpush1.bf16.msra.mxu0 0
      %1905 = vmatprep.subr.bf16.mxu0 0
      %1906 = vmatpush1.bf16.msra.mxu0 0
      %1907 = vmatprep.subr.bf16.mxu0 0
      %1908 = vmatpush1.bf16.msra.mxu0 0
      %1909 = vmatprep.subr.bf16.mxu0 0
      %1910 = vmatpush1.bf16.msra.mxu0 0
      %1911 = vmatprep.subr.bf16.mxu0 0
      %1912 = vmatpush1.bf16.msra.mxu0 0
      %1913 = vmatprep.subr.bf16.mxu0 0
      %1914 = vmatpush1.bf16.msra.mxu0 0
      %1915 = vmatprep.subr.bf16.mxu0 0
      %1916 = vmatpush1.bf16.msra.mxu0 0
      %1917 = vmatprep.subr.bf16.mxu0 0
      %1918 = vmatpush1.bf16.msra.mxu0 0
      %1919 = vmatprep.mubr.bf16.mxu0 0
      %1920 = vmatmul.mubr.bf16.gmra.mrb[0].mxu0 %v1873
      %v1921 = vpop.f32.mrb[0].mxu0
      %v1922 = vadd.f32 0.0, %v1921
      %v1923 = vpop.f32.mrb[0].mxu0
      %v1924 = vpop.f32.mrb[0].mxu0
      %v1925 = vadd.f32 0.0, %v1924
      %v1926 = vpop.f32.mrb[0].mxu0
      %1927 = vmatprep.mubr.bf16.mxu0 0
      %1928 = vmatmul.mubr.bf16.gmra.mrb[0].mxu0 %v1876
      %v1929 = vpop.f32.mrb[0].mxu0
      %v1930 = vadd.f32 0.0, %v1929
      %v1931 = vpop.f32.mrb[0].mxu0
      %v1932 = vpop.f32.mrb[0].mxu0
      %v1933 = vadd.f32 0.0, %v1932
      %v1934 = vpop.f32.mrb[0].mxu0
      %1935 = vmatprep.mubr.bf16.mxu0 0
      %1936 = vmatmul.mubr.bf16.gmra.mrb[0].mxu0 %v1879
      %v1937 = vpop.f32.mrb[0].mxu0
      %v1938 = vadd.f32 0.0, %v1937
      %v1939 = vpop.f32.mrb[0].mxu0
      %v1940 = vpop.f32.mrb[0].mxu0
      %v1941 = vadd.f32 0.0, %v1940
      %v1942 = vpop.f32.mrb[0].mxu0
      %1943 = vmatprep.mubr.bf16.mxu0 0
      %1944 = vmatmul.mubr.bf16.gmra.mrb[0].mxu0 %v1882
      %v1945 = vpop.f32.mrb[0].mxu0
      %v1946 = vadd.f32 0.0, %v1945
      %v1947 = vpop.f32.mrb[0].mxu0
      %v1948 = vpop.f32.mrb[0].mxu0
      %v1949 = vadd.f32 0.0, %v1948
      %v1950 = vpop.f32.mrb[0].mxu0
      %1951 = vdwg.mxu0
      %v1952 = vadd.f32 %v1852, %v1922
      %v1953 = vadd.f32 %v1853, %v1925
      %v1954 = vadd.f32 %v1854, %v1930
      %v1955 = vadd.f32 %v1855, %v1933
      %v1956 = vadd.f32 %v1856, %v1938
      %v1957 = vadd.f32 %v1857, %v1941
      %v1958 = vadd.f32 %v1858, %v1946
      %v1959 = vadd.f32 %v1859, %v1949
      %v1960 = vld [vmem:[%s442] sm:$0xff]
      %v1961 = vld [vmem:[%s442 + $0x8] sm:$0x1]
      %v1962 = vld [vmem:[%s442 + $0x10] sm:$0xff]
      %v1963 = vld [vmem:[%s442 + $0x18] sm:$0x1]
      %v1964 = vld [vmem:[%s442 + $0x20] sm:$0xff]
      %v1965 = vld [vmem:[%s442 + $0x28] sm:$0x1]
      %v1966 = vld [vmem:[%s442 + $0x30] sm:$0xff]
      %v1967 = vld [vmem:[%s442 + $0x38] sm:$0x1]
      %v1968 = vld [vmem:[%s442 + $0x40] sm:$0xff]
      %v1969 = vld [vmem:[%s442 + $0x48] sm:$0x1]
      %v1970 = vld [vmem:[%s442 + $0x50] sm:$0xff]
      %v1971 = vld [vmem:[%s442 + $0x58] sm:$0x1]
      %v1972 = vld [vmem:[%s442 + $0x60] sm:$0xff]
      %v1973 = vld [vmem:[%s442 + $0x68] sm:$0x1]
      %v1974 = vld [vmem:[%s442 + $0x70] sm:$0xff]
      %v1975 = vld [vmem:[%s442 + $0x78] sm:$0x1]
      %v1976 = vld [vmem:[%s442 + $0x80] sm:$0xff]
      %v1977 = vld [vmem:[%s442 + $0x88] sm:$0x1]
      %vm1978 = vcmp.ge.f32.partialorder %v1960, 0.0
      %vm1979 = vcmp.ge.f32.partialorder %v1961, 0.0
      %vm1980 = vcmp.ge.f32.partialorder %v1962, 0.0
      %vm1981 = vcmp.ge.f32.partialorder %v1963, 0.0
      %vm1982 = vcmp.ge.f32.partialorder %v1964, 0.0
      %vm1983 = vcmp.ge.f32.partialorder %v1965, 0.0
      %vm1984 = vcmp.ge.f32.partialorder %v1966, 0.0
      %vm1985 = vcmp.ge.f32.partialorder %v1967, 0.0
      %vm1986 = vcmp.ge.f32.partialorder %v1968, 0.0
      %vm1987 = vcmp.ge.f32.partialorder %v1969, 0.0
      %vm1988 = vcmp.ge.f32.partialorder %v1970, 0.0
      %vm1989 = vcmp.ge.f32.partialorder %v1971, 0.0
      %vm1990 = vcmp.ge.f32.partialorder %v1972, 0.0
      %vm1991 = vcmp.ge.f32.partialorder %v1973, 0.0
      %vm1992 = vcmp.ge.f32.partialorder %v1974, 0.0
      %vm1993 = vcmp.ge.f32.partialorder %v1975, 0.0
      %vm1994 = vcmp.ge.f32.partialorder %v1976, 0.0
      %vm1995 = vcmp.ge.f32.partialorder %v1977, 0.0
      %v1996 = vmul.f32 %v1960, 0.2
      %v1997 = vmul.f32 %v1961, 0.2
      %v1998 = vmul.f32 %v1962, 0.2
      %v1999 = vmul.f32 %v1963, 0.2
      %v2000 = vmul.f32 %v1964, 0.2
      %v2001 = vmul.f32 %v1965, 0.2
      %v2002 = vmul.f32 %v1966, 0.2
      %v2003 = vmul.f32 %v1967, 0.2
      %v2004 = vmul.f32 %v1968, 0.2
      %v2005 = vmul.f32 %v1969, 0.2
      %v2006 = vmul.f32 %v1970, 0.2
      %v2007 = vmul.f32 %v1971, 0.2
      %v2008 = vmul.f32 %v1972, 0.2
      %v2009 = vmul.f32 %v1973, 0.2
      %v2010 = vmul.f32 %v1974, 0.2
      %v2011 = vmul.f32 %v1975, 0.2
      %v2012 = vmul.f32 %v1976, 0.2
      %v2013 = vmul.f32 %v1977, 0.2
      %v2014 = vsel %vm1978, %v1960, %v1996
      %v2015 = vsel %vm1979, %v1961, %v1997
      %v2016 = vsel %vm1980, %v1962, %v1998
      %v2017 = vsel %vm1981, %v1963, %v1999
      %v2018 = vsel %vm1982, %v1964, %v2000
      %v2019 = vsel %vm1983, %v1965, %v2001
      %v2020 = vsel %vm1984, %v1966, %v2002
      %v2021 = vsel %vm1985, %v1967, %v2003
      %v2022 = vsel %vm1986, %v1968, %v2004
      %v2023 = vsel %vm1987, %v1969, %v2005
      %v2024 = vsel %vm1988, %v1970, %v2006
      %v2025 = vsel %vm1989, %v1971, %v2007
      %v2026 = vsel %vm1990, %v1972, %v2008
      %v2027 = vsel %vm1991, %v1973, %v2009
      %v2028 = vsel %vm1992, %v1974, %v2010
      %v2029 = vsel %vm1993, %v1975, %v2011
      %v2030 = vsel %vm1994, %v1976, %v2012
      %v2031 = vsel %vm1995, %v1977, %v2013
      %s2032 = scalar_lea.vmem %s4, 10
      %v2033 = vld [vmem:[%s2032] sm:$0x3]
      %v2034 = vpack.c.bf16 %v2016, %v2014
      %v2035 = vpack.c.bf16 %v2020, %v2018
      %v2036 = vpack.c.bf16 %v2024, %v2022
      %v2037 = vpack.c.bf16 %v2028, %v2026
      %v2039 = vsel %vm600, %v2034, 0
      %v2042 = vsel %vm600, %v2035, 0
      %v2045 = vsel %vm600, %v2036, 0
      %v2048 = vsel %vm600, %v2037, 0
      %v2051 = vsel %vm613, %v2033, 0
      %2053 = vmatprep.subr.bf16.mxu0 0
      %2054 = vmatpush1.bf16.msra.mxu0 %v2051
      %2055 = vmatprep.subr.bf16.mxu0 0
      %2056 = vmatpush1.bf16.msra.mxu0 0
      %2057 = vmatprep.subr.bf16.mxu0 0
      %2058 = vmatpush1.bf16.msra.mxu0 0
      %2059 = vmatprep.subr.bf16.mxu0 0
      %2060 = vmatpush1.bf16.msra.mxu0 0
      %2061 = vmatprep.subr.bf16.mxu0 0
      %2062 = vmatpush1.bf16.msra.mxu0 0
      %2063 = vmatprep.subr.bf16.mxu0 0
      %2064 = vmatpush1.bf16.msra.mxu0 0
      %2065 = vmatprep.subr.bf16.mxu0 0
      %2066 = vmatpush1.bf16.msra.mxu0 0
      %2067 = vmatprep.subr.bf16.mxu0 0
      %2068 = vmatpush1.bf16.msra.mxu0 0
      %2069 = vmatprep.subr.bf16.mxu0 0
      %2070 = vmatpush1.bf16.msra.mxu0 0
      %2071 = vmatprep.subr.bf16.mxu0 0
      %2072 = vmatpush1.bf16.msra.mxu0 0
      %2073 = vmatprep.subr.bf16.mxu0 0
      %2074 = vmatpush1.bf16.msra.mxu0 0
      %2075 = vmatprep.subr.bf16.mxu0 0
      %2076 = vmatpush1.bf16.msra.mxu0 0
      %2077 = vmatprep.subr.bf16.mxu0 0
      %2078 = vmatpush1.bf16.msra.mxu0 0
      %2079 = vmatprep.subr.bf16.mxu0 0
      %2080 = vmatpush1.bf16.msra.mxu0 0
      %2081 = vmatprep.subr.bf16.mxu0 0
      %2082 = vmatpush1.bf16.msra.mxu0 0
      %2083 = vmatprep.subr.bf16.mxu0 0
      %2084 = vmatpush1.bf16.msra.mxu0 0
      %2085 = vmatprep.mubr.bf16.mxu0 0
      %2086 = vmatmul.mubr.bf16.gmra.mrb[0].mxu0 %v2039
      %v2087 = vpop.f32.mrb[0].mxu0
      %v2088 = vadd.f32 0.0, %v2087
      %v2089 = vpop.f32.mrb[0].mxu0
      %v2090 = vpop.f32.mrb[0].mxu0
      %v2091 = vadd.f32 0.0, %v2090
      %v2092 = vpop.f32.mrb[0].mxu0
      %2093 = vmatprep.mubr.bf16.mxu0 0
      %2094 = vmatmul.mubr.bf16.gmra.mrb[0].mxu0 %v2042
      %v2095 = vpop.f32.mrb[0].mxu0
      %v2096 = vadd.f32 0.0, %v2095
      %v2097 = vpop.f32.mrb[0].mxu0
      %v2098 = vpop.f32.mrb[0].mxu0
      %v2099 = vadd.f32 0.0, %v2098
      %v2100 = vpop.f32.mrb[0].mxu0
      %2101 = vmatprep.mubr.bf16.mxu0 0
      %2102 = vmatmul.mubr.bf16.gmra.mrb[0].mxu0 %v2045
      %v2103 = vpop.f32.mrb[0].mxu0
      %v2104 = vadd.f32 0.0, %v2103
      %v2105 = vpop.f32.mrb[0].mxu0
      %v2106 = vpop.f32.mrb[0].mxu0
      %v2107 = vadd.f32 0.0, %v2106
      %v2108 = vpop.f32.mrb[0].mxu0
      %2109 = vmatprep.mubr.bf16.mxu0 0
      %2110 = vmatmul.mubr.bf16.gmra.mrb[0].mxu0 %v2048
      %v2111 = vpop.f32.mrb[0].mxu0
      %v2112 = vadd.f32 0.0, %v2111
      %v2113 = vpop.f32.mrb[0].mxu0
      %v2114 = vpop.f32.mrb[0].mxu0
      %v2115 = vadd.f32 0.0, %v2114
      %v2116 = vpop.f32.mrb[0].mxu0
      %2117 = vdwg.mxu0
      %v2118 = vadd.f32 %v1952, %v2088
      %v2119 = vadd.f32 %v1953, %v2091
      %v2120 = vadd.f32 %v1954, %v2096
      %v2121 = vadd.f32 %v1955, %v2099
      %v2122 = vadd.f32 %v1956, %v2104
      %v2123 = vadd.f32 %v1957, %v2107
      %v2124 = vadd.f32 %v1958, %v2112
      %v2125 = vadd.f32 %v1959, %v2115
      %v2142 = vrot.slane %v2014, 1
      %v2143 = vrot.slane %v2015, 1
      %v2144 = vsel %vm561, %v2142, %v2143
      %v2145 = vrot.slane %v2016, 1
      %v2146 = vrot.slane %v2017, 1
      %v2147 = vsel %vm561, %v2145, %v2146
      %v2148 = vrot.slane %v2018, 1
      %v2149 = vrot.slane %v2019, 1
      %v2150 = vsel %vm561, %v2148, %v2149
      %v2151 = vrot.slane %v2020, 1
      %v2152 = vrot.slane %v2021, 1
      %v2153 = vsel %vm561, %v2151, %v2152
      %v2154 = vrot.slane %v2022, 1
      %v2155 = vrot.slane %v2023, 1
      %v2156 = vsel %vm561, %v2154, %v2155
      %v2157 = vrot.slane %v2024, 1
      %v2158 = vrot.slane %v2025, 1
      %v2159 = vsel %vm561, %v2157, %v2158
      %v2160 = vrot.slane %v2026, 1
      %v2161 = vrot.slane %v2027, 1
      %v2162 = vsel %vm561, %v2160, %v2161
      %v2163 = vrot.slane %v2028, 1
      %v2164 = vrot.slane %v2029, 1
      %v2165 = vsel %vm561, %v2163, %v2164
      %s2174 = scalar_lea.vmem %s4, 14
      %v2175 = vld [vmem:[%s2174] sm:$0x3]
      %v2176 = vpack.c.bf16 %v2147, %v2144
      %v2177 = vpack.c.bf16 %v2153, %v2150
      %v2178 = vpack.c.bf16 %v2159, %v2156
      %v2179 = vpack.c.bf16 %v2165, %v2162
      %v2181 = vsel %vm600, %v2176, 0
      %v2184 = vsel %vm600, %v2177, 0
      %v2187 = vsel %vm600, %v2178, 0
      %v2190 = vsel %vm600, %v2179, 0
      %v2193 = vsel %vm613, %v2175, 0
      %2195 = vmatprep.subr.bf16.mxu0 0
      %2196 = vmatpush1.bf16.msra.mxu0 %v2193
      %2197 = vmatprep.subr.bf16.mxu0 0
      %2198 = vmatpush1.bf16.msra.mxu0 0
      %2199 = vmatprep.subr.bf16.mxu0 0
      %2200 = vmatpush1.bf16.msra.mxu0 0
      %2201 = vmatprep.subr.bf16.mxu0 0
      %2202 = vmatpush1.bf16.msra.mxu0 0
      %2203 = vmatprep.subr.bf16.mxu0 0
      %2204 = vmatpush1.bf16.msra.mxu0 0
      %2205 = vmatprep.subr.bf16.mxu0 0
      %2206 = vmatpush1.bf16.msra.mxu0 0
      %2207 = vmatprep.subr.bf16.mxu0 0
      %2208 = vmatpush1.bf16.msra.mxu0 0
      %2209 = vmatprep.subr.bf16.mxu0 0
      %2210 = vmatpush1.bf16.msra.mxu0 0
      %2211 = vmatprep.subr.bf16.mxu0 0
      %2212 = vmatpush1.bf16.msra.mxu0 0
      %2213 = vmatprep.subr.bf16.mxu0 0
      %2214 = vmatpush1.bf16.msra.mxu0 0
      %2215 = vmatprep.subr.bf16.mxu0 0
      %2216 = vmatpush1.bf16.msra.mxu0 0
      %2217 = vmatprep.subr.bf16.mxu0 0
      %2218 = vmatpush1.bf16.msra.mxu0 0
      %2219 = vmatprep.subr.bf16.mxu0 0
      %2220 = vmatpush1.bf16.msra.mxu0 0
      %2221 = vmatprep.subr.bf16.mxu0 0
      %2222 = vmatpush1.bf16.msra.mxu0 0
      %2223 = vmatprep.subr.bf16.mxu0 0
      %2224 = vmatpush1.bf16.msra.mxu0 0
      %2225 = vmatprep.subr.bf16.mxu0 0
      %2226 = vmatpush1.bf16.msra.mxu0 0
      %2227 = vmatprep.mubr.bf16.mxu0 0
      %2228 = vmatmul.mubr.bf16.gmra.mrb[0].mxu0 %v2181
      %v2229 = vpop.f32.mrb[0].mxu0
      %v2230 = vadd.f32 0.0, %v2229
      %v2231 = vpop.f32.mrb[0].mxu0
      %v2232 = vpop.f32.mrb[0].mxu0
      %v2233 = vadd.f32 0.0, %v2232
      %v2234 = vpop.f32.mrb[0].mxu0
      %2235 = vmatprep.mubr.bf16.mxu0 0
      %2236 = vmatmul.mubr.bf16.gmra.mrb[0].mxu0 %v2184
      %v2237 = vpop.f32.mrb[0].mxu0
      %v2238 = vadd.f32 0.0, %v2237
      %v2239 = vpop.f32.mrb[0].mxu0
      %v2240 = vpop.f32.mrb[0].mxu0
      %v2241 = vadd.f32 0.0, %v2240
      %v2242 = vpop.f32.mrb[0].mxu0
      %2243 = vmatprep.mubr.bf16.mxu0 0
      %2244 = vmatmul.mubr.bf16.gmra.mrb[0].mxu0 %v2187
      %v2245 = vpop.f32.mrb[0].mxu0
      %v2246 = vadd.f32 0.0, %v2245
      %v2247 = vpop.f32.mrb[0].mxu0
      %v2248 = vpop.f32.mrb[0].mxu0
      %v2249 = vadd.f32 0.0, %v2248
      %v2250 = vpop.f32.mrb[0].mxu0
      %2251 = vmatprep.mubr.bf16.mxu0 0
      %2252 = vmatmul.mubr.bf16.gmra.mrb[0].mxu0 %v2190
      %v2253 = vpop.f32.mrb[0].mxu0
      %v2254 = vadd.f32 0.0, %v2253
      %v2255 = vpop.f32.mrb[0].mxu0
      %v2256 = vpop.f32.mrb[0].mxu0
      %v2257 = vadd.f32 0.0, %v2256
      %v2258 = vpop.f32.mrb[0].mxu0
      %2259 = vdwg.mxu0
      %v2260 = vadd.f32 %v2118, %v2230
      %v2261 = vadd.f32 %v2119, %v2233
      %v2262 = vadd.f32 %v2120, %v2238
      %v2263 = vadd.f32 %v2121, %v2241
      %v2264 = vadd.f32 %v2122, %v2246
      %v2265 = vadd.f32 %v2123, %v2249
      %v2266 = vadd.f32 %v2124, %v2254
      %v2267 = vadd.f32 %v2125, %v2257
      %s2268 = scalar_lea.vmem %s4, 26
      %v2269 = vld [vmem:[%s2268] sm:$0x3]
      %v2270 = vpack.c.bf16 %v2018, %v2016
      %v2271 = vpack.c.bf16 %v2022, %v2020
      %v2272 = vpack.c.bf16 %v2026, %v2024
      %v2273 = vpack.c.bf16 %v2030, %v2028
      %v2275 = vsel %vm600, %v2270, 0
      %v2278 = vsel %vm600, %v2271, 0
      %v2281 = vsel %vm600, %v2272, 0
      %v2284 = vsel %vm600, %v2273, 0
      %v2287 = vsel %vm613, %v2269, 0
      %2289 = vmatprep.subr.bf16.mxu0 0
      %2290 = vmatpush1.bf16.msra.mxu0 %v2287
      %2291 = vmatprep.subr.bf16.mxu0 0
      %2292 = vmatpush1.bf16.msra.mxu0 0
      %2293 = vmatprep.subr.bf16.mxu0 0
      %2294 = vmatpush1.bf16.msra.mxu0 0
      %2295 = vmatprep.subr.bf16.mxu0 0
      %2296 = vmatpush1.bf16.msra.mxu0 0
      %2297 = vmatprep.subr.bf16.mxu0 0
      %2298 = vmatpush1.bf16.msra.mxu0 0
      %2299 = vmatprep.subr.bf16.mxu0 0
      %2300 = vmatpush1.bf16.msra.mxu0 0
      %2301 = vmatprep.subr.bf16.mxu0 0
      %2302 = vmatpush1.bf16.msra.mxu0 0
      %2303 = vmatprep.subr.bf16.mxu0 0
      %2304 = vmatpush1.bf16.msra.mxu0 0
      %2305 = vmatprep.subr.bf16.mxu0 0
      %2306 = vmatpush1.bf16.msra.mxu0 0
      %2307 = vmatprep.subr.bf16.mxu0 0
      %2308 = vmatpush1.bf16.msra.mxu0 0
      %2309 = vmatprep.subr.bf16.mxu0 0
      %2310 = vmatpush1.bf16.msra.mxu0 0
      %2311 = vmatprep.subr.bf16.mxu0 0
      %2312 = vmatpush1.bf16.msra.mxu0 0
      %2313 = vmatprep.subr.bf16.mxu0 0
      %2314 = vmatpush1.bf16.msra.mxu0 0
      %2315 = vmatprep.subr.bf16.mxu0 0
      %2316 = vmatpush1.bf16.msra.mxu0 0
      %2317 = vmatprep.subr.bf16.mxu0 0
      %2318 = vmatpush1.bf16.msra.mxu0 0
      %2319 = vmatprep.subr.bf16.mxu0 0
      %2320 = vmatpush1.bf16.msra.mxu0 0
      %2321 = vmatprep.mubr.bf16.mxu0 0
      %2322 = vmatmul.mubr.bf16.gmra.mrb[0].mxu0 %v2275
      %v2323 = vpop.f32.mrb[0].mxu0
      %v2324 = vadd.f32 0.0, %v2323
      %v2325 = vpop.f32.mrb[0].mxu0
      %v2326 = vpop.f32.mrb[0].mxu0
      %v2327 = vadd.f32 0.0, %v2326
      %v2328 = vpop.f32.mrb[0].mxu0
      %2329 = vmatprep.mubr.bf16.mxu0 0
      %2330 = vmatmul.mubr.bf16.gmra.mrb[0].mxu0 %v2278
      %v2331 = vpop.f32.mrb[0].mxu0
      %v2332 = vadd.f32 0.0, %v2331
      %v2333 = vpop.f32.mrb[0].mxu0
      %v2334 = vpop.f32.mrb[0].mxu0
      %v2335 = vadd.f32 0.0, %v2334
      %v2336 = vpop.f32.mrb[0].mxu0
      %2337 = vmatprep.mubr.bf16.mxu0 0
      %2338 = vmatmul.mubr.bf16.gmra.mrb[0].mxu0 %v2281
      %v2339 = vpop.f32.mrb[0].mxu0
      %v2340 = vadd.f32 0.0, %v2339
      %v2341 = vpop.f32.mrb[0].mxu0
      %v2342 = vpop.f32.mrb[0].mxu0
      %v2343 = vadd.f32 0.0, %v2342
      %v2344 = vpop.f32.mrb[0].mxu0
      %2345 = vmatprep.mubr.bf16.mxu0 0
      %2346 = vmatmul.mubr.bf16.gmra.mrb[0].mxu0 %v2284
      %v2347 = vpop.f32.mrb[0].mxu0
      %v2348 = vadd.f32 0.0, %v2347
      %v2349 = vpop.f32.mrb[0].mxu0
      %v2350 = vpop.f32.mrb[0].mxu0
      %v2351 = vadd.f32 0.0, %v2350
      %v2352 = vpop.f32.mrb[0].mxu0
      %2353 = vdwg.mxu0
      %v2354 = vadd.f32 %v2260, %v2324
      %v2355 = vadd.f32 %v2261, %v2327
      %v2356 = vadd.f32 %v2262, %v2332
      %v2357 = vadd.f32 %v2263, %v2335
      %v2358 = vadd.f32 %v2264, %v2340
      %v2359 = vadd.f32 %v2265, %v2343
      %v2360 = vadd.f32 %v2266, %v2348
      %v2361 = vadd.f32 %v2267, %v2351
      %v2364 = vrot.slane %v2030, 1
      %v2365 = vrot.slane %v2031, 1
      %v2366 = vsel %vm561, %v2364, %v2365
      %s2368 = scalar_lea.vmem %s4, 30
      %v2369 = vld [vmem:[%s2368] sm:$0x3]
      %v2370 = vpack.c.bf16 %v2150, %v2147
      %v2371 = vpack.c.bf16 %v2156, %v2153
      %v2372 = vpack.c.bf16 %v2162, %v2159
      %v2373 = vpack.c.bf16 %v2366, %v2165
      %v2375 = vsel %vm600, %v2370, 0
      %v2378 = vsel %vm600, %v2371, 0
      %v2381 = vsel %vm600, %v2372, 0
      %v2384 = vsel %vm600, %v2373, 0
      %v2387 = vsel %vm613, %v2369, 0
      %2389 = vmatprep.subr.bf16.mxu0 0
      %2390 = vmatpush1.bf16.msra.mxu0 %v2387
      %2391 = vmatprep.subr.bf16.mxu0 0
      %2392 = vmatpush1.bf16.msra.mxu0 0
      %2393 = vmatprep.subr.bf16.mxu0 0
      %2394 = vmatpush1.bf16.msra.mxu0 0
      %2395 = vmatprep.subr.bf16.mxu0 0
      %2396 = vmatpush1.bf16.msra.mxu0 0
      %2397 = vmatprep.subr.bf16.mxu0 0
      %2398 = vmatpush1.bf16.msra.mxu0 0
      %2399 = vmatprep.subr.bf16.mxu0 0
      %2400 = vmatpush1.bf16.msra.mxu0 0
      %2401 = vmatprep.subr.bf16.mxu0 0
      %2402 = vmatpush1.bf16.msra.mxu0 0
      %2403 = vmatprep.subr.bf16.mxu0 0
      %2404 = vmatpush1.bf16.msra.mxu0 0
      %2405 = vmatprep.subr.bf16.mxu0 0
      %2406 = vmatpush1.bf16.msra.mxu0 0
      %2407 = vmatprep.subr.bf16.mxu0 0
      %2408 = vmatpush1.bf16.msra.mxu0 0
      %2409 = vmatprep.subr.bf16.mxu0 0
      %2410 = vmatpush1.bf16.msra.mxu0 0
      %2411 = vmatprep.subr.bf16.mxu0 0
      %2412 = vmatpush1.bf16.msra.mxu0 0
      %2413 = vmatprep.subr.bf16.mxu0 0
      %2414 = vmatpush1.bf16.msra.mxu0 0
      %2415 = vmatprep.subr.bf16.mxu0 0
      %2416 = vmatpush1.bf16.msra.mxu0 0
      %2417 = vmatprep.subr.bf16.mxu0 0
      %2418 = vmatpush1.bf16.msra.mxu0 0
      %2419 = vmatprep.subr.bf16.mxu0 0
      %2420 = vmatpush1.bf16.msra.mxu0 0
      %2421 = vmatprep.mubr.bf16.mxu0 0
      %2422 = vmatmul.mubr.bf16.gmra.mrb[0].mxu0 %v2375
      %v2423 = vpop.f32.mrb[0].mxu0
      %v2424 = vadd.f32 0.0, %v2423
      %v2425 = vpop.f32.mrb[0].mxu0
      %v2426 = vpop.f32.mrb[0].mxu0
      %v2427 = vadd.f32 0.0, %v2426
      %v2428 = vpop.f32.mrb[0].mxu0
      %2429 = vmatprep.mubr.bf16.mxu0 0
      %2430 = vmatmul.mubr.bf16.gmra.mrb[0].mxu0 %v2378
      %v2431 = vpop.f32.mrb[0].mxu0
      %v2432 = vadd.f32 0.0, %v2431
      %v2433 = vpop.f32.mrb[0].mxu0
      %v2434 = vpop.f32.mrb[0].mxu0
      %v2435 = vadd.f32 0.0, %v2434
      %v2436 = vpop.f32.mrb[0].mxu0
      %2437 = vmatprep.mubr.bf16.mxu0 0
      %2438 = vmatmul.mubr.bf16.gmra.mrb[0].mxu0 %v2381
      %v2439 = vpop.f32.mrb[0].mxu0
      %v2440 = vadd.f32 0.0, %v2439
      %v2441 = vpop.f32.mrb[0].mxu0
      %v2442 = vpop.f32.mrb[0].mxu0
      %v2443 = vadd.f32 0.0, %v2442
      %v2444 = vpop.f32.mrb[0].mxu0
      %2445 = vmatprep.mubr.bf16.mxu0 0
      %2446 = vmatmul.mubr.bf16.gmra.mrb[0].mxu0 %v2384
      %v2447 = vpop.f32.mrb[0].mxu0
      %v2448 = vadd.f32 0.0, %v2447
      %v2449 = vpop.f32.mrb[0].mxu0
      %v2450 = vpop.f32.mrb[0].mxu0
      %v2451 = vadd.f32 0.0, %v2450
      %v2452 = vpop.f32.mrb[0].mxu0
      %2453 = vdwg.mxu0
      %v2454 = vadd.f32 %v2354, %v2424
      %v2455 = vadd.f32 %v2355, %v2427
      %v2456 = vadd.f32 %v2356, %v2432
      %v2457 = vadd.f32 %v2357, %v2435
      %v2458 = vadd.f32 %v2358, %v2440
      %v2459 = vadd.f32 %v2359, %v2443
      %v2460 = vadd.f32 %v2360, %v2448
      %v2461 = vadd.f32 %v2361, %v2451
      %v2462 = vmax.f32 %v2454, 0.0
      %v2463 = vmax.f32 %v2455, 0.0
      %v2464 = vmax.f32 %v2456, 0.0
      %v2465 = vmax.f32 %v2457, 0.0
      %v2466 = vmax.f32 %v2458, 0.0
      %v2467 = vmax.f32 %v2459, 0.0
      %v2468 = vmax.f32 %v2460, 0.0
      %v2469 = vmax.f32 %v2461, 0.0
      %vm2470 = vcmask 64512
      %2471 = vst.msk [vmem:[#allocation2] sm:$0xff] %vm2470, 0.0
      %vm2472 = vcmask 58368
      %2473 = vst.msk [vmem:[#allocation2 + $0x8] sm:$0x3] %vm2472, 0.0
      %2474 = vst.msk [vmem:[#allocation2 + $0x10] sm:$0xff] %vm2470, 0.0
      %2475 = vst.msk [vmem:[#allocation2 + $0x18] sm:$0x3] %vm2472, 0.0
      %2476 = vst.msk [vmem:[#allocation2 + $0x20] sm:$0xff] %vm2470, 0.0
      %2477 = vst.msk [vmem:[#allocation2 + $0x28] sm:$0x3] %vm2472, 0.0
      %2478 = vst.msk [vmem:[#allocation2 + $0x30] sm:$0xff] %vm2470, 0.0
      %2479 = vst.msk [vmem:[#allocation2 + $0x38] sm:$0x3] %vm2472, 0.0
      %2480 = vst.msk [vmem:[#allocation2 + $0x40] sm:$0xff] %vm2470, 0.0
      %2481 = vst.msk [vmem:[#allocation2 + $0x48] sm:$0x3] %vm2472, 0.0
      %2482 = vst.msk [vmem:[#allocation2 + $0x50] sm:$0xff] %vm2470, 0.0
      %2483 = vst.msk [vmem:[#allocation2 + $0x58] sm:$0x3] %vm2472, 0.0
      %2484 = vst.msk [vmem:[#allocation2 + $0x60] sm:$0xff] %vm2470, 0.0
      %2485 = vst.msk [vmem:[#allocation2 + $0x68] sm:$0x3] %vm2472, 0.0
      %2486 = vst.msk [vmem:[#allocation2 + $0x70] sm:$0xff] %vm2470, 0.0
      %2487 = vst.msk [vmem:[#allocation2 + $0x78] sm:$0x3] %vm2472, 0.0
      %2488 = vst.msk [vmem:[#allocation2 + $0x80] sm:$0xff] %vm2470, 0.0
      %2489 = vst.msk [vmem:[#allocation2 + $0x88] sm:$0x3] %vm2472, 0.0
      %2490 = vst.msk [vmem:[#allocation2 + $0x90] sm:$0xff] %vm2470, 0.0
      %2491 = vst.msk [vmem:[#allocation2 + $0x98] sm:$0x3] %vm2472, 0.0
      %s2492 = scalar_lea.vmem [#allocation2], 16
      %2493 = vst.msk [vmem:[%s2492 + $0x1] sm:$0xff] %vm2470, %v2462
      %2494 = vst.msk [vmem:[%s2492 + $0x11] sm:$0xff] %vm2470, %v2463
      %2495 = vst.msk [vmem:[%s2492 + $0x21] sm:$0xff] %vm2470, %v2464
      %2496 = vst.msk [vmem:[%s2492 + $0x31] sm:$0xff] %vm2470, %v2465
      %2497 = vst.msk [vmem:[%s2492 + $0x41] sm:$0xff] %vm2470, %v2466
      %2498 = vst.msk [vmem:[%s2492 + $0x51] sm:$0xff] %vm2470, %v2467
      %2499 = vst.msk [vmem:[%s2492 + $0x61] sm:$0xff] %vm2470, %v2468
      %2500 = vst.msk [vmem:[%s2492 + $0x71] sm:$0xff] %vm2470, %v2469
      %v2501 = vld [vmem:[#allocation2] sm:$0xff]
      %v2502 = vld [vmem:[#allocation2 + $0x10] sm:$0xff]
      %v2503 = vld [vmem:[#allocation2 + $0x20] sm:$0xff]
      %v2504 = vld [vmem:[#allocation2 + $0x30] sm:$0xff]
      %v2505 = vld [vmem:[#allocation2 + $0x40] sm:$0xff]
      %v2506 = vld [vmem:[#allocation2 + $0x50] sm:$0xff]
      %v2507 = vld [vmem:[#allocation2 + $0x60] sm:$0xff]
      %v2508 = vld [vmem:[#allocation2 + $0x70] sm:$0xff]
      %v2509 = vld [vmem:[%s5] sm:$0xf]
      %v2510 = vpack.c.bf16 %v2502, %v2501
      %v2511 = vpack.c.bf16 %v2504, %v2503
      %v2512 = vpack.c.bf16 %v2506, %v2505
      %v2513 = vpack.c.bf16 %v2508, %v2507
      %v2514 = vld [vmem:[#allocation2 + $0x1] sm:$0xff]
      %v2515 = vld [vmem:[#allocation2 + $0x11] sm:$0xff]
      %v2516 = vld [vmem:[#allocation2 + $0x21] sm:$0xff]
      %v2517 = vld [vmem:[#allocation2 + $0x31] sm:$0xff]
      %v2518 = vld [vmem:[#allocation2 + $0x41] sm:$0xff]
      %v2519 = vld [vmem:[#allocation2 + $0x51] sm:$0xff]
      %v2520 = vld [vmem:[#allocation2 + $0x61] sm:$0xff]
      %v2521 = vld [vmem:[#allocation2 + $0x71] sm:$0xff]
      %s2522 = scalar_lea.vmem %s5, 4
      %v2523 = vld [vmem:[%s2522] sm:$0xf]
      %v2524 = vpack.c.bf16 %v2515, %v2514
      %v2525 = vpack.c.bf16 %v2517, %v2516
      %v2526 = vpack.c.bf16 %v2519, %v2518
      %v2527 = vpack.c.bf16 %v2521, %v2520
      %v2529 = vsel %vm2470, %v2524, 0
      %v2532 = vsel %vm2470, %v2525, 0
      %v2535 = vsel %vm2470, %v2526, 0
      %v2538 = vsel %vm2470, %v2527, 0
      %vm2540 = vcmask 1043456
      %v2542 = vsel %vm2540, %v2523, 0
      %2544 = vmatprep.subr.bf16.mxu0 0
      %2545 = vmatpush1.bf16.msra.mxu0 %v2542
      %2546 = vmatprep.subr.bf16.mxu0 0
      %2547 = vmatpush1.bf16.msra.mxu0 0
      %2548 = vmatprep.subr.bf16.mxu0 0
      %2549 = vmatpush1.bf16.msra.mxu0 0
      %2550 = vmatprep.subr.bf16.mxu0 0
      %2551 = vmatpush1.bf16.msra.mxu0 0
      %2552 = vmatprep.subr.bf16.mxu0 0
      %2553 = vmatpush1.bf16.msra.mxu0 0
      %2554 = vmatprep.subr.bf16.mxu0 0
      %2555 = vmatpush1.bf16.msra.mxu0 0
      %2556 = vmatprep.subr.bf16.mxu0 0
      %2557 = vmatpush1.bf16.msra.mxu0 0
      %2558 = vmatprep.subr.bf16.mxu0 0
      %2559 = vmatpush1.bf16.msra.mxu0 0
      %2560 = vmatprep.subr.bf16.mxu0 0
      %2561 = vmatpush1.bf16.msra.mxu0 0
      %2562 = vmatprep.subr.bf16.mxu0 0
      %2563 = vmatpush1.bf16.msra.mxu0 0
      %2564 = vmatprep.subr.bf16.mxu0 0
      %2565 = vmatpush1.bf16.msra.mxu0 0
      %2566 = vmatprep.subr.bf16.mxu0 0
      %2567 = vmatpush1.bf16.msra.mxu0 0
      %2568 = vmatprep.subr.bf16.mxu0 0
      %2569 = vmatpush1.bf16.msra.mxu0 0
      %2570 = vmatprep.subr.bf16.mxu0 0
      %2571 = vmatpush1.bf16.msra.mxu0 0
      %2572 = vmatprep.subr.bf16.mxu0 0
      %2573 = vmatpush1.bf16.msra.mxu0 0
      %2574 = vmatprep.subr.bf16.mxu0 0
      %2575 = vmatpush1.bf16.msra.mxu0 0
      %2576 = vmatprep.mubr.bf16.mxu0 0
      %2577 = vmatmul.mubr.bf16.gmra.mrb[0].mxu0 %v2529
      %v2578 = vpop.f32.mrb[0].mxu0
      %v2579 = vadd.f32 0.0, %v2578
      %v2580 = vpop.f32.mrb[0].mxu0
      %v2581 = vpop.f32.mrb[0].mxu0
      %v2582 = vadd.f32 0.0, %v2581
      %v2583 = vpop.f32.mrb[0].mxu0
      %2584 = vmatprep.mubr.bf16.mxu0 0
      %2585 = vmatmul.mubr.bf16.gmra.mrb[0].mxu0 %v2532
      %v2586 = vpop.f32.mrb[0].mxu0
      %v2587 = vadd.f32 0.0, %v2586
      %v2588 = vpop.f32.mrb[0].mxu0
      %v2589 = vpop.f32.mrb[0].mxu0
      %v2590 = vadd.f32 0.0, %v2589
      %v2591 = vpop.f32.mrb[0].mxu0
      %2592 = vmatprep.mubr.bf16.mxu0 0
      %2593 = vmatmul.mubr.bf16.gmra.mrb[0].mxu0 %v2535
      %v2594 = vpop.f32.mrb[0].mxu0
      %v2595 = vadd.f32 0.0, %v2594
      %v2596 = vpop.f32.mrb[0].mxu0
      %v2597 = vpop.f32.mrb[0].mxu0
      %v2598 = vadd.f32 0.0, %v2597
      %v2599 = vpop.f32.mrb[0].mxu0
      %2600 = vmatprep.mubr.bf16.mxu0 0
      %2601 = vmatmul.mubr.bf16.gmra.mrb[0].mxu0 %v2538
      %v2602 = vpop.f32.mrb[0].mxu0
      %v2603 = vadd.f32 0.0, %v2602
      %v2604 = vpop.f32.mrb[0].mxu0
      %v2605 = vpop.f32.mrb[0].mxu0
      %v2606 = vadd.f32 0.0, %v2605
      %v2607 = vpop.f32.mrb[0].mxu0
      %2608 = vdwg.mxu0
      %v2610 = vsel %vm2470, %v2510, 0
      %v2613 = vsel %vm2470, %v2511, 0
      %v2616 = vsel %vm2470, %v2512, 0
      %v2619 = vsel %vm2470, %v2513, 0
      %v2622 = vsel %vm2540, %v2509, 0
      %2624 = vmatprep.subr.bf16.mxu0 0
      %2625 = vmatpush1.bf16.msra.mxu0 %v2622
      %2626 = vmatprep.subr.bf16.mxu0 0
      %2627 = vmatpush1.bf16.msra.mxu0 0
      %2628 = vmatprep.subr.bf16.mxu0 0
      %2629 = vmatpush1.bf16.msra.mxu0 0
      %2630 = vmatprep.subr.bf16.mxu0 0
      %2631 = vmatpush1.bf16.msra.mxu0 0
      %2632 = vmatprep.subr.bf16.mxu0 0
      %2633 = vmatpush1.bf16.msra.mxu0 0
      %2634 = vmatprep.subr.bf16.mxu0 0
      %2635 = vmatpush1.bf16.msra.mxu0 0
      %2636 = vmatprep.subr.bf16.mxu0 0
      %2637 = vmatpush1.bf16.msra.mxu0 0
      %2638 = vmatprep.subr.bf16.mxu0 0
      %2639 = vmatpush1.bf16.msra.mxu0 0
      %2640 = vmatprep.subr.bf16.mxu0 0
      %2641 = vmatpush1.bf16.msra.mxu0 0
      %2642 = vmatprep.subr.bf16.mxu0 0
      %2643 = vmatpush1.bf16.msra.mxu0 0
      %2644 = vmatprep.subr.bf16.mxu0 0
      %2645 = vmatpush1.bf16.msra.mxu0 0
      %2646 = vmatprep.subr.bf16.mxu0 0
      %2647 = vmatpush1.bf16.msra.mxu0 0
      %2648 = vmatprep.subr.bf16.mxu0 0
      %2649 = vmatpush1.bf16.msra.mxu0 0
      %2650 = vmatprep.subr.bf16.mxu0 0
      %2651 = vmatpush1.bf16.msra.mxu0 0
      %2652 = vmatprep.subr.bf16.mxu0 0
      %2653 = vmatpush1.bf16.msra.mxu0 0
      %2654 = vmatprep.subr.bf16.mxu0 0
      %2655 = vmatpush1.bf16.msra.mxu0 0
      %2656 = vmatprep.mubr.bf16.mxu0 0
      %2657 = vmatmul.mubr.bf16.gmra.mrb[0].mxu0 %v2610
      %v2658 = vpop.f32.mrb[0].mxu0
      %v2659 = vadd.f32 %v2579, %v2658
      %v2660 = vpop.f32.mrb[0].mxu0
      %v2661 = vpop.f32.mrb[0].mxu0
      %v2662 = vadd.f32 %v2582, %v2661
      %v2663 = vpop.f32.mrb[0].mxu0
      %2664 = vmatprep.mubr.bf16.mxu0 0
      %2665 = vmatmul.mubr.bf16.gmra.mrb[0].mxu0 %v2613
      %v2666 = vpop.f32.mrb[0].mxu0
      %v2667 = vadd.f32 %v2587, %v2666
      %v2668 = vpop.f32.mrb[0].mxu0
      %v2669 = vpop.f32.mrb[0].mxu0
      %v2670 = vadd.f32 %v2590, %v2669
      %v2671 = vpop.f32.mrb[0].mxu0
      %2672 = vmatprep.mubr.bf16.mxu0 0
      %2673 = vmatmul.mubr.bf16.gmra.mrb[0].mxu0 %v2616
      %v2674 = vpop.f32.mrb[0].mxu0
      %v2675 = vadd.f32 %v2595, %v2674
      %v2676 = vpop.f32.mrb[0].mxu0
      %v2677 = vpop.f32.mrb[0].mxu0
      %v2678 = vadd.f32 %v2598, %v2677
      %v2679 = vpop.f32.mrb[0].mxu0
      %2680 = vmatprep.mubr.bf16.mxu0 0
      %2681 = vmatmul.mubr.bf16.gmra.mrb[0].mxu0 %v2619
      %v2682 = vpop.f32.mrb[0].mxu0
      %v2683 = vadd.f32 %v2603, %v2682
      %v2684 = vpop.f32.mrb[0].mxu0
      %v2685 = vpop.f32.mrb[0].mxu0
      %v2686 = vadd.f32 %v2606, %v2685
      %v2687 = vpop.f32.mrb[0].mxu0
      %2688 = vdwg.mxu0
      %v2689 = vld [vmem:[%s2492] sm:$0xff]
      %v2690 = vld [vmem:[%s2492 + $0x10] sm:$0xff]
      %v2691 = vld [vmem:[%s2492 + $0x20] sm:$0xff]
      %v2692 = vld [vmem:[%s2492 + $0x30] sm:$0xff]
      %v2693 = vld [vmem:[%s2492 + $0x40] sm:$0xff]
      %v2694 = vld [vmem:[%s2492 + $0x50] sm:$0xff]
      %v2695 = vld [vmem:[%s2492 + $0x60] sm:$0xff]
      %v2696 = vld [vmem:[%s2492 + $0x70] sm:$0xff]
      %s2697 = scalar_lea.vmem %s5, 8
      %v2698 = vld [vmem:[%s2697] sm:$0xf]
      %v2699 = vpack.c.bf16 %v2690, %v2689
      %v2700 = vpack.c.bf16 %v2692, %v2691
      %v2701 = vpack.c.bf16 %v2694, %v2693
      %v2702 = vpack.c.bf16 %v2696, %v2695
      %v2704 = vsel %vm2470, %v2699, 0
      %v2707 = vsel %vm2470, %v2700, 0
      %v2710 = vsel %vm2470, %v2701, 0
      %v2713 = vsel %vm2470, %v2702, 0
      %v2716 = vsel %vm2540, %v2698, 0
      %2718 = vmatprep.subr.bf16.mxu0 0
      %2719 = vmatpush1.bf16.msra.mxu0 %v2716
      %2720 = vmatprep.subr.bf16.mxu0 0
      %2721 = vmatpush1.bf16.msra.mxu0 0
      %2722 = vmatprep.subr.bf16.mxu0 0
      %2723 = vmatpush1.bf16.msra.mxu0 0
      %2724 = vmatprep.subr.bf16.mxu0 0
      %2725 = vmatpush1.bf16.msra.mxu0 0
      %2726 = vmatprep.subr.bf16.mxu0 0
      %2727 = vmatpush1.bf16.msra.mxu0 0
      %2728 = vmatprep.subr.bf16.mxu0 0
      %2729 = vmatpush1.bf16.msra.mxu0 0
      %2730 = vmatprep.subr.bf16.mxu0 0
      %2731 = vmatpush1.bf16.msra.mxu0 0
      %2732 = vmatprep.subr.bf16.mxu0 0
      %2733 = vmatpush1.bf16.msra.mxu0 0
      %2734 = vmatprep.subr.bf16.mxu0 0
      %2735 = vmatpush1.bf16.msra.mxu0 0
      %2736 = vmatprep.subr.bf16.mxu0 0
      %2737 = vmatpush1.bf16.msra.mxu0 0
      %2738 = vmatprep.subr.bf16.mxu0 0
      %2739 = vmatpush1.bf16.msra.mxu0 0
      %2740 = vmatprep.subr.bf16.mxu0 0
      %2741 = vmatpush1.bf16.msra.mxu0 0
      %2742 = vmatprep.subr.bf16.mxu0 0
      %2743 = vmatpush1.bf16.msra.mxu0 0
      %2744 = vmatprep.subr.bf16.mxu0 0
      %2745 = vmatpush1.bf16.msra.mxu0 0
      %2746 = vmatprep.subr.bf16.mxu0 0
      %2747 = vmatpush1.bf16.msra.mxu0 0
      %2748 = vmatprep.subr.bf16.mxu0 0
      %2749 = vmatpush1.bf16.msra.mxu0 0
      %2750 = vmatprep.mubr.bf16.mxu0 0
      %2751 = vmatmul.mubr.bf16.gmra.mrb[0].mxu0 %v2704
      %v2752 = vpop.f32.mrb[0].mxu0
      %v2753 = vadd.f32 0.0, %v2752
      %v2754 = vpop.f32.mrb[0].mxu0
      %v2755 = vpop.f32.mrb[0].mxu0
      %v2756 = vadd.f32 0.0, %v2755
      %v2757 = vpop.f32.mrb[0].mxu0
      %2758 = vmatprep.mubr.bf16.mxu0 0
      %2759 = vmatmul.mubr.bf16.gmra.mrb[0].mxu0 %v2707
      %v2760 = vpop.f32.mrb[0].mxu0
      %v2761 = vadd.f32 0.0, %v2760
      %v2762 = vpop.f32.mrb[0].mxu0
      %v2763 = vpop.f32.mrb[0].mxu0
      %v2764 = vadd.f32 0.0, %v2763
      %v2765 = vpop.f32.mrb[0].mxu0
      %2766 = vmatprep.mubr.bf16.mxu0 0
      %2767 = vmatmul.mubr.bf16.gmra.mrb[0].mxu0 %v2710
      %v2768 = vpop.f32.mrb[0].mxu0
      %v2769 = vadd.f32 0.0, %v2768
      %v2770 = vpop.f32.mrb[0].mxu0
      %v2771 = vpop.f32.mrb[0].mxu0
      %v2772 = vadd.f32 0.0, %v2771
      %v2773 = vpop.f32.mrb[0].mxu0
      %2774 = vmatprep.mubr.bf16.mxu0 0
      %2775 = vmatmul.mubr.bf16.gmra.mrb[0].mxu0 %v2713
      %v2776 = vpop.f32.mrb[0].mxu0
      %v2777 = vadd.f32 0.0, %v2776
      %v2778 = vpop.f32.mrb[0].mxu0
      %v2779 = vpop.f32.mrb[0].mxu0
      %v2780 = vadd.f32 0.0, %v2779
      %v2781 = vpop.f32.mrb[0].mxu0
      %2782 = vdwg.mxu0
      %v2783 = vadd.f32 %v2659, %v2753
      %v2784 = vadd.f32 %v2662, %v2756
      %v2785 = vadd.f32 %v2667, %v2761
      %v2786 = vadd.f32 %v2670, %v2764
      %v2787 = vadd.f32 %v2675, %v2769
      %v2788 = vadd.f32 %v2678, %v2772
      %v2789 = vadd.f32 %v2683, %v2777
      %v2790 = vadd.f32 %v2686, %v2780
      %v2791 = vld [vmem:[%s2492 + $0x1] sm:$0xff]
      %v2792 = vld [vmem:[%s2492 + $0x11] sm:$0xff]
      %v2793 = vld [vmem:[%s2492 + $0x21] sm:$0xff]
      %v2794 = vld [vmem:[%s2492 + $0x31] sm:$0xff]
      %v2795 = vld [vmem:[%s2492 + $0x41] sm:$0xff]
      %v2796 = vld [vmem:[%s2492 + $0x51] sm:$0xff]
      %v2797 = vld [vmem:[%s2492 + $0x61] sm:$0xff]
      %v2798 = vld [vmem:[%s2492 + $0x71] sm:$0xff]
      %s2799 = scalar_lea.vmem %s5, 12
      %v2800 = vld [vmem:[%s2799] sm:$0xf]
      %v2801 = vpack.c.bf16 %v2792, %v2791
      %v2802 = vpack.c.bf16 %v2794, %v2793
      %v2803 = vpack.c.bf16 %v2796, %v2795
      %v2804 = vpack.c.bf16 %v2798, %v2797
      %v2806 = vsel %vm2470, %v2801, 0
      %v2809 = vsel %vm2470, %v2802, 0
      %v2812 = vsel %vm2470, %v2803, 0
      %v2815 = vsel %vm2470, %v2804, 0
      %v2818 = vsel %vm2540, %v2800, 0
      %2820 = vmatprep.subr.bf16.mxu0 0
      %2821 = vmatpush1.bf16.msra.mxu0 %v2818
      %2822 = vmatprep.subr.bf16.mxu0 0
      %2823 = vmatpush1.bf16.msra.mxu0 0
      %2824 = vmatprep.subr.bf16.mxu0 0
      %2825 = vmatpush1.bf16.msra.mxu0 0
      %2826 = vmatprep.subr.bf16.mxu0 0
      %2827 = vmatpush1.bf16.msra.mxu0 0
      %2828 = vmatprep.subr.bf16.mxu0 0
      %2829 = vmatpush1.bf16.msra.mxu0 0
      %2830 = vmatprep.subr.bf16.mxu0 0
      %2831 = vmatpush1.bf16.msra.mxu0 0
      %2832 = vmatprep.subr.bf16.mxu0 0
      %2833 = vmatpush1.bf16.msra.mxu0 0
      %2834 = vmatprep.subr.bf16.mxu0 0
      %2835 = vmatpush1.bf16.msra.mxu0 0
      %2836 = vmatprep.subr.bf16.mxu0 0
      %2837 = vmatpush1.bf16.msra.mxu0 0
      %2838 = vmatprep.subr.bf16.mxu0 0
      %2839 = vmatpush1.bf16.msra.mxu0 0
      %2840 = vmatprep.subr.bf16.mxu0 0
      %2841 = vmatpush1.bf16.msra.mxu0 0
      %2842 = vmatprep.subr.bf16.mxu0 0
      %2843 = vmatpush1.bf16.msra.mxu0 0
      %2844 = vmatprep.subr.bf16.mxu0 0
      %2845 = vmatpush1.bf16.msra.mxu0 0
      %2846 = vmatprep.subr.bf16.mxu0 0
      %2847 = vmatpush1.bf16.msra.mxu0 0
      %2848 = vmatprep.subr.bf16.mxu0 0
      %2849 = vmatpush1.bf16.msra.mxu0 0
      %2850 = vmatprep.subr.bf16.mxu0 0
      %2851 = vmatpush1.bf16.msra.mxu0 0
      %2852 = vmatprep.mubr.bf16.mxu0 0
      %2853 = vmatmul.mubr.bf16.gmra.mrb[0].mxu0 %v2806
      %v2854 = vpop.f32.mrb[0].mxu0
      %v2855 = vadd.f32 0.0, %v2854
      %v2856 = vpop.f32.mrb[0].mxu0
      %v2857 = vpop.f32.mrb[0].mxu0
      %v2858 = vadd.f32 0.0, %v2857
      %v2859 = vpop.f32.mrb[0].mxu0
      %2860 = vmatprep.mubr.bf16.mxu0 0
      %2861 = vmatmul.mubr.bf16.gmra.mrb[0].mxu0 %v2809
      %v2862 = vpop.f32.mrb[0].mxu0
      %v2863 = vadd.f32 0.0, %v2862
      %v2864 = vpop.f32.mrb[0].mxu0
      %v2865 = vpop.f32.mrb[0].mxu0
      %v2866 = vadd.f32 0.0, %v2865
      %v2867 = vpop.f32.mrb[0].mxu0
      %2868 = vmatprep.mubr.bf16.mxu0 0
      %2869 = vmatmul.mubr.bf16.gmra.mrb[0].mxu0 %v2812
      %v2870 = vpop.f32.mrb[0].mxu0
      %v2871 = vadd.f32 0.0, %v2870
      %v2872 = vpop.f32.mrb[0].mxu0
      %v2873 = vpop.f32.mrb[0].mxu0
      %v2874 = vadd.f32 0.0, %v2873
      %v2875 = vpop.f32.mrb[0].mxu0
      %2876 = vmatprep.mubr.bf16.mxu0 0
      %2877 = vmatmul.mubr.bf16.gmra.mrb[0].mxu0 %v2815
      %v2878 = vpop.f32.mrb[0].mxu0
      %v2879 = vadd.f32 0.0, %v2878
      %v2880 = vpop.f32.mrb[0].mxu0
      %v2881 = vpop.f32.mrb[0].mxu0
      %v2882 = vadd.f32 0.0, %v2881
      %v2883 = vpop.f32.mrb[0].mxu0
      %2884 = vdwg.mxu0
      %v2885 = vadd.f32 %v2783, %v2855
      %v2886 = vadd.f32 %v2784, %v2858
      %v2887 = vadd.f32 %v2785, %v2863
      %v2888 = vadd.f32 %v2786, %v2866
      %v2889 = vadd.f32 %v2787, %v2871
      %v2890 = vadd.f32 %v2788, %v2874
      %v2891 = vadd.f32 %v2789, %v2879
      %v2892 = vadd.f32 %v2790, %v2882
      %2893 = vst [vmem:[%s447] sm:$0xff] %v2885
      %2894 = vst [vmem:[%s447 + $0x8] sm:$0xff] %v2886
      %2895 = vst [vmem:[%s447 + $0x10] sm:$0xff] %v2887
      %2896 = vst [vmem:[%s447 + $0x18] sm:$0xff] %v2888
      %2897 = vst [vmem:[%s447 + $0x20] sm:$0xff] %v2889
      %2898 = vst [vmem:[%s447 + $0x28] sm:$0xff] %v2890
      %2899 = vst [vmem:[%s447 + $0x30] sm:$0xff] %v2891
      %2900 = vst [vmem:[%s447 + $0x38] sm:$0xff] %v2892
      %v2901 = vadd.f32 %v2885, %v2886
      %v2902 = vadd.f32 %v2901, %v2887
      %v2903 = vadd.f32 %v2902, %v2888
      %v2904 = vadd.f32 %v2903, %v2889
      %v2905 = vadd.f32 %v2904, %v2890
      %v2906 = vadd.f32 %v2905, %v2891
      %v2907 = vadd.f32 %v2906, %v2892
      %v2908 = vrot.slane %v2907, 4
      %v2909 = vadd.f32 %v2907, %v2908
      %v2910 = vrot.slane %v2909, 2
      %v2911 = vadd.f32 %v2909, %v2910
      %v2912 = vrot.slane %v2911, 1
      %v2913 = vadd.f32 %v2911, %v2912
      %v2914 = vadd.f32 %v2913, 0.0
      %v2915 = vmul.f32 %v2885, %v2885
      %v2916 = vmul.f32 %v2886, %v2886
      %v2917 = vmul.f32 %v2887, %v2887
      %v2918 = vmul.f32 %v2888, %v2888
      %v2919 = vmul.f32 %v2889, %v2889
      %v2920 = vmul.f32 %v2890, %v2890
      %v2921 = vmul.f32 %v2891, %v2891
      %v2922 = vmul.f32 %v2892, %v2892
      %v2923 = vadd.f32 %v2915, %v2916
      %v2924 = vadd.f32 %v2923, %v2917
      %v2925 = vadd.f32 %v2924, %v2918
      %v2926 = vadd.f32 %v2925, %v2919
      %v2927 = vadd.f32 %v2926, %v2920
      %v2928 = vadd.f32 %v2927, %v2921
      %v2929 = vadd.f32 %v2928, %v2922
      %v2930 = vrot.slane %v2929, 4
      %v2931 = vadd.f32 %v2929, %v2930
      %v2932 = vrot.slane %v2931, 2
      %v2933 = vadd.f32 %v2931, %v2932
      %v2934 = vrot.slane %v2933, 1
      %v2935 = vadd.f32 %v2933, %v2934
      %v2936 = vadd.f32 %v2935, 0.0
      %v2937 = vld [vmem:[#allocation2 + $0x1] sm:$0xff]
      %v2938 = vld [vmem:[#allocation2 + $0x11] sm:$0xff]
      %v2939 = vld [vmem:[#allocation2 + $0x21] sm:$0xff]
      %v2940 = vld [vmem:[#allocation2 + $0x31] sm:$0xff]
      %v2941 = vld [vmem:[#allocation2 + $0x41] sm:$0xff]
      %v2942 = vld [vmem:[#allocation2 + $0x51] sm:$0xff]
      %v2943 = vld [vmem:[#allocation2 + $0x61] sm:$0xff]
      %v2944 = vld [vmem:[#allocation2 + $0x71] sm:$0xff]
      %s2945 = scalar_lea.vmem %s5, 16
      %v2946 = vld [vmem:[%s2945] sm:$0xf]
      %v2947 = vpack.c.bf16 %v2938, %v2937
      %v2948 = vpack.c.bf16 %v2940, %v2939
      %v2949 = vpack.c.bf16 %v2942, %v2941
      %v2950 = vpack.c.bf16 %v2944, %v2943
      %v2951 = vld [vmem:[#allocation2 + $0x2] sm:$0xff]
      %v2952 = vld [vmem:[#allocation2 + $0x12] sm:$0xff]
      %v2953 = vld [vmem:[#allocation2 + $0x22] sm:$0xff]
      %v2954 = vld [vmem:[#allocation2 + $0x32] sm:$0xff]
      %v2955 = vld [vmem:[#allocation2 + $0x42] sm:$0xff]
      %v2956 = vld [vmem:[#allocation2 + $0x52] sm:$0xff]
      %v2957 = vld [vmem:[#allocation2 + $0x62] sm:$0xff]
      %v2958 = vld [vmem:[#allocation2 + $0x72] sm:$0xff]
      %s2959 = scalar_lea.vmem %s5, 20
      %v2960 = vld [vmem:[%s2959] sm:$0xf]
      %v2961 = vpack.c.bf16 %v2952, %v2951
      %v2962 = vpack.c.bf16 %v2954, %v2953
      %v2963 = vpack.c.bf16 %v2956, %v2955
      %v2964 = vpack.c.bf16 %v2958, %v2957
      %v2966 = vsel %vm2470, %v2961, 0
      %v2969 = vsel %vm2470, %v2962, 0
      %v2972 = vsel %vm2470, %v2963, 0
      %v2975 = vsel %vm2470, %v2964, 0
      %v2978 = vsel %vm2540, %v2960, 0
      %2980 = vmatprep.subr.bf16.mxu0 0
      %2981 = vmatpush1.bf16.msra.mxu0 %v2978
      %2982 = vmatprep.subr.bf16.mxu0 0
      %2983 = vmatpush1.bf16.msra.mxu0 0
      %2984 = vmatprep.subr.bf16.mxu0 0
      %2985 = vmatpush1.bf16.msra.mxu0 0
      %2986 = vmatprep.subr.bf16.mxu0 0
      %2987 = vmatpush1.bf16.msra.mxu0 0
      %2988 = vmatprep.subr.bf16.mxu0 0
      %2989 = vmatpush1.bf16.msra.mxu0 0
      %2990 = vmatprep.subr.bf16.mxu0 0
      %2991 = vmatpush1.bf16.msra.mxu0 0
      %2992 = vmatprep.subr.bf16.mxu0 0
      %2993 = vmatpush1.bf16.msra.mxu0 0
      %2994 = vmatprep.subr.bf16.mxu0 0
      %2995 = vmatpush1.bf16.msra.mxu0 0
      %2996 = vmatprep.subr.bf16.mxu0 0
      %2997 = vmatpush1.bf16.msra.mxu0 0
      %2998 = vmatprep.subr.bf16.mxu0 0
      %2999 = vmatpush1.bf16.msra.mxu0 0
      %3000 = vmatprep.subr.bf16.mxu0 0
      %3001 = vmatpush1.bf16.msra.mxu0 0
      %3002 = vmatprep.subr.bf16.mxu0 0
      %3003 = vmatpush1.bf16.msra.mxu0 0
      %3004 = vmatprep.subr.bf16.mxu0 0
      %3005 = vmatpush1.bf16.msra.mxu0 0
      %3006 = vmatprep.subr.bf16.mxu0 0
      %3007 = vmatpush1.bf16.msra.mxu0 0
      %3008 = vmatprep.subr.bf16.mxu0 0
      %3009 = vmatpush1.bf16.msra.mxu0 0
      %3010 = vmatprep.subr.bf16.mxu0 0
      %3011 = vmatpush1.bf16.msra.mxu0 0
      %3012 = vmatprep.mubr.bf16.mxu0 0
      %3013 = vmatmul.mubr.bf16.gmra.mrb[0].mxu0 %v2966
      %v3014 = vpop.f32.mrb[0].mxu0
      %v3015 = vadd.f32 0.0, %v3014
      %v3016 = vpop.f32.mrb[0].mxu0
      %v3017 = vpop.f32.mrb[0].mxu0
      %v3018 = vadd.f32 0.0, %v3017
      %v3019 = vpop.f32.mrb[0].mxu0
      %3020 = vmatprep.mubr.bf16.mxu0 0
      %3021 = vmatmul.mubr.bf16.gmra.mrb[0].mxu0 %v2969
      %v3022 = vpop.f32.mrb[0].mxu0
      %v3023 = vadd.f32 0.0, %v3022
      %v3024 = vpop.f32.mrb[0].mxu0
      %v3025 = vpop.f32.mrb[0].mxu0
      %v3026 = vadd.f32 0.0, %v3025
      %v3027 = vpop.f32.mrb[0].mxu0
      %3028 = vmatprep.mubr.bf16.mxu0 0
      %3029 = vmatmul.mubr.bf16.gmra.mrb[0].mxu0 %v2972
      %v3030 = vpop.f32.mrb[0].mxu0
      %v3031 = vadd.f32 0.0, %v3030
      %v3032 = vpop.f32.mrb[0].mxu0
      %v3033 = vpop.f32.mrb[0].mxu0
      %v3034 = vadd.f32 0.0, %v3033
      %v3035 = vpop.f32.mrb[0].mxu0
      %3036 = vmatprep.mubr.bf16.mxu0 0
      %3037 = vmatmul.mubr.bf16.gmra.mrb[0].mxu0 %v2975
      %v3038 = vpop.f32.mrb[0].mxu0
      %v3039 = vadd.f32 0.0, %v3038
      %v3040 = vpop.f32.mrb[0].mxu0
      %v3041 = vpop.f32.mrb[0].mxu0
      %v3042 = vadd.f32 0.0, %v3041
      %v3043 = vpop.f32.mrb[0].mxu0
      %3044 = vdwg.mxu0
      %v3046 = vsel %vm2470, %v2947, 0
      %v3049 = vsel %vm2470, %v2948, 0
      %v3052 = vsel %vm2470, %v2949, 0
      %v3055 = vsel %vm2470, %v2950, 0
      %v3058 = vsel %vm2540, %v2946, 0
      %3060 = vmatprep.subr.bf16.mxu0 0
      %3061 = vmatpush1.bf16.msra.mxu0 %v3058
      %3062 = vmatprep.subr.bf16.mxu0 0
      %3063 = vmatpush1.bf16.msra.mxu0 0
      %3064 = vmatprep.subr.bf16.mxu0 0
      %3065 = vmatpush1.bf16.msra.mxu0 0
      %3066 = vmatprep.subr.bf16.mxu0 0
      %3067 = vmatpush1.bf16.msra.mxu0 0
      %3068 = vmatprep.subr.bf16.mxu0 0
      %3069 = vmatpush1.bf16.msra.mxu0 0
      %3070 = vmatprep.subr.bf16.mxu0 0
      %3071 = vmatpush1.bf16.msra.mxu0 0
      %3072 = vmatprep.subr.bf16.mxu0 0
      %3073 = vmatpush1.bf16.msra.mxu0 0
      %3074 = vmatprep.subr.bf16.mxu0 0
      %3075 = vmatpush1.bf16.msra.mxu0 0
      %3076 = vmatprep.subr.bf16.mxu0 0
      %3077 = vmatpush1.bf16.msra.mxu0 0
      %3078 = vmatprep.subr.bf16.mxu0 0
      %3079 = vmatpush1.bf16.msra.mxu0 0
      %3080 = vmatprep.subr.bf16.mxu0 0
      %3081 = vmatpush1.bf16.msra.mxu0 0
      %3082 = vmatprep.subr.bf16.mxu0 0
      %3083 = vmatpush1.bf16.msra.mxu0 0
      %3084 = vmatprep.subr.bf16.mxu0 0
      %3085 = vmatpush1.bf16.msra.mxu0 0
      %3086 = vmatprep.subr.bf16.mxu0 0
      %3087 = vmatpush1.bf16.msra.mxu0 0
      %3088 = vmatprep.subr.bf16.mxu0 0
      %3089 = vmatpush1.bf16.msra.mxu0 0
      %3090 = vmatprep.subr.bf16.mxu0 0
      %3091 = vmatpush1.bf16.msra.mxu0 0
      %3092 = vmatprep.mubr.bf16.mxu0 0
      %3093 = vmatmul.mubr.bf16.gmra.mrb[0].mxu0 %v3046
      %v3094 = vpop.f32.mrb[0].mxu0
      %v3095 = vadd.f32 %v3015, %v3094
      %v3096 = vpop.f32.mrb[0].mxu0
      %v3097 = vpop.f32.mrb[0].mxu0
      %v3098 = vadd.f32 %v3018, %v3097
      %v3099 = vpop.f32.mrb[0].mxu0
      %3100 = vmatprep.mubr.bf16.mxu0 0
      %3101 = vmatmul.mubr.bf16.gmra.mrb[0].mxu0 %v3049
      %v3102 = vpop.f32.mrb[0].mxu0
      %v3103 = vadd.f32 %v3023, %v3102
      %v3104 = vpop.f32.mrb[0].mxu0
      %v3105 = vpop.f32.mrb[0].mxu0
      %v3106 = vadd.f32 %v3026, %v3105
      %v3107 = vpop.f32.mrb[0].mxu0
      %3108 = vmatprep.mubr.bf16.mxu0 0
      %3109 = vmatmul.mubr.bf16.gmra.mrb[0].mxu0 %v3052
      %v3110 = vpop.f32.mrb[0].mxu0
      %v3111 = vadd.f32 %v3031, %v3110
      %v3112 = vpop.f32.mrb[0].mxu0
      %v3113 = vpop.f32.mrb[0].mxu0
      %v3114 = vadd.f32 %v3034, %v3113
      %v3115 = vpop.f32.mrb[0].mxu0
      %3116 = vmatprep.mubr.bf16.mxu0 0
      %3117 = vmatmul.mubr.bf16.gmra.mrb[0].mxu0 %v3055
      %v3118 = vpop.f32.mrb[0].mxu0
      %v3119 = vadd.f32 %v3039, %v3118
      %v3120 = vpop.f32.mrb[0].mxu0
      %v3121 = vpop.f32.mrb[0].mxu0
      %v3122 = vadd.f32 %v3042, %v3121
      %v3123 = vpop.f32.mrb[0].mxu0
      %3124 = vdwg.mxu0
      %v3125 = vld [vmem:[%s2492 + $0x1] sm:$0xff]
      %v3126 = vld [vmem:[%s2492 + $0x11] sm:$0xff]
      %v3127 = vld [vmem:[%s2492 + $0x21] sm:$0xff]
      %v3128 = vld [vmem:[%s2492 + $0x31] sm:$0xff]
      %v3129 = vld [vmem:[%s2492 + $0x41] sm:$0xff]
      %v3130 = vld [vmem:[%s2492 + $0x51] sm:$0xff]
      %v3131 = vld [vmem:[%s2492 + $0x61] sm:$0xff]
      %v3132 = vld [vmem:[%s2492 + $0x71] sm:$0xff]
      %s3133 = scalar_lea.vmem %s5, 24
      %v3134 = vld [vmem:[%s3133] sm:$0xf]
      %v3135 = vpack.c.bf16 %v3126, %v3125
      %v3136 = vpack.c.bf16 %v3128, %v3127
      %v3137 = vpack.c.bf16 %v3130, %v3129
      %v3138 = vpack.c.bf16 %v3132, %v3131
      %v3140 = vsel %vm2470, %v3135, 0
      %v3143 = vsel %vm2470, %v3136, 0
      %v3146 = vsel %vm2470, %v3137, 0
      %v3149 = vsel %vm2470, %v3138, 0
      %v3152 = vsel %vm2540, %v3134, 0
      %3154 = vmatprep.subr.bf16.mxu0 0
      %3155 = vmatpush1.bf16.msra.mxu0 %v3152
      %3156 = vmatprep.subr.bf16.mxu0 0
      %3157 = vmatpush1.bf16.msra.mxu0 0
      %3158 = vmatprep.subr.bf16.mxu0 0
      %3159 = vmatpush1.bf16.msra.mxu0 0
      %3160 = vmatprep.subr.bf16.mxu0 0
      %3161 = vmatpush1.bf16.msra.mxu0 0
      %3162 = vmatprep.subr.bf16.mxu0 0
      %3163 = vmatpush1.bf16.msra.mxu0 0
      %3164 = vmatprep.subr.bf16.mxu0 0
      %3165 = vmatpush1.bf16.msra.mxu0 0
      %3166 = vmatprep.subr.bf16.mxu0 0
      %3167 = vmatpush1.bf16.msra.mxu0 0
      %3168 = vmatprep.subr.bf16.mxu0 0
      %3169 = vmatpush1.bf16.msra.mxu0 0
      %3170 = vmatprep.subr.bf16.mxu0 0
      %3171 = vmatpush1.bf16.msra.mxu0 0
      %3172 = vmatprep.subr.bf16.mxu0 0
      %3173 = vmatpush1.bf16.msra.mxu0 0
      %3174 = vmatprep.subr.bf16.mxu0 0
      %3175 = vmatpush1.bf16.msra.mxu0 0
      %3176 = vmatprep.subr.bf16.mxu0 0
      %3177 = vmatpush1.bf16.msra.mxu0 0
      %3178 = vmatprep.subr.bf16.mxu0 0
      %3179 = vmatpush1.bf16.msra.mxu0 0
      %3180 = vmatprep.subr.bf16.mxu0 0
      %3181 = vmatpush1.bf16.msra.mxu0 0
      %3182 = vmatprep.subr.bf16.mxu0 0
      %3183 = vmatpush1.bf16.msra.mxu0 0
      %3184 = vmatprep.subr.bf16.mxu0 0
      %3185 = vmatpush1.bf16.msra.mxu0 0
      %3186 = vmatprep.mubr.bf16.mxu0 0
      %3187 = vmatmul.mubr.bf16.gmra.mrb[0].mxu0 %v3140
      %v3188 = vpop.f32.mrb[0].mxu0
      %v3189 = vadd.f32 0.0, %v3188
      %v3190 = vpop.f32.mrb[0].mxu0
      %v3191 = vpop.f32.mrb[0].mxu0
      %v3192 = vadd.f32 0.0, %v3191
      %v3193 = vpop.f32.mrb[0].mxu0
      %3194 = vmatprep.mubr.bf16.mxu0 0
      %3195 = vmatmul.mubr.bf16.gmra.mrb[0].mxu0 %v3143
      %v3196 = vpop.f32.mrb[0].mxu0
      %v3197 = vadd.f32 0.0, %v3196
      %v3198 = vpop.f32.mrb[0].mxu0
      %v3199 = vpop.f32.mrb[0].mxu0
      %v3200 = vadd.f32 0.0, %v3199
      %v3201 = vpop.f32.mrb[0].mxu0
      %3202 = vmatprep.mubr.bf16.mxu0 0
      %3203 = vmatmul.mubr.bf16.gmra.mrb[0].mxu0 %v3146
      %v3204 = vpop.f32.mrb[0].mxu0
      %v3205 = vadd.f32 0.0, %v3204
      %v3206 = vpop.f32.mrb[0].mxu0
      %v3207 = vpop.f32.mrb[0].mxu0
      %v3208 = vadd.f32 0.0, %v3207
      %v3209 = vpop.f32.mrb[0].mxu0
      %3210 = vmatprep.mubr.bf16.mxu0 0
      %3211 = vmatmul.mubr.bf16.gmra.mrb[0].mxu0 %v3149
      %v3212 = vpop.f32.mrb[0].mxu0
      %v3213 = vadd.f32 0.0, %v3212
      %v3214 = vpop.f32.mrb[0].mxu0
      %v3215 = vpop.f32.mrb[0].mxu0
      %v3216 = vadd.f32 0.0, %v3215
      %v3217 = vpop.f32.mrb[0].mxu0
      %3218 = vdwg.mxu0
      %v3219 = vadd.f32 %v3095, %v3189
      %v3220 = vadd.f32 %v3098, %v3192
      %v3221 = vadd.f32 %v3103, %v3197
      %v3222 = vadd.f32 %v3106, %v3200
      %v3223 = vadd.f32 %v3111, %v3205
      %v3224 = vadd.f32 %v3114, %v3208
      %v3225 = vadd.f32 %v3119, %v3213
      %v3226 = vadd.f32 %v3122, %v3216
      %v3227 = vld [vmem:[%s2492 + $0x2] sm:$0xff]
      %v3228 = vld [vmem:[%s2492 + $0x12] sm:$0xff]
      %v3229 = vld [vmem:[%s2492 + $0x22] sm:$0xff]
      %v3230 = vld [vmem:[%s2492 + $0x32] sm:$0xff]
      %v3231 = vld [vmem:[%s2492 + $0x42] sm:$0xff]
      %v3232 = vld [vmem:[%s2492 + $0x52] sm:$0xff]
      %v3233 = vld [vmem:[%s2492 + $0x62] sm:$0xff]
      %v3234 = vld [vmem:[%s2492 + $0x72] sm:$0xff]
      %s3235 = scalar_lea.vmem %s5, 28
      %v3236 = vld [vmem:[%s3235] sm:$0xf]
      %v3237 = vpack.c.bf16 %v3228, %v3227
      %v3238 = vpack.c.bf16 %v3230, %v3229
      %v3239 = vpack.c.bf16 %v3232, %v3231
      %v3240 = vpack.c.bf16 %v3234, %v3233
      %v3242 = vsel %vm2470, %v3237, 0
      %v3245 = vsel %vm2470, %v3238, 0
      %v3248 = vsel %vm2470, %v3239, 0
      %v3251 = vsel %vm2470, %v3240, 0
      %v3254 = vsel %vm2540, %v3236, 0
      %3256 = vmatprep.subr.bf16.mxu0 0
      %3257 = vmatpush1.bf16.msra.mxu0 %v3254
      %3258 = vmatprep.subr.bf16.mxu0 0
      %3259 = vmatpush1.bf16.msra.mxu0 0
      %3260 = vmatprep.subr.bf16.mxu0 0
      %3261 = vmatpush1.bf16.msra.mxu0 0
      %3262 = vmatprep.subr.bf16.mxu0 0
      %3263 = vmatpush1.bf16.msra.mxu0 0
      %3264 = vmatprep.subr.bf16.mxu0 0
      %3265 = vmatpush1.bf16.msra.mxu0 0
      %3266 = vmatprep.subr.bf16.mxu0 0
      %3267 = vmatpush1.bf16.msra.mxu0 0
      %3268 = vmatprep.subr.bf16.mxu0 0
      %3269 = vmatpush1.bf16.msra.mxu0 0
      %3270 = vmatprep.subr.bf16.mxu0 0
      %3271 = vmatpush1.bf16.msra.mxu0 0
      %3272 = vmatprep.subr.bf16.mxu0 0
      %3273 = vmatpush1.bf16.msra.mxu0 0
      %3274 = vmatprep.subr.bf16.mxu0 0
      %3275 = vmatpush1.bf16.msra.mxu0 0
      %3276 = vmatprep.subr.bf16.mxu0 0
      %3277 = vmatpush1.bf16.msra.mxu0 0
      %3278 = vmatprep.subr.bf16.mxu0 0
      %3279 = vmatpush1.bf16.msra.mxu0 0
      %3280 = vmatprep.subr.bf16.mxu0 0
      %3281 = vmatpush1.bf16.msra.mxu0 0
      %3282 = vmatprep.subr.bf16.mxu0 0
      %3283 = vmatpush1.bf16.msra.mxu0 0
      %3284 = vmatprep.subr.bf16.mxu0 0
      %3285 = vmatpush1.bf16.msra.mxu0 0
      %3286 = vmatprep.subr.bf16.mxu0 0
      %3287 = vmatpush1.bf16.msra.mxu0 0
      %3288 = vmatprep.mubr.bf16.mxu0 0
      %3289 = vmatmul.mubr.bf16.gmra.mrb[0].mxu0 %v3242
      %v3290 = vpop.f32.mrb[0].mxu0
      %v3291 = vadd.f32 0.0, %v3290
      %v3292 = vpop.f32.mrb[0].mxu0
      %v3293 = vpop.f32.mrb[0].mxu0
      %v3294 = vadd.f32 0.0, %v3293
      %v3295 = vpop.f32.mrb[0].mxu0
      %3296 = vmatprep.mubr.bf16.mxu0 0
      %3297 = vmatmul.mubr.bf16.gmra.mrb[0].mxu0 %v3245
      %v3298 = vpop.f32.mrb[0].mxu0
      %v3299 = vadd.f32 0.0, %v3298
      %v3300 = vpop.f32.mrb[0].mxu0
      %v3301 = vpop.f32.mrb[0].mxu0
      %v3302 = vadd.f32 0.0, %v3301
      %v3303 = vpop.f32.mrb[0].mxu0
      %3304 = vmatprep.mubr.bf16.mxu0 0
      %3305 = vmatmul.mubr.bf16.gmra.mrb[0].mxu0 %v3248
      %v3306 = vpop.f32.mrb[0].mxu0
      %v3307 = vadd.f32 0.0, %v3306
      %v3308 = vpop.f32.mrb[0].mxu0
      %v3309 = vpop.f32.mrb[0].mxu0
      %v3310 = vadd.f32 0.0, %v3309
      %v3311 = vpop.f32.mrb[0].mxu0
      %3312 = vmatprep.mubr.bf16.mxu0 0
      %3313 = vmatmul.mubr.bf16.gmra.mrb[0].mxu0 %v3251
      %v3314 = vpop.f32.mrb[0].mxu0
      %v3315 = vadd.f32 0.0, %v3314
      %v3316 = vpop.f32.mrb[0].mxu0
      %v3317 = vpop.f32.mrb[0].mxu0
      %v3318 = vadd.f32 0.0, %v3317
      %v3319 = vpop.f32.mrb[0].mxu0
      %3320 = vdwg.mxu0
      %v3321 = vadd.f32 %v3219, %v3291
      %v3322 = vadd.f32 %v3220, %v3294
      %v3323 = vadd.f32 %v3221, %v3299
      %v3324 = vadd.f32 %v3222, %v3302
      %v3325 = vadd.f32 %v3223, %v3307
      %v3326 = vadd.f32 %v3224, %v3310
      %v3327 = vadd.f32 %v3225, %v3315
      %v3328 = vadd.f32 %v3226, %v3318
      %3329 = vst [vmem:[%s452] sm:$0xff] %v3321
      %3330 = vst [vmem:[%s452 + $0x8] sm:$0xff] %v3322
      %3331 = vst [vmem:[%s452 + $0x10] sm:$0xff] %v3323
      %3332 = vst [vmem:[%s452 + $0x18] sm:$0xff] %v3324
      %3333 = vst [vmem:[%s452 + $0x20] sm:$0xff] %v3325
      %3334 = vst [vmem:[%s452 + $0x28] sm:$0xff] %v3326
      %3335 = vst [vmem:[%s452 + $0x30] sm:$0xff] %v3327
      %3336 = vst [vmem:[%s452 + $0x38] sm:$0xff] %v3328
      %v3337 = vadd.f32 %v3321, %v3322
      %v3338 = vadd.f32 %v3337, %v3323
      %v3339 = vadd.f32 %v3338, %v3324
      %v3340 = vadd.f32 %v3339, %v3325
      %v3341 = vadd.f32 %v3340, %v3326
      %v3342 = vadd.f32 %v3341, %v3327
      %v3343 = vadd.f32 %v3342, %v3328
      %v3344 = vrot.slane %v3343, 4
      %v3345 = vadd.f32 %v3343, %v3344
      %v3346 = vrot.slane %v3345, 2
      %v3347 = vadd.f32 %v3345, %v3346
      %v3348 = vrot.slane %v3347, 1
      %v3349 = vadd.f32 %v3347, %v3348
      %v3350 = vadd.f32 %v2914, %v3349
      %v3351 = vmul.f32 %v3321, %v3321
      %v3352 = vmul.f32 %v3322, %v3322
      %v3353 = vmul.f32 %v3323, %v3323
      %v3354 = vmul.f32 %v3324, %v3324
      %v3355 = vmul.f32 %v3325, %v3325
      %v3356 = vmul.f32 %v3326, %v3326
      %v3357 = vmul.f32 %v3327, %v3327
      %v3358 = vmul.f32 %v3328, %v3328
      %v3359 = vadd.f32 %v3351, %v3352
      %v3360 = vadd.f32 %v3359, %v3353
      %v3361 = vadd.f32 %v3360, %v3354
      %v3362 = vadd.f32 %v3361, %v3355
      %v3363 = vadd.f32 %v3362, %v3356
      %v3364 = vadd.f32 %v3363, %v3357
      %v3365 = vadd.f32 %v3364, %v3358
      %v3366 = vrot.slane %v3365, 4
      %v3367 = vadd.f32 %v3365, %v3366
      %v3368 = vrot.slane %v3367, 2
      %v3369 = vadd.f32 %v3367, %v3368
      %v3370 = vrot.slane %v3369, 1
      %v3371 = vadd.f32 %v3369, %v3370
      %v3372 = vadd.f32 %v2936, %v3371
      %v3373 = vld [vmem:[%s2492] sm:$0xff]
      %v3374 = vld [vmem:[%s2492 + $0x10] sm:$0xff]
      %v3375 = vld [vmem:[%s2492 + $0x20] sm:$0xff]
      %v3376 = vld [vmem:[%s2492 + $0x30] sm:$0xff]
      %v3377 = vld [vmem:[%s2492 + $0x40] sm:$0xff]
      %v3378 = vld [vmem:[%s2492 + $0x50] sm:$0xff]
      %v3379 = vld [vmem:[%s2492 + $0x60] sm:$0xff]
      %v3380 = vld [vmem:[%s2492 + $0x70] sm:$0xff]
      %s3381 = scalar_lea.vmem %s5, 32
      %v3382 = vld [vmem:[%s3381] sm:$0xf]
      %v3383 = vpack.c.bf16 %v3374, %v3373
      %v3384 = vpack.c.bf16 %v3376, %v3375
      %v3385 = vpack.c.bf16 %v3378, %v3377
      %v3386 = vpack.c.bf16 %v3380, %v3379
      %v3387 = vld [vmem:[%s2492 + $0x1] sm:$0xff]
      %v3388 = vld [vmem:[%s2492 + $0x11] sm:$0xff]
      %v3389 = vld [vmem:[%s2492 + $0x21] sm:$0xff]
      %v3390 = vld [vmem:[%s2492 + $0x31] sm:$0xff]
      %v3391 = vld [vmem:[%s2492 + $0x41] sm:$0xff]
      %v3392 = vld [vmem:[%s2492 + $0x51] sm:$0xff]
      %v3393 = vld [vmem:[%s2492 + $0x61] sm:$0xff]
      %v3394 = vld [vmem:[%s2492 + $0x71] sm:$0xff]
      %s3395 = scalar_lea.vmem %s5, 36
      %v3396 = vld [vmem:[%s3395] sm:$0xf]
      %v3397 = vpack.c.bf16 %v3388, %v3387
      %v3398 = vpack.c.bf16 %v3390, %v3389
      %v3399 = vpack.c.bf16 %v3392, %v3391
      %v3400 = vpack.c.bf16 %v3394, %v3393
      %v3402 = vsel %vm2470, %v3397, 0
      %v3405 = vsel %vm2470, %v3398, 0
      %v3408 = vsel %vm2470, %v3399, 0
      %v3411 = vsel %vm2470, %v3400, 0
      %v3414 = vsel %vm2540, %v3396, 0
      %3416 = vmatprep.subr.bf16.mxu0 0
      %3417 = vmatpush1.bf16.msra.mxu0 %v3414
      %3418 = vmatprep.subr.bf16.mxu0 0
      %3419 = vmatpush1.bf16.msra.mxu0 0
      %3420 = vmatprep.subr.bf16.mxu0 0
      %3421 = vmatpush1.bf16.msra.mxu0 0
      %3422 = vmatprep.subr.bf16.mxu0 0
      %3423 = vmatpush1.bf16.msra.mxu0 0
      %3424 = vmatprep.subr.bf16.mxu0 0
      %3425 = vmatpush1.bf16.msra.mxu0 0
      %3426 = vmatprep.subr.bf16.mxu0 0
      %3427 = vmatpush1.bf16.msra.mxu0 0
      %3428 = vmatprep.subr.bf16.mxu0 0
      %3429 = vmatpush1.bf16.msra.mxu0 0
      %3430 = vmatprep.subr.bf16.mxu0 0
      %3431 = vmatpush1.bf16.msra.mxu0 0
      %3432 = vmatprep.subr.bf16.mxu0 0
      %3433 = vmatpush1.bf16.msra.mxu0 0
      %3434 = vmatprep.subr.bf16.mxu0 0
      %3435 = vmatpush1.bf16.msra.mxu0 0
      %3436 = vmatprep.subr.bf16.mxu0 0
      %3437 = vmatpush1.bf16.msra.mxu0 0
      %3438 = vmatprep.subr.bf16.mxu0 0
      %3439 = vmatpush1.bf16.msra.mxu0 0
      %3440 = vmatprep.subr.bf16.mxu0 0
      %3441 = vmatpush1.bf16.msra.mxu0 0
      %3442 = vmatprep.subr.bf16.mxu0 0
      %3443 = vmatpush1.bf16.msra.mxu0 0
      %3444 = vmatprep.subr.bf16.mxu0 0
      %3445 = vmatpush1.bf16.msra.mxu0 0
      %3446 = vmatprep.subr.bf16.mxu0 0
      %3447 = vmatpush1.bf16.msra.mxu0 0
      %3448 = vmatprep.mubr.bf16.mxu0 0
      %3449 = vmatmul.mubr.bf16.gmra.mrb[0].mxu0 %v3402
      %v3450 = vpop.f32.mrb[0].mxu0
      %v3451 = vadd.f32 0.0, %v3450
      %v3452 = vpop.f32.mrb[0].mxu0
      %v3453 = vpop.f32.mrb[0].mxu0
      %v3454 = vadd.f32 0.0, %v3453
      %v3455 = vpop.f32.mrb[0].mxu0
      %3456 = vmatprep.mubr.bf16.mxu0 0
      %3457 = vmatmul.mubr.bf16.gmra.mrb[0].mxu0 %v3405
      %v3458 = vpop.f32.mrb[0].mxu0
      %v3459 = vadd.f32 0.0, %v3458
      %v3460 = vpop.f32.mrb[0].mxu0
      %v3461 = vpop.f32.mrb[0].mxu0
      %v3462 = vadd.f32 0.0, %v3461
      %v3463 = vpop.f32.mrb[0].mxu0
      %3464 = vmatprep.mubr.bf16.mxu0 0
      %3465 = vmatmul.mubr.bf16.gmra.mrb[0].mxu0 %v3408
      %v3466 = vpop.f32.mrb[0].mxu0
      %v3467 = vadd.f32 0.0, %v3466
      %v3468 = vpop.f32.mrb[0].mxu0
      %v3469 = vpop.f32.mrb[0].mxu0
      %v3470 = vadd.f32 0.0, %v3469
      %v3471 = vpop.f32.mrb[0].mxu0
      %3472 = vmatprep.mubr.bf16.mxu0 0
      %3473 = vmatmul.mubr.bf16.gmra.mrb[0].mxu0 %v3411
      %v3474 = vpop.f32.mrb[0].mxu0
      %v3475 = vadd.f32 0.0, %v3474
      %v3476 = vpop.f32.mrb[0].mxu0
      %v3477 = vpop.f32.mrb[0].mxu0
      %v3478 = vadd.f32 0.0, %v3477
      %v3479 = vpop.f32.mrb[0].mxu0
      %3480 = vdwg.mxu0
      %v3482 = vsel %vm2470, %v3383, 0
      %v3485 = vsel %vm2470, %v3384, 0
      %v3488 = vsel %vm2470, %v3385, 0
      %v3491 = vsel %vm2470, %v3386, 0
      %v3494 = vsel %vm2540, %v3382, 0
      %3496 = vmatprep.subr.bf16.mxu0 0
      %3497 = vmatpush1.bf16.msra.mxu0 %v3494
      %3498 = vmatprep.subr.bf16.mxu0 0
      %3499 = vmatpush1.bf16.msra.mxu0 0
      %3500 = vmatprep.subr.bf16.mxu0 0
      %3501 = vmatpush1.bf16.msra.mxu0 0
      %3502 = vmatprep.subr.bf16.mxu0 0
      %3503 = vmatpush1.bf16.msra.mxu0 0
      %3504 = vmatprep.subr.bf16.mxu0 0
      %3505 = vmatpush1.bf16.msra.mxu0 0
      %3506 = vmatprep.subr.bf16.mxu0 0
      %3507 = vmatpush1.bf16.msra.mxu0 0
      %3508 = vmatprep.subr.bf16.mxu0 0
      %3509 = vmatpush1.bf16.msra.mxu0 0
      %3510 = vmatprep.subr.bf16.mxu0 0
      %3511 = vmatpush1.bf16.msra.mxu0 0
      %3512 = vmatprep.subr.bf16.mxu0 0
      %3513 = vmatpush1.bf16.msra.mxu0 0
      %3514 = vmatprep.subr.bf16.mxu0 0
      %3515 = vmatpush1.bf16.msra.mxu0 0
      %3516 = vmatprep.subr.bf16.mxu0 0
      %3517 = vmatpush1.bf16.msra.mxu0 0
      %3518 = vmatprep.subr.bf16.mxu0 0
      %3519 = vmatpush1.bf16.msra.mxu0 0
      %3520 = vmatprep.subr.bf16.mxu0 0
      %3521 = vmatpush1.bf16.msra.mxu0 0
      %3522 = vmatprep.subr.bf16.mxu0 0
      %3523 = vmatpush1.bf16.msra.mxu0 0
      %3524 = vmatprep.subr.bf16.mxu0 0
      %3525 = vmatpush1.bf16.msra.mxu0 0
      %3526 = vmatprep.subr.bf16.mxu0 0
      %3527 = vmatpush1.bf16.msra.mxu0 0
      %3528 = vmatprep.mubr.bf16.mxu0 0
      %3529 = vmatmul.mubr.bf16.gmra.mrb[0].mxu0 %v3482
      %v3530 = vpop.f32.mrb[0].mxu0
      %v3531 = vadd.f32 %v3451, %v3530
      %v3532 = vpop.f32.mrb[0].mxu0
      %v3533 = vpop.f32.mrb[0].mxu0
      %v3534 = vadd.f32 %v3454, %v3533
      %v3535 = vpop.f32.mrb[0].mxu0
      %3536 = vmatprep.mubr.bf16.mxu0 0
      %3537 = vmatmul.mubr.bf16.gmra.mrb[0].mxu0 %v3485
      %v3538 = vpop.f32.mrb[0].mxu0
      %v3539 = vadd.f32 %v3459, %v3538
      %v3540 = vpop.f32.mrb[0].mxu0
      %v3541 = vpop.f32.mrb[0].mxu0
      %v3542 = vadd.f32 %v3462, %v3541
      %v3543 = vpop.f32.mrb[0].mxu0
      %3544 = vmatprep.mubr.bf16.mxu0 0
      %3545 = vmatmul.mubr.bf16.gmra.mrb[0].mxu0 %v3488
      %v3546 = vpop.f32.mrb[0].mxu0
      %v3547 = vadd.f32 %v3467, %v3546
      %v3548 = vpop.f32.mrb[0].mxu0
      %v3549 = vpop.f32.mrb[0].mxu0
      %v3550 = vadd.f32 %v3470, %v3549
      %v3551 = vpop.f32.mrb[0].mxu0
      %3552 = vmatprep.mubr.bf16.mxu0 0
      %3553 = vmatmul.mubr.bf16.gmra.mrb[0].mxu0 %v3491
      %v3554 = vpop.f32.mrb[0].mxu0
      %v3555 = vadd.f32 %v3475, %v3554
      %v3556 = vpop.f32.mrb[0].mxu0
      %v3557 = vpop.f32.mrb[0].mxu0
      %v3558 = vadd.f32 %v3478, %v3557
      %v3559 = vpop.f32.mrb[0].mxu0
      %3560 = vdwg.mxu0
      %s3561 = scalar_lea.vmem [#allocation2], 32
      %v3562 = vld [vmem:[%s3561] sm:$0xff]
      %v3563 = vld [vmem:[%s3561 + $0x10] sm:$0xff]
      %v3564 = vld [vmem:[%s3561 + $0x20] sm:$0xff]
      %v3565 = vld [vmem:[%s3561 + $0x30] sm:$0xff]
      %v3566 = vld [vmem:[%s3561 + $0x40] sm:$0xff]
      %v3567 = vld [vmem:[%s3561 + $0x50] sm:$0xff]
      %v3568 = vld [vmem:[%s3561 + $0x60] sm:$0xff]
      %v3569 = vld [vmem:[%s3561 + $0x70] sm:$0xff]
      %s3570 = scalar_lea.vmem %s5, 40
      %v3571 = vld [vmem:[%s3570] sm:$0xf]
      %v3572 = vpack.c.bf16 %v3563, %v3562
      %v3573 = vpack.c.bf16 %v3565, %v3564
      %v3574 = vpack.c.bf16 %v3567, %v3566
      %v3575 = vpack.c.bf16 %v3569, %v3568
      %v3577 = vsel %vm2470, %v3572, 0
      %v3580 = vsel %vm2470, %v3573, 0
      %v3583 = vsel %vm2470, %v3574, 0
      %v3586 = vsel %vm2470, %v3575, 0
      %v3589 = vsel %vm2540, %v3571, 0
      %3591 = vmatprep.subr.bf16.mxu0 0
      %3592 = vmatpush1.bf16.msra.mxu0 %v3589
      %3593 = vmatprep.subr.bf16.mxu0 0
      %3594 = vmatpush1.bf16.msra.mxu0 0
      %3595 = vmatprep.subr.bf16.mxu0 0
      %3596 = vmatpush1.bf16.msra.mxu0 0
      %3597 = vmatprep.subr.bf16.mxu0 0
      %3598 = vmatpush1.bf16.msra.mxu0 0
      %3599 = vmatprep.subr.bf16.mxu0 0
      %3600 = vmatpush1.bf16.msra.mxu0 0
      %3601 = vmatprep.subr.bf16.mxu0 0
      %3602 = vmatpush1.bf16.msra.mxu0 0
      %3603 = vmatprep.subr.bf16.mxu0 0
      %3604 = vmatpush1.bf16.msra.mxu0 0
      %3605 = vmatprep.subr.bf16.mxu0 0
      %3606 = vmatpush1.bf16.msra.mxu0 0
      %3607 = vmatprep.subr.bf16.mxu0 0
      %3608 = vmatpush1.bf16.msra.mxu0 0
      %3609 = vmatprep.subr.bf16.mxu0 0
      %3610 = vmatpush1.bf16.msra.mxu0 0
      %3611 = vmatprep.subr.bf16.mxu0 0
      %3612 = vmatpush1.bf16.msra.mxu0 0
      %3613 = vmatprep.subr.bf16.mxu0 0
      %3614 = vmatpush1.bf16.msra.mxu0 0
      %3615 = vmatprep.subr.bf16.mxu0 0
      %3616 = vmatpush1.bf16.msra.mxu0 0
      %3617 = vmatprep.subr.bf16.mxu0 0
      %3618 = vmatpush1.bf16.msra.mxu0 0
      %3619 = vmatprep.subr.bf16.mxu0 0
      %3620 = vmatpush1.bf16.msra.mxu0 0
      %3621 = vmatprep.subr.bf16.mxu0 0
      %3622 = vmatpush1.bf16.msra.mxu0 0
      %3623 = vmatprep.mubr.bf16.mxu0 0
      %3624 = vmatmul.mubr.bf16.gmra.mrb[0].mxu0 %v3577
      %v3625 = vpop.f32.mrb[0].mxu0
      %v3626 = vadd.f32 0.0, %v3625
      %v3627 = vpop.f32.mrb[0].mxu0
      %v3628 = vpop.f32.mrb[0].mxu0
      %v3629 = vadd.f32 0.0, %v3628
      %v3630 = vpop.f32.mrb[0].mxu0
      %3631 = vmatprep.mubr.bf16.mxu0 0
      %3632 = vmatmul.mubr.bf16.gmra.mrb[0].mxu0 %v3580
      %v3633 = vpop.f32.mrb[0].mxu0
      %v3634 = vadd.f32 0.0, %v3633
      %v3635 = vpop.f32.mrb[0].mxu0
      %v3636 = vpop.f32.mrb[0].mxu0
      %v3637 = vadd.f32 0.0, %v3636
      %v3638 = vpop.f32.mrb[0].mxu0
      %3639 = vmatprep.mubr.bf16.mxu0 0
      %3640 = vmatmul.mubr.bf16.gmra.mrb[0].mxu0 %v3583
      %v3641 = vpop.f32.mrb[0].mxu0
      %v3642 = vadd.f32 0.0, %v3641
      %v3643 = vpop.f32.mrb[0].mxu0
      %v3644 = vpop.f32.mrb[0].mxu0
      %v3645 = vadd.f32 0.0, %v3644
      %v3646 = vpop.f32.mrb[0].mxu0
      %3647 = vmatprep.mubr.bf16.mxu0 0
      %3648 = vmatmul.mubr.bf16.gmra.mrb[0].mxu0 %v3586
      %v3649 = vpop.f32.mrb[0].mxu0
      %v3650 = vadd.f32 0.0, %v3649
      %v3651 = vpop.f32.mrb[0].mxu0
      %v3652 = vpop.f32.mrb[0].mxu0
      %v3653 = vadd.f32 0.0, %v3652
      %v3654 = vpop.f32.mrb[0].mxu0
      %3655 = vdwg.mxu0
      %v3656 = vadd.f32 %v3531, %v3626
      %v3657 = vadd.f32 %v3534, %v3629
      %v3658 = vadd.f32 %v3539, %v3634
      %v3659 = vadd.f32 %v3542, %v3637
      %v3660 = vadd.f32 %v3547, %v3642
      %v3661 = vadd.f32 %v3550, %v3645
      %v3662 = vadd.f32 %v3555, %v3650
      %v3663 = vadd.f32 %v3558, %v3653
      %v3664 = vld [vmem:[%s3561 + $0x1] sm:$0xff]
      %v3665 = vld [vmem:[%s3561 + $0x11] sm:$0xff]
      %v3666 = vld [vmem:[%s3561 + $0x21] sm:$0xff]
      %v3667 = vld [vmem:[%s3561 + $0x31] sm:$0xff]
      %v3668 = vld [vmem:[%s3561 + $0x41] sm:$0xff]
      %v3669 = vld [vmem:[%s3561 + $0x51] sm:$0xff]
      %v3670 = vld [vmem:[%s3561 + $0x61] sm:$0xff]
      %v3671 = vld [vmem:[%s3561 + $0x71] sm:$0xff]
      %s3672 = scalar_lea.vmem %s5, 44
      %v3673 = vld [vmem:[%s3672] sm:$0xf]
      %v3674 = vpack.c.bf16 %v3665, %v3664
      %v3675 = vpack.c.bf16 %v3667, %v3666
      %v3676 = vpack.c.bf16 %v3669, %v3668
      %v3677 = vpack.c.bf16 %v3671, %v3670
      %v3679 = vsel %vm2470, %v3674, 0
      %v3682 = vsel %vm2470, %v3675, 0
      %v3685 = vsel %vm2470, %v3676, 0
      %v3688 = vsel %vm2470, %v3677, 0
      %v3691 = vsel %vm2540, %v3673, 0
      %3693 = vmatprep.subr.bf16.mxu0 0
      %3694 = vmatpush1.bf16.msra.mxu0 %v3691
      %3695 = vmatprep.subr.bf16.mxu0 0
      %3696 = vmatpush1.bf16.msra.mxu0 0
      %3697 = vmatprep.subr.bf16.mxu0 0
      %3698 = vmatpush1.bf16.msra.mxu0 0
      %3699 = vmatprep.subr.bf16.mxu0 0
      %3700 = vmatpush1.bf16.msra.mxu0 0
      %3701 = vmatprep.subr.bf16.mxu0 0
      %3702 = vmatpush1.bf16.msra.mxu0 0
      %3703 = vmatprep.subr.bf16.mxu0 0
      %3704 = vmatpush1.bf16.msra.mxu0 0
      %3705 = vmatprep.subr.bf16.mxu0 0
      %3706 = vmatpush1.bf16.msra.mxu0 0
      %3707 = vmatprep.subr.bf16.mxu0 0
      %3708 = vmatpush1.bf16.msra.mxu0 0
      %3709 = vmatprep.subr.bf16.mxu0 0
      %3710 = vmatpush1.bf16.msra.mxu0 0
      %3711 = vmatprep.subr.bf16.mxu0 0
      %3712 = vmatpush1.bf16.msra.mxu0 0
      %3713 = vmatprep.subr.bf16.mxu0 0
      %3714 = vmatpush1.bf16.msra.mxu0 0
      %3715 = vmatprep.subr.bf16.mxu0 0
      %3716 = vmatpush1.bf16.msra.mxu0 0
      %3717 = vmatprep.subr.bf16.mxu0 0
      %3718 = vmatpush1.bf16.msra.mxu0 0
      %3719 = vmatprep.subr.bf16.mxu0 0
      %3720 = vmatpush1.bf16.msra.mxu0 0
      %3721 = vmatprep.subr.bf16.mxu0 0
      %3722 = vmatpush1.bf16.msra.mxu0 0
      %3723 = vmatprep.subr.bf16.mxu0 0
      %3724 = vmatpush1.bf16.msra.mxu0 0
      %3725 = vmatprep.mubr.bf16.mxu0 0
      %3726 = vmatmul.mubr.bf16.gmra.mrb[0].mxu0 %v3679
      %v3727 = vpop.f32.mrb[0].mxu0
      %v3728 = vadd.f32 0.0, %v3727
      %v3729 = vpop.f32.mrb[0].mxu0
      %v3730 = vpop.f32.mrb[0].mxu0
      %v3731 = vadd.f32 0.0, %v3730
      %v3732 = vpop.f32.mrb[0].mxu0
      %3733 = vmatprep.mubr.bf16.mxu0 0
      %3734 = vmatmul.mubr.bf16.gmra.mrb[0].mxu0 %v3682
      %v3735 = vpop.f32.mrb[0].mxu0
      %v3736 = vadd.f32 0.0, %v3735
      %v3737 = vpop.f32.mrb[0].mxu0
      %v3738 = vpop.f32.mrb[0].mxu0
      %v3739 = vadd.f32 0.0, %v3738
      %v3740 = vpop.f32.mrb[0].mxu0
      %3741 = vmatprep.mubr.bf16.mxu0 0
      %3742 = vmatmul.mubr.bf16.gmra.mrb[0].mxu0 %v3685
      %v3743 = vpop.f32.mrb[0].mxu0
      %v3744 = vadd.f32 0.0, %v3743
      %v3745 = vpop.f32.mrb[0].mxu0
      %v3746 = vpop.f32.mrb[0].mxu0
      %v3747 = vadd.f32 0.0, %v3746
      %v3748 = vpop.f32.mrb[0].mxu0
      %3749 = vmatprep.mubr.bf16.mxu0 0
      %3750 = vmatmul.mubr.bf16.gmra.mrb[0].mxu0 %v3688
      %v3751 = vpop.f32.mrb[0].mxu0
      %v3752 = vadd.f32 0.0, %v3751
      %v3753 = vpop.f32.mrb[0].mxu0
      %v3754 = vpop.f32.mrb[0].mxu0
      %v3755 = vadd.f32 0.0, %v3754
      %v3756 = vpop.f32.mrb[0].mxu0
      %3757 = vdwg.mxu0
      %v3758 = vadd.f32 %v3656, %v3728
      %v3759 = vadd.f32 %v3657, %v3731
      %v3760 = vadd.f32 %v3658, %v3736
      %v3761 = vadd.f32 %v3659, %v3739
      %v3762 = vadd.f32 %v3660, %v3744
      %v3763 = vadd.f32 %v3661, %v3747
      %v3764 = vadd.f32 %v3662, %v3752
      %v3765 = vadd.f32 %v3663, %v3755
      %3766 = vst [vmem:[%s457] sm:$0xff] %v3758
      %3767 = vst [vmem:[%s457 + $0x8] sm:$0xff] %v3759
      %3768 = vst [vmem:[%s457 + $0x10] sm:$0xff] %v3760
      %3769 = vst [vmem:[%s457 + $0x18] sm:$0xff] %v3761
      %3770 = vst [vmem:[%s457 + $0x20] sm:$0xff] %v3762
      %3771 = vst [vmem:[%s457 + $0x28] sm:$0xff] %v3763
      %3772 = vst [vmem:[%s457 + $0x30] sm:$0xff] %v3764
      %3773 = vst [vmem:[%s457 + $0x38] sm:$0xff] %v3765
      %v3774 = vadd.f32 %v3758, %v3759
      %v3775 = vadd.f32 %v3774, %v3760
      %v3776 = vadd.f32 %v3775, %v3761
      %v3777 = vadd.f32 %v3776, %v3762
      %v3778 = vadd.f32 %v3777, %v3763
      %v3779 = vadd.f32 %v3778, %v3764
      %v3780 = vadd.f32 %v3779, %v3765
      %v3781 = vrot.slane %v3780, 4
      %v3782 = vadd.f32 %v3780, %v3781
      %v3783 = vrot.slane %v3782, 2
      %v3784 = vadd.f32 %v3782, %v3783
      %v3785 = vrot.slane %v3784, 1
      %v3786 = vadd.f32 %v3784, %v3785
      %v3787 = vadd.f32 %v3350, %v3786
      %v3788 = vmul.f32 %v3758, %v3758
      %v3789 = vmul.f32 %v3759, %v3759
      %v3790 = vmul.f32 %v3760, %v3760
      %v3791 = vmul.f32 %v3761, %v3761
      %v3792 = vmul.f32 %v3762, %v3762
      %v3793 = vmul.f32 %v3763, %v3763
      %v3794 = vmul.f32 %v3764, %v3764
      %v3795 = vmul.f32 %v3765, %v3765
      %v3796 = vadd.f32 %v3788, %v3789
      %v3797 = vadd.f32 %v3796, %v3790
      %v3798 = vadd.f32 %v3797, %v3791
      %v3799 = vadd.f32 %v3798, %v3792
      %v3800 = vadd.f32 %v3799, %v3793
      %v3801 = vadd.f32 %v3800, %v3794
      %v3802 = vadd.f32 %v3801, %v3795
      %v3803 = vrot.slane %v3802, 4
      %v3804 = vadd.f32 %v3802, %v3803
      %v3805 = vrot.slane %v3804, 2
      %v3806 = vadd.f32 %v3804, %v3805
      %v3807 = vrot.slane %v3806, 1
      %v3808 = vadd.f32 %v3806, %v3807
      %v3809 = vadd.f32 %v3372, %v3808
      %v3810 = vld [vmem:[%s2492 + $0x1] sm:$0xff]
      %v3811 = vld [vmem:[%s2492 + $0x11] sm:$0xff]
      %v3812 = vld [vmem:[%s2492 + $0x21] sm:$0xff]
      %v3813 = vld [vmem:[%s2492 + $0x31] sm:$0xff]
      %v3814 = vld [vmem:[%s2492 + $0x41] sm:$0xff]
      %v3815 = vld [vmem:[%s2492 + $0x51] sm:$0xff]
      %v3816 = vld [vmem:[%s2492 + $0x61] sm:$0xff]
      %v3817 = vld [vmem:[%s2492 + $0x71] sm:$0xff]
      %s3818 = scalar_lea.vmem %s5, 48
      %v3819 = vld [vmem:[%s3818] sm:$0xf]
      %v3820 = vpack.c.bf16 %v3811, %v3810
      %v3821 = vpack.c.bf16 %v3813, %v3812
      %v3822 = vpack.c.bf16 %v3815, %v3814
      %v3823 = vpack.c.bf16 %v3817, %v3816
      %v3824 = vld [vmem:[%s2492 + $0x2] sm:$0xff]
      %v3825 = vld [vmem:[%s2492 + $0x12] sm:$0xff]
      %v3826 = vld [vmem:[%s2492 + $0x22] sm:$0xff]
      %v3827 = vld [vmem:[%s2492 + $0x32] sm:$0xff]
      %v3828 = vld [vmem:[%s2492 + $0x42] sm:$0xff]
      %v3829 = vld [vmem:[%s2492 + $0x52] sm:$0xff]
      %v3830 = vld [vmem:[%s2492 + $0x62] sm:$0xff]
      %v3831 = vld [vmem:[%s2492 + $0x72] sm:$0xff]
      %s3832 = scalar_lea.vmem %s5, 52
      %v3833 = vld [vmem:[%s3832] sm:$0xf]
      %v3834 = vpack.c.bf16 %v3825, %v3824
      %v3835 = vpack.c.bf16 %v3827, %v3826
      %v3836 = vpack.c.bf16 %v3829, %v3828
      %v3837 = vpack.c.bf16 %v3831, %v3830
      %v3839 = vsel %vm2470, %v3834, 0
      %v3842 = vsel %vm2470, %v3835, 0
      %v3845 = vsel %vm2470, %v3836, 0
      %v3848 = vsel %vm2470, %v3837, 0
      %v3851 = vsel %vm2540, %v3833, 0
      %3853 = vmatprep.subr.bf16.mxu0 0
      %3854 = vmatpush1.bf16.msra.mxu0 %v3851
      %3855 = vmatprep.subr.bf16.mxu0 0
      %3856 = vmatpush1.bf16.msra.mxu0 0
      %3857 = vmatprep.subr.bf16.mxu0 0
      %3858 = vmatpush1.bf16.msra.mxu0 0
      %3859 = vmatprep.subr.bf16.mxu0 0
      %3860 = vmatpush1.bf16.msra.mxu0 0
      %3861 = vmatprep.subr.bf16.mxu0 0
      %3862 = vmatpush1.bf16.msra.mxu0 0
      %3863 = vmatprep.subr.bf16.mxu0 0
      %3864 = vmatpush1.bf16.msra.mxu0 0
      %3865 = vmatprep.subr.bf16.mxu0 0
      %3866 = vmatpush1.bf16.msra.mxu0 0
      %3867 = vmatprep.subr.bf16.mxu0 0
      %3868 = vmatpush1.bf16.msra.mxu0 0
      %3869 = vmatprep.subr.bf16.mxu0 0
      %3870 = vmatpush1.bf16.msra.mxu0 0
      %3871 = vmatprep.subr.bf16.mxu0 0
      %3872 = vmatpush1.bf16.msra.mxu0 0
      %3873 = vmatprep.subr.bf16.mxu0 0
      %3874 = vmatpush1.bf16.msra.mxu0 0
      %3875 = vmatprep.subr.bf16.mxu0 0
      %3876 = vmatpush1.bf16.msra.mxu0 0
      %3877 = vmatprep.subr.bf16.mxu0 0
      %3878 = vmatpush1.bf16.msra.mxu0 0
      %3879 = vmatprep.subr.bf16.mxu0 0
      %3880 = vmatpush1.bf16.msra.mxu0 0
      %3881 = vmatprep.subr.bf16.mxu0 0
      %3882 = vmatpush1.bf16.msra.mxu0 0
      %3883 = vmatprep.subr.bf16.mxu0 0
      %3884 = vmatpush1.bf16.msra.mxu0 0
      %3885 = vmatprep.mubr.bf16.mxu0 0
      %3886 = vmatmul.mubr.bf16.gmra.mrb[0].mxu0 %v3839
      %v3887 = vpop.f32.mrb[0].mxu0
      %v3888 = vadd.f32 0.0, %v3887
      %v3889 = vpop.f32.mrb[0].mxu0
      %v3890 = vpop.f32.mrb[0].mxu0
      %v3891 = vadd.f32 0.0, %v3890
      %v3892 = vpop.f32.mrb[0].mxu0
      %3893 = vmatprep.mubr.bf16.mxu0 0
      %3894 = vmatmul.mubr.bf16.gmra.mrb[0].mxu0 %v3842
      %v3895 = vpop.f32.mrb[0].mxu0
      %v3896 = vadd.f32 0.0, %v3895
      %v3897 = vpop.f32.mrb[0].mxu0
      %v3898 = vpop.f32.mrb[0].mxu0
      %v3899 = vadd.f32 0.0, %v3898
      %v3900 = vpop.f32.mrb[0].mxu0
      %3901 = vmatprep.mubr.bf16.mxu0 0
      %3902 = vmatmul.mubr.bf16.gmra.mrb[0].mxu0 %v3845
      %v3903 = vpop.f32.mrb[0].mxu0
      %v3904 = vadd.f32 0.0, %v3903
      %v3905 = vpop.f32.mrb[0].mxu0
      %v3906 = vpop.f32.mrb[0].mxu0
      %v3907 = vadd.f32 0.0, %v3906
      %v3908 = vpop.f32.mrb[0].mxu0
      %3909 = vmatprep.mubr.bf16.mxu0 0
      %3910 = vmatmul.mubr.bf16.gmra.mrb[0].mxu0 %v3848
      %v3911 = vpop.f32.mrb[0].mxu0
      %v3912 = vadd.f32 0.0, %v3911
      %v3913 = vpop.f32.mrb[0].mxu0
      %v3914 = vpop.f32.mrb[0].mxu0
      %v3915 = vadd.f32 0.0, %v3914
      %v3916 = vpop.f32.mrb[0].mxu0
      %3917 = vdwg.mxu0
      %v3919 = vsel %vm2470, %v3820, 0
      %v3922 = vsel %vm2470, %v3821, 0
      %v3925 = vsel %vm2470, %v3822, 0
      %v3928 = vsel %vm2470, %v3823, 0
      %v3931 = vsel %vm2540, %v3819, 0
      %3933 = vmatprep.subr.bf16.mxu0 0
      %3934 = vmatpush1.bf16.msra.mxu0 %v3931
      %3935 = vmatprep.subr.bf16.mxu0 0
      %3936 = vmatpush1.bf16.msra.mxu0 0
      %3937 = vmatprep.subr.bf16.mxu0 0
      %3938 = vmatpush1.bf16.msra.mxu0 0
      %3939 = vmatprep.subr.bf16.mxu0 0
      %3940 = vmatpush1.bf16.msra.mxu0 0
      %3941 = vmatprep.subr.bf16.mxu0 0
      %3942 = vmatpush1.bf16.msra.mxu0 0
      %3943 = vmatprep.subr.bf16.mxu0 0
      %3944 = vmatpush1.bf16.msra.mxu0 0
      %3945 = vmatprep.subr.bf16.mxu0 0
      %3946 = vmatpush1.bf16.msra.mxu0 0
      %3947 = vmatprep.subr.bf16.mxu0 0
      %3948 = vmatpush1.bf16.msra.mxu0 0
      %3949 = vmatprep.subr.bf16.mxu0 0
      %3950 = vmatpush1.bf16.msra.mxu0 0
      %3951 = vmatprep.subr.bf16.mxu0 0
      %3952 = vmatpush1.bf16.msra.mxu0 0
      %3953 = vmatprep.subr.bf16.mxu0 0
      %3954 = vmatpush1.bf16.msra.mxu0 0
      %3955 = vmatprep.subr.bf16.mxu0 0
      %3956 = vmatpush1.bf16.msra.mxu0 0
      %3957 = vmatprep.subr.bf16.mxu0 0
      %3958 = vmatpush1.bf16.msra.mxu0 0
      %3959 = vmatprep.subr.bf16.mxu0 0
      %3960 = vmatpush1.bf16.msra.mxu0 0
      %3961 = vmatprep.subr.bf16.mxu0 0
      %3962 = vmatpush1.bf16.msra.mxu0 0
      %3963 = vmatprep.subr.bf16.mxu0 0
      %3964 = vmatpush1.bf16.msra.mxu0 0
      %3965 = vmatprep.mubr.bf16.mxu0 0
      %3966 = vmatmul.mubr.bf16.gmra.mrb[0].mxu0 %v3919
      %v3967 = vpop.f32.mrb[0].mxu0
      %v3968 = vadd.f32 %v3888, %v3967
      %v3969 = vpop.f32.mrb[0].mxu0
      %v3970 = vpop.f32.mrb[0].mxu0
      %v3971 = vadd.f32 %v3891, %v3970
      %v3972 = vpop.f32.mrb[0].mxu0
      %3973 = vmatprep.mubr.bf16.mxu0 0
      %3974 = vmatmul.mubr.bf16.gmra.mrb[0].mxu0 %v3922
      %v3975 = vpop.f32.mrb[0].mxu0
      %v3976 = vadd.f32 %v3896, %v3975
      %v3977 = vpop.f32.mrb[0].mxu0
      %v3978 = vpop.f32.mrb[0].mxu0
      %v3979 = vadd.f32 %v3899, %v3978
      %v3980 = vpop.f32.mrb[0].mxu0
      %3981 = vmatprep.mubr.bf16.mxu0 0
      %3982 = vmatmul.mubr.bf16.gmra.mrb[0].mxu0 %v3925
      %v3983 = vpop.f32.mrb[0].mxu0
      %v3984 = vadd.f32 %v3904, %v3983
      %v3985 = vpop.f32.mrb[0].mxu0
      %v3986 = vpop.f32.mrb[0].mxu0
      %v3987 = vadd.f32 %v3907, %v3986
      %v3988 = vpop.f32.mrb[0].mxu0
      %3989 = vmatprep.mubr.bf16.mxu0 0
      %3990 = vmatmul.mubr.bf16.gmra.mrb[0].mxu0 %v3928
      %v3991 = vpop.f32.mrb[0].mxu0
      %v3992 = vadd.f32 %v3912, %v3991
      %v3993 = vpop.f32.mrb[0].mxu0
      %v3994 = vpop.f32.mrb[0].mxu0
      %v3995 = vadd.f32 %v3915, %v3994
      %v3996 = vpop.f32.mrb[0].mxu0
      %3997 = vdwg.mxu0
      %v3998 = vld [vmem:[%s3561 + $0x1] sm:$0xff]
      %v3999 = vld [vmem:[%s3561 + $0x11] sm:$0xff]
      %v4000 = vld [vmem:[%s3561 + $0x21] sm:$0xff]
      %v4001 = vld [vmem:[%s3561 + $0x31] sm:$0xff]
      %v4002 = vld [vmem:[%s3561 + $0x41] sm:$0xff]
      %v4003 = vld [vmem:[%s3561 + $0x51] sm:$0xff]
      %v4004 = vld [vmem:[%s3561 + $0x61] sm:$0xff]
      %v4005 = vld [vmem:[%s3561 + $0x71] sm:$0xff]
      %s4006 = scalar_lea.vmem %s5, 56
      %v4007 = vld [vmem:[%s4006] sm:$0xf]
      %v4008 = vpack.c.bf16 %v3999, %v3998
      %v4009 = vpack.c.bf16 %v4001, %v4000
      %v4010 = vpack.c.bf16 %v4003, %v4002
      %v4011 = vpack.c.bf16 %v4005, %v4004
      %v4013 = vsel %vm2470, %v4008, 0
      %v4016 = vsel %vm2470, %v4009, 0
      %v4019 = vsel %vm2470, %v4010, 0
      %v4022 = vsel %vm2470, %v4011, 0
      %v4025 = vsel %vm2540, %v4007, 0
      %4027 = vmatprep.subr.bf16.mxu0 0
      %4028 = vmatpush1.bf16.msra.mxu0 %v4025
      %4029 = vmatprep.subr.bf16.mxu0 0
      %4030 = vmatpush1.bf16.msra.mxu0 0
      %4031 = vmatprep.subr.bf16.mxu0 0
      %4032 = vmatpush1.bf16.msra.mxu0 0
      %4033 = vmatprep.subr.bf16.mxu0 0
      %4034 = vmatpush1.bf16.msra.mxu0 0
      %4035 = vmatprep.subr.bf16.mxu0 0
      %4036 = vmatpush1.bf16.msra.mxu0 0
      %4037 = vmatprep.subr.bf16.mxu0 0
      %4038 = vmatpush1.bf16.msra.mxu0 0
      %4039 = vmatprep.subr.bf16.mxu0 0
      %4040 = vmatpush1.bf16.msra.mxu0 0
      %4041 = vmatprep.subr.bf16.mxu0 0
      %4042 = vmatpush1.bf16.msra.mxu0 0
      %4043 = vmatprep.subr.bf16.mxu0 0
      %4044 = vmatpush1.bf16.msra.mxu0 0
      %4045 = vmatprep.subr.bf16.mxu0 0
      %4046 = vmatpush1.bf16.msra.mxu0 0
      %4047 = vmatprep.subr.bf16.mxu0 0
      %4048 = vmatpush1.bf16.msra.mxu0 0
      %4049 = vmatprep.subr.bf16.mxu0 0
      %4050 = vmatpush1.bf16.msra.mxu0 0
      %4051 = vmatprep.subr.bf16.mxu0 0
      %4052 = vmatpush1.bf16.msra.mxu0 0
      %4053 = vmatprep.subr.bf16.mxu0 0
      %4054 = vmatpush1.bf16.msra.mxu0 0
      %4055 = vmatprep.subr.bf16.mxu0 0
      %4056 = vmatpush1.bf16.msra.mxu0 0
      %4057 = vmatprep.subr.bf16.mxu0 0
      %4058 = vmatpush1.bf16.msra.mxu0 0
      %4059 = vmatprep.mubr.bf16.mxu0 0
      %4060 = vmatmul.mubr.bf16.gmra.mrb[0].mxu0 %v4013
      %v4061 = vpop.f32.mrb[0].mxu0
      %v4062 = vadd.f32 0.0, %v4061
      %v4063 = vpop.f32.mrb[0].mxu0
      %v4064 = vpop.f32.mrb[0].mxu0
      %v4065 = vadd.f32 0.0, %v4064
      %v4066 = vpop.f32.mrb[0].mxu0
      %4067 = vmatprep.mubr.bf16.mxu0 0
      %4068 = vmatmul.mubr.bf16.gmra.mrb[0].mxu0 %v4016
      %v4069 = vpop.f32.mrb[0].mxu0
      %v4070 = vadd.f32 0.0, %v4069
      %v4071 = vpop.f32.mrb[0].mxu0
      %v4072 = vpop.f32.mrb[0].mxu0
      %v4073 = vadd.f32 0.0, %v4072
      %v4074 = vpop.f32.mrb[0].mxu0
      %4075 = vmatprep.mubr.bf16.mxu0 0
      %4076 = vmatmul.mubr.bf16.gmra.mrb[0].mxu0 %v4019
      %v4077 = vpop.f32.mrb[0].mxu0
      %v4078 = vadd.f32 0.0, %v4077
      %v4079 = vpop.f32.mrb[0].mxu0
      %v4080 = vpop.f32.mrb[0].mxu0
      %v4081 = vadd.f32 0.0, %v4080
      %v4082 = vpop.f32.mrb[0].mxu0
      %4083 = vmatprep.mubr.bf16.mxu0 0
      %4084 = vmatmul.mubr.bf16.gmra.mrb[0].mxu0 %v4022
      %v4085 = vpop.f32.mrb[0].mxu0
      %v4086 = vadd.f32 0.0, %v4085
      %v4087 = vpop.f32.mrb[0].mxu0
      %v4088 = vpop.f32.mrb[0].mxu0
      %v4089 = vadd.f32 0.0, %v4088
      %v4090 = vpop.f32.mrb[0].mxu0
      %4091 = vdwg.mxu0
      %v4092 = vadd.f32 %v3968, %v4062
      %v4093 = vadd.f32 %v3971, %v4065
      %v4094 = vadd.f32 %v3976, %v4070
      %v4095 = vadd.f32 %v3979, %v4073
      %v4096 = vadd.f32 %v3984, %v4078
      %v4097 = vadd.f32 %v3987, %v4081
      %v4098 = vadd.f32 %v3992, %v4086
      %v4099 = vadd.f32 %v3995, %v4089
      %v4100 = vld [vmem:[%s3561 + $0x2] sm:$0xff]
      %v4101 = vld [vmem:[%s3561 + $0x12] sm:$0xff]
      %v4102 = vld [vmem:[%s3561 + $0x22] sm:$0xff]
      %v4103 = vld [vmem:[%s3561 + $0x32] sm:$0xff]
      %v4104 = vld [vmem:[%s3561 + $0x42] sm:$0xff]
      %v4105 = vld [vmem:[%s3561 + $0x52] sm:$0xff]
      %v4106 = vld [vmem:[%s3561 + $0x62] sm:$0xff]
      %v4107 = vld [vmem:[%s3561 + $0x72] sm:$0xff]
      %s4108 = scalar_lea.vmem %s5, 60
      %v4109 = vld [vmem:[%s4108] sm:$0xf]
      %v4110 = vpack.c.bf16 %v4101, %v4100
      %v4111 = vpack.c.bf16 %v4103, %v4102
      %v4112 = vpack.c.bf16 %v4105, %v4104
      %v4113 = vpack.c.bf16 %v4107, %v4106
      %v4115 = vsel %vm2470, %v4110, 0
      %v4118 = vsel %vm2470, %v4111, 0
      %v4121 = vsel %vm2470, %v4112, 0
      %v4124 = vsel %vm2470, %v4113, 0
      %v4127 = vsel %vm2540, %v4109, 0
      %4129 = vmatprep.subr.bf16.mxu0 0
      %4130 = vmatpush1.bf16.msra.mxu0 %v4127
      %4131 = vmatprep.subr.bf16.mxu0 0
      %4132 = vmatpush1.bf16.msra.mxu0 0
      %4133 = vmatprep.subr.bf16.mxu0 0
      %4134 = vmatpush1.bf16.msra.mxu0 0
      %4135 = vmatprep.subr.bf16.mxu0 0
      %4136 = vmatpush1.bf16.msra.mxu0 0
      %4137 = vmatprep.subr.bf16.mxu0 0
      %4138 = vmatpush1.bf16.msra.mxu0 0
      %4139 = vmatprep.subr.bf16.mxu0 0
      %4140 = vmatpush1.bf16.msra.mxu0 0
      %4141 = vmatprep.subr.bf16.mxu0 0
      %4142 = vmatpush1.bf16.msra.mxu0 0
      %4143 = vmatprep.subr.bf16.mxu0 0
      %4144 = vmatpush1.bf16.msra.mxu0 0
      %4145 = vmatprep.subr.bf16.mxu0 0
      %4146 = vmatpush1.bf16.msra.mxu0 0
      %4147 = vmatprep.subr.bf16.mxu0 0
      %4148 = vmatpush1.bf16.msra.mxu0 0
      %4149 = vmatprep.subr.bf16.mxu0 0
      %4150 = vmatpush1.bf16.msra.mxu0 0
      %4151 = vmatprep.subr.bf16.mxu0 0
      %4152 = vmatpush1.bf16.msra.mxu0 0
      %4153 = vmatprep.subr.bf16.mxu0 0
      %4154 = vmatpush1.bf16.msra.mxu0 0
      %4155 = vmatprep.subr.bf16.mxu0 0
      %4156 = vmatpush1.bf16.msra.mxu0 0
      %4157 = vmatprep.subr.bf16.mxu0 0
      %4158 = vmatpush1.bf16.msra.mxu0 0
      %4159 = vmatprep.subr.bf16.mxu0 0
      %4160 = vmatpush1.bf16.msra.mxu0 0
      %4161 = vmatprep.mubr.bf16.mxu0 0
      %4162 = vmatmul.mubr.bf16.gmra.mrb[0].mxu0 %v4115
      %v4163 = vpop.f32.mrb[0].mxu0
      %v4164 = vadd.f32 0.0, %v4163
      %v4165 = vpop.f32.mrb[0].mxu0
      %v4166 = vpop.f32.mrb[0].mxu0
      %v4167 = vadd.f32 0.0, %v4166
      %v4168 = vpop.f32.mrb[0].mxu0
      %4169 = vmatprep.mubr.bf16.mxu0 0
      %4170 = vmatmul.mubr.bf16.gmra.mrb[0].mxu0 %v4118
      %v4171 = vpop.f32.mrb[0].mxu0
      %v4172 = vadd.f32 0.0, %v4171
      %v4173 = vpop.f32.mrb[0].mxu0
      %v4174 = vpop.f32.mrb[0].mxu0
      %v4175 = vadd.f32 0.0, %v4174
      %v4176 = vpop.f32.mrb[0].mxu0
      %4177 = vmatprep.mubr.bf16.mxu0 0
      %4178 = vmatmul.mubr.bf16.gmra.mrb[0].mxu0 %v4121
      %v4179 = vpop.f32.mrb[0].mxu0
      %v4180 = vadd.f32 0.0, %v4179
      %v4181 = vpop.f32.mrb[0].mxu0
      %v4182 = vpop.f32.mrb[0].mxu0
      %v4183 = vadd.f32 0.0, %v4182
      %v4184 = vpop.f32.mrb[0].mxu0
      %4185 = vmatprep.mubr.bf16.mxu0 0
      %4186 = vmatmul.mubr.bf16.gmra.mrb[0].mxu0 %v4124
      %v4187 = vpop.f32.mrb[0].mxu0
      %v4188 = vadd.f32 0.0, %v4187
      %v4189 = vpop.f32.mrb[0].mxu0
      %v4190 = vpop.f32.mrb[0].mxu0
      %v4191 = vadd.f32 0.0, %v4190
      %v4192 = vpop.f32.mrb[0].mxu0
      %4193 = vdwg.mxu0
      %v4194 = vadd.f32 %v4092, %v4164
      %v4195 = vadd.f32 %v4093, %v4167
      %v4196 = vadd.f32 %v4094, %v4172
      %v4197 = vadd.f32 %v4095, %v4175
      %v4198 = vadd.f32 %v4096, %v4180
      %v4199 = vadd.f32 %v4097, %v4183
      %v4200 = vadd.f32 %v4098, %v4188
      %v4201 = vadd.f32 %v4099, %v4191
      %4202 = vst [vmem:[%s462] sm:$0xff] %v4194
      %4203 = vst [vmem:[%s462 + $0x8] sm:$0xff] %v4195
      %4204 = vst [vmem:[%s462 + $0x10] sm:$0xff] %v4196
      %4205 = vst [vmem:[%s462 + $0x18] sm:$0xff] %v4197
      %4206 = vst [vmem:[%s462 + $0x20] sm:$0xff] %v4198
      %4207 = vst [vmem:[%s462 + $0x28] sm:$0xff] %v4199
      %4208 = vst [vmem:[%s462 + $0x30] sm:$0xff] %v4200
      %4209 = vst [vmem:[%s462 + $0x38] sm:$0xff] %v4201
      %v4210 = vadd.f32 %v4194, %v4195
      %v4211 = vadd.f32 %v4210, %v4196
      %v4212 = vadd.f32 %v4211, %v4197
      %v4213 = vadd.f32 %v4212, %v4198
      %v4214 = vadd.f32 %v4213, %v4199
      %v4215 = vadd.f32 %v4214, %v4200
      %v4216 = vadd.f32 %v4215, %v4201
      %v4217 = vrot.slane %v4216, 4
      %v4218 = vadd.f32 %v4216, %v4217
      %v4219 = vrot.slane %v4218, 2
      %v4220 = vadd.f32 %v4218, %v4219
      %v4221 = vrot.slane %v4220, 1
      %v4222 = vadd.f32 %v4220, %v4221
      %v4223 = vadd.f32 %v3787, %v4222
      %v4224 = vmul.f32 %v4194, %v4194
      %v4225 = vmul.f32 %v4195, %v4195
      %v4226 = vmul.f32 %v4196, %v4196
      %v4227 = vmul.f32 %v4197, %v4197
      %v4228 = vmul.f32 %v4198, %v4198
      %v4229 = vmul.f32 %v4199, %v4199
      %v4230 = vmul.f32 %v4200, %v4200
      %v4231 = vmul.f32 %v4201, %v4201
      %v4232 = vadd.f32 %v4224, %v4225
      %v4233 = vadd.f32 %v4232, %v4226
      %v4234 = vadd.f32 %v4233, %v4227
      %v4235 = vadd.f32 %v4234, %v4228
      %v4236 = vadd.f32 %v4235, %v4229
      %v4237 = vadd.f32 %v4236, %v4230
      %v4238 = vadd.f32 %v4237, %v4231
      %v4239 = vrot.slane %v4238, 4
      %v4240 = vadd.f32 %v4238, %v4239
      %v4241 = vrot.slane %v4240, 2
      %v4242 = vadd.f32 %v4240, %v4241
      %v4243 = vrot.slane %v4242, 1
      %v4244 = vadd.f32 %v4242, %v4243
      %v4245 = vadd.f32 %v3809, %v4244
      %4246 = vst [vmem:[%s466] sm:$0xff] 0.0
      %4247 = vst [vmem:[%s466] sm:$0x1] %v4223
      %4248 = vst [vmem:[%s466 + $0x1] sm:$0x1] %v4245
      %p4249 = scmp.lt.s32.totalorder %s22, 1
      %s4250 = scalar_select %p4249, %s22, 1
      %s4251 = smul.addr %s4250, 8
      %s4252 = smul.addr %s4251, 8
      %s4253 = scalar_lea.vmem %s6, %s4252
      %p4254 = scmp.lt.s32.totalorder %s22, 1
      %s4255 = scalar_select %p4254, %s22, 1
      %s4256 = smul.addr %s4255, 8
      %s4257 = smul.addr %s4256, 8
      %s4258 = scalar_lea.vmem %s7, %s4257
      %p4259 = scmp.lt.s32.totalorder %s22, 1
      %s4260 = scalar_select %p4259, %s22, 1
      %s4261 = smul.addr %s4260, 8
      %s4262 = smul.addr %s4261, 8
      %s4263 = scalar_lea.vmem %s8, %s4262
      %p4264 = scmp.lt.s32.totalorder %s22, 1
      %s4265 = scalar_select %p4264, %s22, 1
      %s4266 = smul.addr %s4265, 8
      %s4267 = smul.addr %s4266, 8
      %s4268 = scalar_lea.vmem %s9, %s4267
      %p4269 = scmp.lt.s32.totalorder %s22, 1
      %s4270 = scalar_select %p4269, %s22, 1
      %s4271 = smul.addr %s4270, 8
      %s4272 = scalar_lea.vmem %s10, %s4271
      // Predicated region
      $region45: #{unet_block_forward.2} parent=43 // pred_check
        %p4273 = pneg %p186
      $region46: #{unet_block_forward.2} parent=43 // pred_check_branch
        %4275 = sbr.rel (%p4273) target = $region48
      $region47: #{unet_block_forward.2} parent=43 // pred_region
        _
      $region48: #{unet_block_forward.2} parent=43 // pred_fallthru
        _
      // Predicated region
      $region49: #{unet_block_forward.2} parent=43 // pred_check
        %p4276 = pneg %p212
      $region50: #{unet_block_forward.2} parent=43 // pred_check_branch
        %4278 = sbr.rel (%p4276) target = $region52
      $region51: #{unet_block_forward.2} parent=43 // pred_region
        _
      $region52: #{unet_block_forward.2} parent=43 // pred_fallthru
        _
      // Predicated region
      $region53: #{unet_block_forward.2} parent=43 // pred_check
        %p4279 = pneg %p238
      $region54: #{unet_block_forward.2} parent=43 // pred_check_branch
        %4281 = sbr.rel (%p4279) target = $region56
      $region55: #{unet_block_forward.2} parent=43 // pred_region
        _
      $region56: #{unet_block_forward.2} parent=43 // pred_fallthru
        _
      // Predicated region
      $region57: #{unet_block_forward.2} parent=43 // pred_check
        %p4282 = pneg %p264
      $region58: #{unet_block_forward.2} parent=43 // pred_check_branch
        %4284 = sbr.rel (%p4282) target = $region60
      $region59: #{unet_block_forward.2} parent=43 // pred_region
        _
      $region60: #{unet_block_forward.2} parent=43 // pred_fallthru
        _
      // Predicated region
      $region61: #{unet_block_forward.2} parent=43 // pred_check
        %p4285 = pneg %p290
      $region62: #{unet_block_forward.2} parent=43 // pred_check_branch
        %4287 = sbr.rel (%p4285) target = $region64
      $region63: #{unet_block_forward.2} parent=43 // pred_region
        _
      $region64: #{unet_block_forward.2} parent=43 // pred_fallthru
        _
    $region44: #{unet_block_forward.2} parent=5 // pred_fallthru
      _
    %p4288 = scmp.le.s32.totalorder 2, %s17
    // Predicated region
    $region65: #{unet_block_forward.2} parent=5 // pred_check
      %p4289 = pneg %p4288
    $region66: #{unet_block_forward.2} parent=5 // pred_check_branch
      %4291 = sbr.rel (%p4289) target = $region68
    $region67: #{unet_block_forward.2} parent=5 // pred_region
      %s4292 = ssub.s32 %s17, 2
      // Predicated region
      $region69: #{unet_block_forward.2} parent=67 // pred_check
        %p4293 = pneg %p192
      $region70: #{unet_block_forward.2} parent=67 // pred_check_branch
        %4295 = sbr.rel (%p4293) target = $region72
      $region71: #{unet_block_forward.2} parent=67 // pred_region
        %p4296 = scmp.lt.s32.totalorder %s23, 1
        %s4297 = scalar_select %p4296, %s23, 1
        %s4298 = smul.addr %s4297, 8
        %s4299 = smul.addr %s4298, 8
        %s4300 = scalar_lea.vmem %s6, %s4299
      $region72: #{unet_block_forward.2} parent=67 // pred_fallthru
        _
      // Predicated region
      $region73: #{unet_block_forward.2} parent=67 // pred_check
        %p4301 = pneg %p218
      $region74: #{unet_block_forward.2} parent=67 // pred_check_branch
        %4303 = sbr.rel (%p4301) target = $region76
      $region75: #{unet_block_forward.2} parent=67 // pred_region
        %p4304 = scmp.lt.s32.totalorder %s23, 1
        %s4305 = scalar_select %p4304, %s23, 1
        %s4306 = smul.addr %s4305, 8
        %s4307 = smul.addr %s4306, 8
        %s4308 = scalar_lea.vmem %s7, %s4307
      $region76: #{unet_block_forward.2} parent=67 // pred_fallthru
        _
      // Predicated region
      $region77: #{unet_block_forward.2} parent=67 // pred_check
        %p4309 = pneg %p244
      $region78: #{unet_block_forward.2} parent=67 // pred_check_branch
        %4311 = sbr.rel (%p4309) target = $region80
      $region79: #{unet_block_forward.2} parent=67 // pred_region
        %p4312 = scmp.lt.s32.totalorder %s23, 1
        %s4313 = scalar_select %p4312, %s23, 1
        %s4314 = smul.addr %s4313, 8
        %s4315 = smul.addr %s4314, 8
        %s4316 = scalar_lea.vmem %s8, %s4315
      $region80: #{unet_block_forward.2} parent=67 // pred_fallthru
        _
      // Predicated region
      $region81: #{unet_block_forward.2} parent=67 // pred_check
        %p4317 = pneg %p270
      $region82: #{unet_block_forward.2} parent=67 // pred_check_branch
        %4319 = sbr.rel (%p4317) target = $region84
      $region83: #{unet_block_forward.2} parent=67 // pred_region
        %p4320 = scmp.lt.s32.totalorder %s23, 1
        %s4321 = scalar_select %p4320, %s23, 1
        %s4322 = smul.addr %s4321, 8
        %s4323 = smul.addr %s4322, 8
        %s4324 = scalar_lea.vmem %s9, %s4323
      $region84: #{unet_block_forward.2} parent=67 // pred_fallthru
        _
      // Predicated region
      $region85: #{unet_block_forward.2} parent=67 // pred_check
        %p4325 = pneg %p296
      $region86: #{unet_block_forward.2} parent=67 // pred_check_branch
        %4327 = sbr.rel (%p4325) target = $region88
      $region87: #{unet_block_forward.2} parent=67 // pred_region
        %p4328 = scmp.lt.s32.totalorder %s23, 1
        %s4329 = scalar_select %p4328, %s23, 1
        %s4330 = smul.addr %s4329, 8
        %s4331 = scalar_lea.vmem %s10, %s4330
      $region88: #{unet_block_forward.2} parent=67 // pred_fallthru
        _
    $region68: #{unet_block_forward.2} parent=5 // pred_fallthru
      _
  $region6: #{unet_block_forward.2} parent=0 // loop_footer
    %s21 = sadd.s32 1, %s17
  $region7: #{unet_block_forward.2} parent=0 // loop_footer_branch
    %16 = sbr.rel target = $region3
  $region8: #{unet_block_forward.2} parent=0 // loop_exit
    _

</llo_original>
